<compile_context>
chip_gen: v6e
topology: v6e:2x2x1
jax: 0.10.0
libtpu: 0.0.40
codegen_flags: <defaults>
</compile_context>

<pallas_src>
import functools

import jax
import jax.numpy as jnp
import numpy as np
from jax.experimental import pallas as pl
from jax.experimental.pallas import tpu as pltpu

EPS = 1e-5
LANE = 128                       # channel (minor) dims padded to this
DEFAULT_TM = 512                 # default row-tile for the 1x1-conv matmuls


# ----------------------------------------------------------------------------
# Small helpers
# ----------------------------------------------------------------------------
def _round_up(v, m):
    return ((v + m - 1) // m) * m


def _vmem_phys_bytes():
    try:
        return int(pltpu.get_tpu_info().vmem_capacity_bytes)
    except Exception:
        return 64 * 2 ** 20      # conservative (v7x-sized) fallback


def _vmem_limit_bytes(est, phys):
    cap = (3 * phys) // 4        # 48 MiB on v7x, 96 MiB on v5e/v6e
    return int(min(cap, max(32 * 2 ** 20, 2 * int(est))))


def _choose_tm(m, cap):
    """Largest row tile <= cap (ragged tail handled by a cdiv grid).  If the
    whole M fits in one block and is big, split in two so both v7x
    TensorCores get a grid step."""
    cap = max(8, int(cap))
    if cap >= m:
        if m >= 512 and m % 16 == 0:
            return m // 2
        return m
    return max(8, (cap // 8) * 8)


# ----------------------------------------------------------------------------
# Fused  sum_i(X_i @ W_i) + bias [-> ReLU]  kernel (conv1 and conv3+shortcut).
# BN scale already folded into the weights.
# ----------------------------------------------------------------------------
def _make_matmul_kernel(n_pairs, relu):
    def kernel(*refs):
        b_ref, o_ref = refs[-2], refs[-1]
        acc = jnp.dot(refs[0][...], refs[1][...],
                      preferred_element_type=jnp.float32)
        for i in range(1, n_pairs):
            acc = acc + jnp.dot(refs[2 * i][...], refs[2 * i + 1][...],
                                preferred_element_type=jnp.float32)
        y = acc + b_ref[...]
        if relu:
            y = jnp.maximum(y, 0.0)
        o_ref[...] = y.astype(o_ref.dtype)
    return kernel


def fused_matmul_bias_act(pairs, bias, *, relu, out_dtype, soft_budget, phys,
                          tm_max=DEFAULT_TM):
    """y = act(sum_i (x_i @ w_i) + bias), tiled over rows (M).

    pairs: list of (x_i (M, K_i), w_i (K_i, Cout)); all share M and Cout.
    bias:  (1, Cout) float32.
    """
    m = pairs[0][0].shape[0]
    cout = pairs[0][1].shape[1]

    in_row_bytes = sum(x.shape[1] * x.dtype.itemsize for x, _ in pairs)
    out_row_bytes = cout * np.dtype(out_dtype).itemsize
    resident = sum(w.size * w.dtype.itemsize for _, w in pairs) + bias.size * 4
    # NOTE: constant-index weights/bias still get two VMEM buffers from the
    # pipeline -> count them twice.
    # TODO(synk): pipeline_mode=pl.Buffered(1) on the weight specs would halve
    #             the weight VMEM for very wide layers on v7x.
    tm_cap = (soft_budget - 2 * resident) // max(1, 2 * (in_row_bytes +
                                                         out_row_bytes))
    tm = _choose_tm(m, min(tm_max, max(8, tm_cap)))
    grid_m = pl.cdiv(m, tm)

    in_specs, args = [], []
    for x, w in pairs:
        k = x.shape[1]
        in_specs.append(pl.BlockSpec((tm, k), lambda i: (i, 0)))
        in_specs.append(pl.BlockSpec((k, cout), lambda i: (0, 0)))
        args += [x, w]
    in_specs.append(pl.BlockSpec((1, cout), lambda i: (0, 0)))
    args.append(bias)

    est = 2 * resident + 2 * tm * (in_row_bytes + out_row_bytes)
    return pl.pallas_call(
        _make_matmul_kernel(len(pairs), relu),
        out_shape=jax.ShapeDtypeStruct((m, cout), out_dtype),
        grid=(grid_m,),
        in_specs=in_specs,
        out_specs=pl.BlockSpec((tm, cout), lambda i: (i, 0)),
        compiler_params=pltpu.CompilerParams(
            dimension_semantics=("parallel",),
            vmem_limit_bytes=_vmem_limit_bytes(est, phys)),
    )(*args)


# ----------------------------------------------------------------------------
# 3x3 conv (padding=1, stride in {1,2}) + bias + ReLU, multi-row blocked.
# Grid = (N, Ho // TH); each step emits TH output rows (M = TH*Wo matmul rows).
# ----------------------------------------------------------------------------
def _choose_th(n_batch, ho, wo_t, stride, w_in, c_in, c_out, out_itemsize,
               budget):
    """Largest divisor of Ho whose working set fits the VMEM budget; prefer
    >=2 total grid steps (v7x megacore) if within 2x of the best."""
    fixed = 2 * (9 * c_in * c_out * 2 + c_out * 4)        # weights+bias, 2 bufs
    row_in = stride * (w_in + 10) * c_in * 2              # bf16 input per out-row

    def fits(th):
        need = (fixed
                + 2 * (th + 2) * row_in
                + 2 * th * wo_t * c_out * out_itemsize
                + 2 * th * wo_t * c_out * 4)               # f32 acc + temps
        return need <= budget and th * wo_t <= 4096

    best_all, best_multi = 1, None
    for d in range(1, ho + 1):
        if ho % d or not fits(d):
            continue
        best_all = d
        if n_batch * (ho // d) >= 2:
            best_multi = d
    if best_multi is not None and 2 * best_multi >= best_all:
        return best_multi
    return best_all


def _make_conv3x3_s1_kernel(th, wo, wo_t, c_in, cw):
    def kernel(xm_ref, xh1_ref, xh2_ref, w_ref, b_ref, out_ref):
        w_full = w_ref[...]                                   # (9*c_in, cw)
        win = jnp.concatenate(
            [xm_ref[...], xh1_ref[...], xh2_ref[...]], axis=0)  # (th+2, wp, c)
        acc = None
        for kh in range(3):
            for kw in range(3):
                tap = win[kh:kh + th, kw:kw + wo_t, :]        # (th, wo_t, c)
                t = kh * 3 + kw
                w_tap = w_full[t * c_in:(t + 1) * c_in, :]
                d = jnp.dot(tap.reshape(th * wo_t, c_in), w_tap,
                            preferred_element_type=jnp.float32)
                acc = d if acc is None else acc + d
        y = jnp.maximum(acc + b_ref[...], 0.0).reshape(th, wo_t, cw)
        if wo_t != wo:
            y = y[:, :wo, :]
        out_ref[...] = y.astype(out_ref.dtype)
    return kernel


def _make_conv3x3_s2_kernel(th, wo, wo_t, c_in, cw):
    def kernel(e_ref, o_ref, eh_ref, w_ref, b_ref, out_ref):
        w_full = w_ref[...]                                   # (9*c_in, cw)
        e_rows = e_ref[...]          # (th, wo_t+1, 2c): even input rows
        o_rows = o_ref[...]          # (th, wo_t+1, 2c): odd  input rows
        e_halo = eh_ref[...]         # (1,  wo_t+1, 2c): next even row
        if th > 1:
            e_shift = jnp.concatenate([e_rows[1:], e_halo], axis=0)
        else:
            e_shift = e_halo
        rows_by_kh = (e_rows, o_rows, e_shift)
        acc = None
        for kh in range(3):
            src = rows_by_kh[kh]
            for kw in range(3):
                if kw == 0:                                   # even cols
                    tap = src[:, 0:wo_t, 0:c_in]
                elif kw == 1:                                 # odd cols
                    tap = src[:, 0:wo_t, c_in:2 * c_in]
                else:                                         # even cols + 1
                    tap = src[:, 1:wo_t + 1, 0:c_in]
                t = kh * 3 + kw
                w_tap = w_full[t * c_in:(t + 1) * c_in, :]
                d = jnp.dot(tap.reshape(th * wo_t, c_in), w_tap,
                            preferred_element_type=jnp.float32)
                acc = d if acc is None else acc + d
        y = jnp.maximum(acc + b_ref[...], 0.0).reshape(th, wo_t, cw)
        if wo_t != wo:
            y = y[:, :wo, :]
        out_ref[...] = y.astype(out_ref.dtype)
    return kernel


def conv3x3_bias_relu(x_nhwc, w9, bias, *, stride, out_dtype, soft_budget,
                      phys):
    """3x3 conv (padding=1) + BN(folded) + ReLU, NHWC, stride in {1, 2}."""
    n, h, w_sp, c = x_nhwc.shape
    cw = w9.shape[1]
    ho = (h - 1) // stride + 1
    wo = (w_sp - 1) // stride + 1
    wo_t = _round_up(wo, 8)              # tap width kept 8-aligned for reshapes
    out_itemsize = np.dtype(out_dtype).itemsize

    th = _choose_th(n, ho, wo_t, stride, w_sp, c, cw, out_itemsize, soft_budget)
    n_blocks = ho // th
    itemsize = x_nhwc.dtype.itemsize

    if stride == 1:
        wp = wo_t + 2
        # spatial pad only (top/bottom 1; right up to the 8-aligned tap width)
        xp = jnp.pad(x_nhwc, ((0, 0), (1, 1), (1, wp - 1 - w_sp), (0, 0)))
        # TODO(synk): conv1 could write straight into this padded buffer to
        #             save one HBM round trip of y1.
        in_specs = [
            pl.BlockSpec((None, th, wp, c), lambda i, j: (i, j, 0, 0)),
            pl.BlockSpec((None, 1, wp, c),
                         lambda i, j: (i, (j + 1) * th, 0, 0)),       # halo row
            pl.BlockSpec((None, 1, wp, c),
                         lambda i, j: (i, (j + 1) * th + 1, 0, 0)),   # halo row
            pl.BlockSpec((9 * c, cw), lambda i, j: (0, 0)),
            pl.BlockSpec((1, cw), lambda i, j: (0, 0)),
        ]
        args = (xp, xp, xp, w9, bias)
        kernel = _make_conv3x3_s1_kernel(th, wo, wo_t, c, cw)
        in_block_bytes = (th + 2) * wp * c * itemsize
    elif stride == 2:
        wph = wo_t + 1
        # pad so padded H = 2*(ho+1) and padded W = 2*wph, then a *free* HBM
        # reshape exposes row phases as a block index and column phases as
        # channel halves -> all in-kernel slices are unit-stride.
        xp = jnp.pad(x_nhwc, ((0, 0), (1, 2 * ho + 1 - h),
                              (1, 2 * wo_t + 1 - w_sp), (0, 0)))
        xr = xp.reshape(n, ho + 1, 2, wph, 2 * c)
        in_specs = [
            pl.BlockSpec((None, th, None, wph, 2 * c),
                         lambda i, j: (i, j, 0, 0, 0)),               # even rows
            pl.BlockSpec((None, th, None, wph, 2 * c),
                         lambda i, j: (i, j, 1, 0, 0)),               # odd rows
            pl.BlockSpec((None, 1, None, wph, 2 * c),
                         lambda i, j: (i, (j + 1) * th, 0, 0, 0)),    # even halo
            pl.BlockSpec((9 * c, cw), lambda i, j: (0, 0)),
            pl.BlockSpec((1, cw), lambda i, j: (0, 0)),
        ]
        args = (xr, xr, xr, w9, bias)
        kernel = _make_conv3x3_s2_kernel(th, wo, wo_t, c, cw)
        in_block_bytes = (2 * th + 1) * wph * 2 * c * itemsize
    else:
        raise NotImplementedError("stride must be 1 or 2")  # TODO(synk): general stride

    est = (2 * in_block_bytes
           + 2 * (w9.size * w9.dtype.itemsize + bias.size * 4)
           + 2 * th * wo * cw * out_itemsize
           + 3 * th * wo_t * cw * 4)
    return pl.pallas_call(
        kernel,
        out_shape=jax.ShapeDtypeStruct((n, ho, wo, cw), out_dtype),
        grid=(n, n_blocks),
        in_specs=in_specs,
        out_specs=pl.BlockSpec((None, th, wo, cw), lambda i, j: (i, j, 0, 0)),
        compiler_params=pltpu.CompilerParams(
            dimension_semantics=("parallel", "parallel"),
            vmem_limit_bytes=_vmem_limit_bytes(est, phys)),
    )(*args)


# ----------------------------------------------------------------------------
# BN folding / weight preparation (plain JAX, trace-time)
# ----------------------------------------------------------------------------
def _fold_bn(gamma, beta, mean, var):
    scale = gamma / jnp.sqrt(var + EPS)
    return scale, beta - mean * scale


def _prep_1x1(w_oihw, bn, cin_p, cout_p, dtype):
    scale, bias = _fold_bn(*bn)
    cout, cin = w_oihw.shape[0], w_oihw.shape[1]
    wm = jnp.transpose(w_oihw[:, :, 0, 0], (1, 0)) * scale[None, :]
    wm = jnp.pad(wm, ((0, cin_p - cin), (0, cout_p - cout))).astype(dtype)
    b = jnp.pad(bias, (0, cout_p - cout)).astype(jnp.float32)[None, :]
    return wm, b


def _prep_3x3(w_oihw, bn, cin_p, cout_p, dtype):
    scale, bias = _fold_bn(*bn)
    cout, cin = w_oihw.shape[0], w_oihw.shape[1]
    wk = jnp.transpose(w_oihw, (2, 3, 1, 0)) * scale          # (3,3,Cin,Cout)
    wk = jnp.pad(wk, ((0, 0), (0, 0), (0, cin_p - cin), (0, cout_p - cout)))
    wk = wk.reshape(9 * cin_p, cout_p).astype(dtype)
    b = jnp.pad(bias, (0, cout_p - cout)).astype(jnp.float32)[None, :]
    return wk, b


# ----------------------------------------------------------------------------
# Bottleneck forward (Pallas)
# ----------------------------------------------------------------------------
def bottleneck_forward(x_nchw, params, stride, compute_dtype=jnp.bfloat16):
    phys = _vmem_phys_bytes()
    soft_budget = max(24 * 2 ** 20, int(phys * 0.4))

    x = jnp.transpose(x_nchw, (0, 2, 3, 1)).astype(jnp.float32)     # NHWC
    n, h, w_sp, cin = x.shape
    width = params["conv1"].shape[0]
    cout = params["conv3"].shape[0]
    cin_p, width_p, cout_p = (_round_up(c, LANE) for c in (cin, width, cout))
    # TODO(synk): width<128 layers pay 2-4x padded FLOPs on conv2; masked
    #             64-lane stores might win for ResNet stage-1 widths.

    w1, b1 = _prep_1x1(params["conv1"], params["bn1"], cin_p, width_p, compute_dtype)
    w2, b2 = _prep_3x3(params["conv2"], params["bn2"], width_p, width_p, compute_dtype)
    w3, b3 = _prep_1x1(params["conv3"], params["bn3"], width_p, cout_p, compute_dtype)
    wsc, bsc = _prep_1x1(params["conv_sc"], params["bn_sc"], cin_p, cout_p, compute_dtype)
    b3sc = b3 + bsc      # conv3 + shortcut biases applied in one fused kernel

    xp = jnp.pad(x, ((0, 0), (0, 0), (0, 0), (0, cin_p - cin))).astype(compute_dtype)

    # --- conv1 (1x1) + BN + ReLU ---
    y1 = fused_matmul_bias_act([(xp.reshape(n * h * w_sp, cin_p), w1)], b1,
                               relu=True, out_dtype=compute_dtype,
                               soft_budget=soft_budget, phys=phys)
    y1 = y1.reshape(n, h, w_sp, width_p)

    # --- conv2 (3x3, stride, pad=1) + BN + ReLU (multi-row blocked) ---
    y2 = conv3x3_bias_relu(y1, w2, b2, stride=stride, out_dtype=compute_dtype,
                           soft_budget=soft_budget, phys=phys)
    _, ho, wo, _ = y2.shape

    # --- conv3 (1x1) + BN + shortcut (1x1, stride) + BN + add + ReLU, fused ---
    if stride == 1:
        xsc = xp.reshape(n * h * w_sp, cin_p)
    else:
        # TODO(synk): fold the stride into the final kernel's BlockSpec to
        #             avoid materializing this strided slice in HBM.
        xsc = xp[:, ::stride, ::stride, :].reshape(n * ho * wo, cin_p)
    out = fused_matmul_bias_act(
        [(y2.reshape(n * ho * wo, width_p), w3), (xsc, wsc)], b3sc,
        relu=True, out_dtype=jnp.float32,
        soft_budget=soft_budget, phys=phys)

    out = out.reshape(n, ho, wo, cout_p)
    if cout_p != cout:
        out = out[..., :cout]
    return jnp.transpose(out, (0, 3, 1, 2))                        # NCHW


# ----------------------------------------------------------------------------
# Pure-JAX f32 reference (for the correctness check)
# ----------------------------------------------------------------------------
def _conv_ref(x_nhwc, w_oihw, stride, padding):
    return jax.lax.conv_general_dilated(
        x_nhwc, jnp.transpose(w_oihw, (2, 3, 1, 0)),
        window_strides=(stride, stride),
        padding=[(padding, padding), (padding, padding)],
        dimension_numbers=("NHWC", "HWIO", "NHWC"))


def _bn_ref(x, gamma, beta, mean, var):
    return gamma * (x - mean) / jnp.sqrt(var + EPS) + beta


def bottleneck_reference(x_nchw, params, stride):
    x = jnp.transpose(x_nchw, (0, 2, 3, 1)).astype(jnp.float32)
    y = _conv_ref(x, params["conv1"], 1, 0)
    y = jnp.maximum(_bn_ref(y, *params["bn1"]), 0.0)
    y = _conv_ref(y, params["conv2"], stride, 1)
    y = jnp.maximum(_bn_ref(y, *params["bn2"]), 0.0)
    y = _conv_ref(y, params["conv3"], 1, 0)
    y = _bn_ref(y, *params["bn3"])
    sc = _conv_ref(x, params["conv_sc"], stride, 0)
    sc = _bn_ref(sc, *params["bn_sc"])
    out = jnp.maximum(y + sc, 0.0)
    return jnp.transpose(out, (0, 3, 1, 2))


# ----------------------------------------------------------------------------
# Parameter construction (deterministic, synthetic)
# ----------------------------------------------------------------------------
def make_params(key, in_channels, out_channels, base_width=1):
    width = base_width * out_channels
    cout = 4 * out_channels            # Bottleneck.expansion = 4
    ks = jax.random.split(key, 8)

    def bn_params(k, c):
        k1, k2, k3, k4 = jax.random.split(k, 4)
        gamma = 1.0 + 0.1 * jax.random.normal(k1, (c,), jnp.float32)
        beta = 0.1 * jax.random.normal(k2, (c,), jnp.float32)
        mean = 0.1 * jax.random.normal(k3, (c,), jnp.float32)
        var = 1.0 + 0.1 * jax.random.uniform(k4, (c,), jnp.float32)
        return (gamma, beta, mean, var)

    return {
        "conv1": 0.2 * jax.random.normal(ks[0], (width, in_channels, 1, 1), jnp.float32),
        "bn1": bn_params(ks[1], width),
        "conv2": 0.2 * jax.random.normal(ks[2], (width, width, 3, 3), jnp.float32),
        "bn2": bn_params(ks[3], width),
        "conv3": 0.2 * jax.random.normal(ks[4], (cout, width, 1, 1), jnp.float32),
        "bn3": bn_params(ks[5], cout),
        "conv_sc": 0.2 * jax.random.normal(ks[6], (cout, in_channels, 1, 1), jnp.float32),
        "bn_sc": bn_params(ks[7], cout),
    }


if __name__ == "__main__":
    key = jax.random.PRNGKey(0)
    k_x, k_p = jax.random.split(key)

    in_channels, out_channels = 4, 4
    x = jax.random.normal(k_x, (2, in_channels, 16, 16), jnp.float32)   # NCHW
    params = make_params(k_p, in_channels, out_channels)

    for stride in (2, 1):     # exercises both the strided and unit-stride paths
        fwd = jax.jit(functools.partial(bottleneck_forward, stride=stride))
        out = jax.block_until_ready(fwd(x, params))
        ref = bottleneck_reference(x, params, stride)
        ho = (16 - 1) // stride + 1
        assert out.shape == (2, 4 * out_channels, ho, ho), out.shape
        # bf16 streams with f32 accumulation: compare with a loose tolerance.
        err = float(jnp.max(jnp.abs(out - ref)) / (jnp.max(jnp.abs(ref)) + 1e-6))
        assert err < 3e-2, err

    print("KERNEL_OK")
</pallas_src>

<mosaic_0001>
module attributes {stable_mosaic.version = 11 : i64} {
  func.func @kernel(%arg0: i32, %arg1: memref<256x128xbf16, #tpu.memory_space<vmem>>, %arg2: memref<128x128xbf16, #tpu.memory_space<vmem>>, %arg3: memref<1x128xf32, #tpu.memory_space<vmem>>, %arg4: memref<256x128xbf16, #tpu.memory_space<vmem>>) attributes {dimension_semantics = [#tpu.dimension_semantics<parallel>], iteration_bounds = array<i64: 2>, scalar_prefetch = 0 : i64, scratch_operands = 0 : i64, tpu.core_type = #tpu.core_type<tc>, window_params = [{transform_indices = @transform_0, window_bounds = array<i64: 256, 128>}, {pipeline_mode = #tpu.pipeline_mode<synchronous>, transform_indices = @transform_1, window_bounds = array<i64: 128, 128>}, {pipeline_mode = #tpu.pipeline_mode<synchronous>, transform_indices = @transform_2, window_bounds = array<i64: 1, 128>}, {transform_indices = @transform_3, window_bounds = array<i64: 256, 128>}]} {
    %c0 = arith.constant 0 : index
    %c0_0 = arith.constant 0 : index
    %0 = vector.load %arg1[%c0, %c0_0] : memref<256x128xbf16, #tpu.memory_space<vmem>>, vector<256x128xbf16>
    %c0_1 = arith.constant 0 : index
    %c0_2 = arith.constant 0 : index
    %1 = vector.load %arg2[%c0_1, %c0_2] : memref<128x128xbf16, #tpu.memory_space<vmem>>, vector<128x128xbf16>
    %cst = arith.constant dense<0.000000e+00> : vector<256x128xf32>
    %2 = tpu.matmul %0, %1, %cst {dimension_numbers = #tpu.dot_dimension_numbers<[1], [0], [0], [1], [0, 0, 1, 1], [], []>} : vector<256x128xbf16>, vector<128x128xbf16>, vector<256x128xf32> -> vector<256x128xf32>
    %c0_3 = arith.constant 0 : index
    %c0_4 = arith.constant 0 : index
    %3 = vector.load %arg3[%c0_3, %c0_4] : memref<1x128xf32, #tpu.memory_space<vmem>>, vector<1x128xf32>
    %4 = vector.broadcast %3 : vector<1x128xf32> to vector<256x128xf32>
    %5 = arith.addf %2, %4 : vector<256x128xf32>
    %cst_5 = arith.constant 0.000000e+00 : f32
    %6 = vector.broadcast %cst_5 : f32 to vector<256x128xf32>
    %7 = arith.maximumf %5, %6 : vector<256x128xf32>
    %8 = arith.truncf %7 : vector<256x128xf32> to vector<256x128xbf16>
    %c0_6 = arith.constant 0 : index
    %c0_7 = arith.constant 0 : index
    %9 = vector.load %arg4[%c0_6, %c0_7] : memref<256x128xbf16, #tpu.memory_space<vmem>>, vector<256x128xbf16>
    tpu.vector_store %arg4[%c0_6, %c0_7], %8 {strides = array<i32>} : memref<256x128xbf16, #tpu.memory_space<vmem>>, vector<256x128xbf16>,
    return
  }
  func.func @transform_0(%arg0: i32) -> (i32, i32) {
    %c0_i32 = arith.constant 0 : i32
    %c0_i32_0 = arith.constant 0 : i32
    return %arg0, %c0_i32 : i32, i32
  }
  func.func @transform_1(%arg0: i32) -> (i32, i32) {
    %c0_i32 = arith.constant 0 : i32
    %c0_i32_0 = arith.constant 0 : i32
    %c0_i32_1 = arith.constant 0 : i32
    return %c0_i32, %c0_i32_0 : i32, i32
  }
  func.func @transform_2(%arg0: i32) -> (i32, i32) {
    %c0_i32 = arith.constant 0 : i32
    %c0_i32_0 = arith.constant 0 : i32
    %c0_i32_1 = arith.constant 0 : i32
    return %c0_i32, %c0_i32_0 : i32, i32
  }
  func.func @transform_3(%arg0: i32) -> (i32, i32) {
    %c0_i32 = arith.constant 0 : i32
    %c0_i32_0 = arith.constant 0 : i32
    return %arg0, %c0_i32 : i32, i32
  }
}

module attributes {stable_mosaic.version = 11 : i64} {
  func.func @kernel(%arg0: i32, %arg1: i32, %arg2: memref<1x8x1x9x256xbf16, #tpu.memory_space<vmem>>, %arg3: memref<1x8x1x9x256xbf16, #tpu.memory_space<vmem>>, %arg4: memref<1x1x1x9x256xbf16, #tpu.memory_space<vmem>>, %arg5: memref<1152x128xbf16, #tpu.memory_space<vmem>>, %arg6: memref<1x128xf32, #tpu.memory_space<vmem>>, %arg7: memref<1x8x8x128xbf16, #tpu.memory_space<vmem>>) attributes {dimension_semantics = [#tpu.dimension_semantics<parallel>, #tpu.dimension_semantics<parallel>], iteration_bounds = array<i64: 2, 1>, scalar_prefetch = 0 : i64, scratch_operands = 0 : i64, tpu.core_type = #tpu.core_type<tc>, window_params = [{transform_indices = @transform_0, window_bounds = array<i64: 1, 8, 1, 9, 256>}, {transform_indices = @transform_1, window_bounds = array<i64: 1, 8, 1, 9, 256>}, {transform_indices = @transform_2, window_bounds = array<i64: 1, 1, 1, 9, 256>}, {pipeline_mode = #tpu.pipeline_mode<synchronous>, transform_indices = @transform_3, window_bounds = array<i64: 1152, 128>}, {pipeline_mode = #tpu.pipeline_mode<synchronous>, transform_indices = @transform_4, window_bounds = array<i64: 1, 128>}, {transform_indices = @transform_5, window_bounds = array<i64: 1, 8, 8, 128>}]} {
    %c0 = arith.constant 0 : index
    %c0_0 = arith.constant 0 : index
    %0 = vector.load %arg5[%c0, %c0_0] : memref<1152x128xbf16, #tpu.memory_space<vmem>>, vector<1152x128xbf16>
    %c0_1 = arith.constant 0 : index
    %c0_2 = arith.constant 0 : index
    %c0_3 = arith.constant 0 : index
    %c0_4 = arith.constant 0 : index
    %c0_5 = arith.constant 0 : index
    %1 = vector.load %arg2[%c0_1, %c0_2, %c0_3, %c0_4, %c0_5] : memref<1x8x1x9x256xbf16, #tpu.memory_space<vmem>>, vector<1x8x1x9x256xbf16>
    %2 = vector.shape_cast %1 : vector<1x8x1x9x256xbf16> to vector<8x9x256xbf16>
    %c0_6 = arith.constant 0 : index
    %c0_7 = arith.constant 0 : index
    %c0_8 = arith.constant 0 : index
    %c0_9 = arith.constant 0 : index
    %c0_10 = arith.constant 0 : index
    %3 = vector.load %arg3[%c0_6, %c0_7, %c0_8, %c0_9, %c0_10] : memref<1x8x1x9x256xbf16, #tpu.memory_space<vmem>>, vector<1x8x1x9x256xbf16>
    %4 = vector.shape_cast %3 : vector<1x8x1x9x256xbf16> to vector<8x9x256xbf16>
    %c0_11 = arith.constant 0 : index
    %c0_12 = arith.constant 0 : index
    %c0_13 = arith.constant 0 : index
    %c0_14 = arith.constant 0 : index
    %c0_15 = arith.constant 0 : index
    %5 = vector.load %arg4[%c0_11, %c0_12, %c0_13, %c0_14, %c0_15] : memref<1x1x1x9x256xbf16, #tpu.memory_space<vmem>>, vector<1x1x1x9x256xbf16>
    %6 = vector.shape_cast %5 : vector<1x1x1x9x256xbf16> to vector<1x9x256xbf16>
    %7 = vector.extract_strided_slice %2 {offsets = [1, 0, 0], sizes = [7, 9, 256], strides = [1, 1, 1]} : vector<8x9x256xbf16> to vector<7x9x256xbf16>
    %8 = tpu.concatenate %7, %6 in 0 : vector<7x9x256xbf16>, vector<1x9x256xbf16> -> vector<8x9x256xbf16>
    %9 = vector.extract_strided_slice %2 {offsets = [0, 0, 0], sizes = [8, 8, 128], strides = [1, 1, 1]} : vector<8x9x256xbf16> to vector<8x8x128xbf16>
    %10 = vector.extract_strided_slice %0 {offsets = [0, 0], sizes = [128, 128], strides = [1, 1]} : vector<1152x128xbf16> to vector<128x128xbf16>
    %11 = vector.shape_cast %9 : vector<8x8x128xbf16> to vector<64x128xbf16>
    %cst = arith.constant dense<0.000000e+00> : vector<64x128xf32>
    %12 = tpu.matmul %11, %10, %cst {dimension_numbers = #tpu.dot_dimension_numbers<[1], [0], [0], [1], [0, 0, 1, 1], [], []>} : vector<64x128xbf16>, vector<128x128xbf16>, vector<64x128xf32> -> vector<64x128xf32>
    %13 = vector.extract_strided_slice %2 {offsets = [0, 0, 128], sizes = [8, 8, 128], strides = [1, 1, 1]} : vector<8x9x256xbf16> to vector<8x8x128xbf16>
    %14 = vector.extract_strided_slice %0 {offsets = [128, 0], sizes = [128, 128], strides = [1, 1]} : vector<1152x128xbf16> to vector<128x128xbf16>
    %15 = vector.shape_cast %13 : vector<8x8x128xbf16> to vector<64x128xbf16>
    %cst_16 = arith.constant dense<0.000000e+00> : vector<64x128xf32>
    %16 = tpu.matmul %15, %14, %cst_16 {dimension_numbers = #tpu.dot_dimension_numbers<[1], [0], [0], [1], [0, 0, 1, 1], [], []>} : vector<64x128xbf16>, vector<128x128xbf16>, vector<64x128xf32> -> vector<64x128xf32>
    %17 = arith.addf %12, %16 : vector<64x128xf32>
    %18 = vector.extract_strided_slice %2 {offsets = [0, 1, 0], sizes = [8, 8, 128], strides = [1, 1, 1]} : vector<8x9x256xbf16> to vector<8x8x128xbf16>
    %19 = vector.extract_strided_slice %0 {offsets = [256, 0], sizes = [128, 128], strides = [1, 1]} : vector<1152x128xbf16> to vector<128x128xbf16>
    %20 = vector.shape_cast %18 : vector<8x8x128xbf16> to vector<64x128xbf16>
    %cst_17 = arith.constant dense<0.000000e+00> : vector<64x128xf32>
    %21 = tpu.matmul %20, %19, %cst_17 {dimension_numbers = #tpu.dot_dimension_numbers<[1], [0], [0], [1], [0, 0, 1, 1], [], []>} : vector<64x128xbf16>, vector<128x128xbf16>, vector<64x128xf32> -> vector<64x128xf32>
    %22 = arith.addf %17, %21 : vector<64x128xf32>
    %23 = vector.extract_strided_slice %4 {offsets = [0, 0, 0], sizes = [8, 8, 128], strides = [1, 1, 1]} : vector<8x9x256xbf16> to vector<8x8x128xbf16>
    %24 = vector.extract_strided_slice %0 {offsets = [384, 0], sizes = [128, 128], strides = [1, 1]} : vector<1152x128xbf16> to vector<128x128xbf16>
    %25 = vector.shape_cast %23 : vector<8x8x128xbf16> to vector<64x128xbf16>
    %cst_18 = arith.constant dense<0.000000e+00> : vector<64x128xf32>
    %26 = tpu.matmul %25, %24, %cst_18 {dimension_numbers = #tpu.dot_dimension_numbers<[1], [0], [0], [1], [0, 0, 1, 1], [], []>} : vector<64x128xbf16>, vector<128x128xbf16>, vector<64x128xf32> -> vector<64x128xf32>
    %27 = arith.addf %22, %26 : vector<64x128xf32>
    %28 = vector.extract_strided_slice %4 {offsets = [0, 0, 128], sizes = [8, 8, 128], strides = [1, 1, 1]} : vector<8x9x256xbf16> to vector<8x8x128xbf16>
    %29 = vector.extract_strided_slice %0 {offsets = [512, 0], sizes = [128, 128], strides = [1, 1]} : vector<1152x128xbf16> to vector<128x128xbf16>
    %30 = vector.shape_cast %28 : vector<8x8x128xbf16> to vector<64x128xbf16>
    %cst_19 = arith.constant dense<0.000000e+00> : vector<64x128xf32>
    %31 = tpu.matmul %30, %29, %cst_19 {dimension_numbers = #tpu.dot_dimension_numbers<[1], [0], [0], [1], [0, 0, 1, 1], [], []>} : vector<64x128xbf16>, vector<128x128xbf16>, vector<64x128xf32> -> vector<64x128xf32>
    %32 = arith.addf %27, %31 : vector<64x128xf32>
    %33 = vector.extract_strided_slice %4 {offsets = [0, 1, 0], sizes = [8, 8, 128], strides = [1, 1, 1]} : vector<8x9x256xbf16> to vector<8x8x128xbf16>
    %34 = vector.extract_strided_slice %0 {offsets = [640, 0], sizes = [128, 128], strides = [1, 1]} : vector<1152x128xbf16> to vector<128x128xbf16>
    %35 = vector.shape_cast %33 : vector<8x8x128xbf16> to vector<64x128xbf16>
    %cst_20 = arith.constant dense<0.000000e+00> : vector<64x128xf32>
    %36 = tpu.matmul %35, %34, %cst_20 {dimension_numbers = #tpu.dot_dimension_numbers<[1], [0], [0], [1], [0, 0, 1, 1], [], []>} : vector<64x128xbf16>, vector<128x128xbf16>, vector<64x128xf32> -> vector<64x128xf32>
    %37 = arith.addf %32, %36 : vector<64x128xf32>
    %38 = vector.extract_strided_slice %8 {offsets = [0, 0, 0], sizes = [8, 8, 128], strides = [1, 1, 1]} : vector<8x9x256xbf16> to vector<8x8x128xbf16>
    %39 = vector.extract_strided_slice %0 {offsets = [768, 0], sizes = [128, 128], strides = [1, 1]} : vector<1152x128xbf16> to vector<128x128xbf16>
    %40 = vector.shape_cast %38 : vector<8x8x128xbf16> to vector<64x128xbf16>
    %cst_21 = arith.constant dense<0.000000e+00> : vector<64x128xf32>
    %41 = tpu.matmul %40, %39, %cst_21 {dimension_numbers = #tpu.dot_dimension_numbers<[1], [0], [0], [1], [0, 0, 1, 1], [], []>} : vector<64x128xbf16>, vector<128x128xbf16>, vector<64x128xf32> -> vector<64x128xf32>
    %42 = arith.addf %37, %41 : vector<64x128xf32>
    %43 = vector.extract_strided_slice %8 {offsets = [0, 0, 128], sizes = [8, 8, 128], strides = [1, 1, 1]} : vector<8x9x256xbf16> to vector<8x8x128xbf16>
    %44 = vector.extract_strided_slice %0 {offsets = [896, 0], sizes = [128, 128], strides = [1, 1]} : vector<1152x128xbf16> to vector<128x128xbf16>
    %45 = vector.shape_cast %43 : vector<8x8x128xbf16> to vector<64x128xbf16>
    %cst_22 = arith.constant dense<0.000000e+00> : vector<64x128xf32>
    %46 = tpu.matmul %45, %44, %cst_22 {dimension_numbers = #tpu.dot_dimension_numbers<[1], [0], [0], [1], [0, 0, 1, 1], [], []>} : vector<64x128xbf16>, vector<128x128xbf16>, vector<64x128xf32> -> vector<64x128xf32>
    %47 = arith.addf %42, %46 : vector<64x128xf32>
    %48 = vector.extract_strided_slice %8 {offsets = [0, 1, 0], sizes = [8, 8, 128], strides = [1, 1, 1]} : vector<8x9x256xbf16> to vector<8x8x128xbf16>
    %49 = vector.extract_strided_slice %0 {offsets = [1024, 0], sizes = [128, 128], strides = [1, 1]} : vector<1152x128xbf16> to vector<128x128xbf16>
    %50 = vector.shape_cast %48 : vector<8x8x128xbf16> to vector<64x128xbf16>
    %cst_23 = arith.constant dense<0.000000e+00> : vector<64x128xf32>
    %51 = tpu.matmul %50, %49, %cst_23 {dimension_numbers = #tpu.dot_dimension_numbers<[1], [0], [0], [1], [0, 0, 1, 1], [], []>} : vector<64x128xbf16>, vector<128x128xbf16>, vector<64x128xf32> -> vector<64x128xf32>
    %52 = arith.addf %47, %51 : vector<64x128xf32>
    %c0_24 = arith.constant 0 : index
    %c0_25 = arith.constant 0 : index
    %53 = vector.load %arg6[%c0_24, %c0_25] : memref<1x128xf32, #tpu.memory_space<vmem>>, vector<1x128xf32>
    %54 = vector.broadcast %53 : vector<1x128xf32> to vector<64x128xf32>
    %55 = arith.addf %52, %54 : vector<64x128xf32>
    %cst_26 = arith.constant 0.000000e+00 : f32
    %56 = vector.broadcast %cst_26 : f32 to vector<64x128xf32>
    %57 = arith.maximumf %55, %56 : vector<64x128xf32>
    %58 = vector.shape_cast %57 : vector<64x128xf32> to vector<8x8x128xf32>
    %59 = arith.truncf %58 : vector<8x8x128xf32> to vector<8x8x128xbf16>
    %c0_27 = arith.constant 0 : index
    %c0_28 = arith.constant 0 : index
    %c0_29 = arith.constant 0 : index
    %c0_30 = arith.constant 0 : index
    %60 = vector.load %arg7[%c0_27, %c0_28, %c0_29, %c0_30] : memref<1x8x8x128xbf16, #tpu.memory_space<vmem>>, vector<1x8x8x128xbf16>
    %61 = vector.shape_cast %60 : vector<1x8x8x128xbf16> to vector<8x8x128xbf16>
    %62 = vector.shape_cast %59 : vector<8x8x128xbf16> to vector<1x8x8x128xbf16>
    tpu.vector_store %arg7[%c0_27, %c0_28, %c0_29, %c0_30], %62 {strides = array<i32>} : memref<1x8x8x128xbf16, #tpu.memory_space<vmem>>, vector<1x8x8x128xbf16>,
    return
  }
  func.func @transform_0(%arg0: i32, %arg1: i32) -> (i32, i32, i32, i32, i32) {
    %c0_i32 = arith.constant 0 : i32
    %c0_i32_0 = arith.constant 0 : i32
    %c0_i32_1 = arith.constant 0 : i32
    %c0_i32_2 = arith.constant 0 : i32
    return %arg0, %arg1, %c0_i32, %c0_i32_0, %c0_i32_1 : i32, i32, i32, i32, i32
  }
  func.func @transform_1(%arg0: i32, %arg1: i32) -> (i32, i32, i32, i32, i32) {
    %c1_i32 = arith.constant 1 : i32
    %c0_i32 = arith.constant 0 : i32
    %c0_i32_0 = arith.constant 0 : i32
    %c0_i32_1 = arith.constant 0 : i32
    return %arg0, %arg1, %c1_i32, %c0_i32, %c0_i32_0 : i32, i32, i32, i32, i32
  }
  func.func @transform_2(%arg0: i32, %arg1: i32) -> (i32, i32, i32, i32, i32) {
    %c1_i32 = arith.constant 1 : i32
    %0 = arith.addi %arg1, %c1_i32 : i32
    %c8_i32 = arith.constant 8 : i32
    %1 = arith.muli %0, %c8_i32 : i32
    %c0_i32 = arith.constant 0 : i32
    %c0_i32_0 = arith.constant 0 : i32
    %c0_i32_1 = arith.constant 0 : i32
    %c0_i32_2 = arith.constant 0 : i32
    return %arg0, %1, %c0_i32, %c0_i32_0, %c0_i32_1 : i32, i32, i32, i32, i32
  }
  func.func @transform_3(%arg0: i32, %arg1: i32) -> (i32, i32) {
    %c0_i32 = arith.constant 0 : i32
    %c0_i32_0 = arith.constant 0 : i32
    %c0_i32_1 = arith.constant 0 : i32
    return %c0_i32, %c0_i32_0 : i32, i32
  }
  func.func @transform_4(%arg0: i32, %arg1: i32) -> (i32, i32) {
    %c0_i32 = arith.constant 0 : i32
    %c0_i32_0 = arith.constant 0 : i32
    %c0_i32_1 = arith.constant 0 : i32
    return %c0_i32, %c0_i32_0 : i32, i32
  }
  func.func @transform_5(%arg0: i32, %arg1: i32) -> (i32, i32, i32, i32) {
    %c0_i32 = arith.constant 0 : i32
    %c0_i32_0 = arith.constant 0 : i32
    %c0_i32_1 = arith.constant 0 : i32
    return %arg0, %arg1, %c0_i32, %c0_i32_0 : i32, i32, i32, i32
  }
}

module attributes {stable_mosaic.version = 11 : i64} {
  func.func @kernel(%arg0: i32, %arg1: memref<128x128xbf16, #tpu.memory_space<vmem>>, %arg2: memref<128x128xbf16, #tpu.memory_space<vmem>>, %arg3: memref<128x128xbf16, #tpu.memory_space<vmem>>, %arg4: memref<128x128xbf16, #tpu.memory_space<vmem>>, %arg5: memref<1x128xf32, #tpu.memory_space<vmem>>, %arg6: memref<128x128xf32, #tpu.memory_space<vmem>>) attributes {dimension_semantics = [#tpu.dimension_semantics<parallel>], iteration_bounds = array<i64: 1>, scalar_prefetch = 0 : i64, scratch_operands = 0 : i64, tpu.core_type = #tpu.core_type<tc>, window_params = [{transform_indices = @transform_0, window_bounds = array<i64: 128, 128>}, {pipeline_mode = #tpu.pipeline_mode<synchronous>, transform_indices = @transform_1, window_bounds = array<i64: 128, 128>}, {transform_indices = @transform_2, window_bounds = array<i64: 128, 128>}, {pipeline_mode = #tpu.pipeline_mode<synchronous>, transform_indices = @transform_3, window_bounds = array<i64: 128, 128>}, {pipeline_mode = #tpu.pipeline_mode<synchronous>, transform_indices = @transform_4, window_bounds = array<i64: 1, 128>}, {transform_indices = @transform_5, window_bounds = array<i64: 128, 128>}]} {
    %c0 = arith.constant 0 : index
    %c0_0 = arith.constant 0 : index
    %0 = vector.load %arg1[%c0, %c0_0] : memref<128x128xbf16, #tpu.memory_space<vmem>>, vector<128x128xbf16>
    %c0_1 = arith.constant 0 : index
    %c0_2 = arith.constant 0 : index
    %1 = vector.load %arg2[%c0_1, %c0_2] : memref<128x128xbf16, #tpu.memory_space<vmem>>, vector<128x128xbf16>
    %cst = arith.constant dense<0.000000e+00> : vector<128x128xf32>
    %2 = tpu.matmul %0, %1, %cst {dimension_numbers = #tpu.dot_dimension_numbers<[1], [0], [0], [1], [0, 0, 1, 1], [], []>} : vector<128x128xbf16>, vector<128x128xbf16>, vector<128x128xf32> -> vector<128x128xf32>
    %c0_3 = arith.constant 0 : index
    %c0_4 = arith.constant 0 : index
    %3 = vector.load %arg3[%c0_3, %c0_4] : memref<128x128xbf16, #tpu.memory_space<vmem>>, vector<128x128xbf16>
    %c0_5 = arith.constant 0 : index
    %c0_6 = arith.constant 0 : index
    %4 = vector.load %arg4[%c0_5, %c0_6] : memref<128x128xbf16, #tpu.memory_space<vmem>>, vector<128x128xbf16>
    %cst_7 = arith.constant dense<0.000000e+00> : vector<128x128xf32>
    %5 = tpu.matmul %3, %4, %cst_7 {dimension_numbers = #tpu.dot_dimension_numbers<[1], [0], [0], [1], [0, 0, 1, 1], [], []>} : vector<128x128xbf16>, vector<128x128xbf16>, vector<128x128xf32> -> vector<128x128xf32>
    %6 = arith.addf %2, %5 : vector<128x128xf32>
    %c0_8 = arith.constant 0 : index
    %c0_9 = arith.constant 0 : index
    %7 = vector.load %arg5[%c0_8, %c0_9] : memref<1x128xf32, #tpu.memory_space<vmem>>, vector<1x128xf32>
    %8 = vector.broadcast %7 : vector<1x128xf32> to vector<128x128xf32>
    %9 = arith.addf %6, %8 : vector<128x128xf32>
    %cst_10 = arith.constant 0.000000e+00 : f32
    %10 = vector.broadcast %cst_10 : f32 to vector<128x128xf32>
    %11 = arith.maximumf %9, %10 : vector<128x128xf32>
    %c0_11 = arith.constant 0 : index
    %c0_12 = arith.constant 0 : index
    %12 = vector.load %arg6[%c0_11, %c0_12] : memref<128x128xf32, #tpu.memory_space<vmem>>, vector<128x128xf32>
    tpu.vector_store %arg6[%c0_11, %c0_12], %11 {strides = array<i32>} : memref<128x128xf32, #tpu.memory_space<vmem>>, vector<128x128xf32>,
    return
  }
  func.func @transform_0(%arg0: i32) -> (i32, i32) {
    %c0_i32 = arith.constant 0 : i32
    %c0_i32_0 = arith.constant 0 : i32
    return %arg0, %c0_i32 : i32, i32
  }
  func.func @transform_1(%arg0: i32) -> (i32, i32) {
    %c0_i32 = arith.constant 0 : i32
    %c0_i32_0 = arith.constant 0 : i32
    %c0_i32_1 = arith.constant 0 : i32
    return %c0_i32, %c0_i32_0 : i32, i32
  }
  func.func @transform_2(%arg0: i32) -> (i32, i32) {
    %c0_i32 = arith.constant 0 : i32
    %c0_i32_0 = arith.constant 0 : i32
    return %arg0, %c0_i32 : i32, i32
  }
  func.func @transform_3(%arg0: i32) -> (i32, i32) {
    %c0_i32 = arith.constant 0 : i32
    %c0_i32_0 = arith.constant 0 : i32
    %c0_i32_1 = arith.constant 0 : i32
    return %c0_i32, %c0_i32_0 : i32, i32
  }
  func.func @transform_4(%arg0: i32) -> (i32, i32) {
    %c0_i32 = arith.constant 0 : i32
    %c0_i32_0 = arith.constant 0 : i32
    %c0_i32_1 = arith.constant 0 : i32
    return %c0_i32, %c0_i32_0 : i32, i32
  }
  func.func @transform_5(%arg0: i32) -> (i32, i32) {
    %c0_i32 = arith.constant 0 : i32
    %c0_i32_0 = arith.constant 0 : i32
    return %arg0, %c0_i32 : i32, i32
  }
}

</mosaic_0001>

<llo_original>
// kernel: bottleneck_forward.3
$region0: #{bottleneck_forward.3}
  #allocation0 [shape = 'u32[]', space=smem, size = 0x4, offset = 0x4, fixed_abs, tag = 'smem constant byte address 0x4 - core index']
  #allocation1 [shape = 'u32[144,128]{1,0:T(1,128)}', space=vmem, size = 0x12000, scoped, tag = 'internal scratch']
  %s0 = inlined_call_operand.vmem [shape: bf16[512,128], index: 0, kind: input, shape index: {}]
  %s1 = inlined_call_operand.vmem [shape: bf16[128,128], index: 1, kind: input, shape index: {}]
  %s2 = inlined_call_operand.vmem [shape: f32[1,128], index: 2, kind: input, shape index: {}]
  %s3 = inlined_call_operand.vmem [shape: bf16[512,128], index: 3, kind: output, shape index: {}]
  %s4 = sld [smem:[#allocation0]]
  $region45: #{bottleneck_forward.3} parent=0
    _
  %s6 = ssub.s32 1, %s4
  %s7 = scalar_select 0, %s6, %s4
  loop: start=0, step=1, limit=4
  $region2: #{bottleneck_forward.3} parent=0 // loop_pre_header
    _
  $region3: #{bottleneck_forward.3} parent=0 // loop_header
    %s9 = sphi 0, %s13
    %p10 = scmp.ge.s32.totalorder %s9, 4
    %s19 = sphi 0, %s21
    %s22 = sphi 0, %s19
    %s23 = sphi 0, %s22
    %s39 = sphi 0, %s23
    %s43 = sphi 0, %s43
    %s45 = sphi 0, %s43
    %s46 = sphi 0, %s45
    %s60 = sphi 0, %s46
    %s64 = sphi 0, %s64
    %s66 = sphi 0, %s64
    %s67 = sphi 0, %s66
    %s81 = sphi 0, %s67
    %s87 = sphi 0, %s89
    %s90 = sphi 0, %s87
    %s91 = sphi 0, %s90
    %s107 = sphi 0, %s91
  $region4: #{bottleneck_forward.3} parent=0 // loop_header_branch
    %12 = sbr.rel (%p10) target = $region8
  $region5: #{bottleneck_forward.3} parent=0 // loop_body
    %s14 = ssub.s32 %s9, 1
    %s15 = ssub.s32 %s9, 2
    %s16 = sadd.s32 %s9, 1
    %s17 = ssub.s32 %s9, %s16
    %p18 = scmp.eq.s32.totalorder %s17, 0
    %s20 = sadd.s32 %s19, 1
    %s21 = scalar_select %p18, %s19, %s20
    %p24 = pneg %p18
    %p25 = scmp.eq.s32.totalorder %s9, 1
    %p26 = por %p24, %p25
    %p27 = scmp.ne.s32.totalorder %s19, %s22
    %p28 = scmp.eq.s32.totalorder %s9, 0
    %p29 = por %p27, %p28
    %p30 = scmp.ne.s32.totalorder %s19, %s22
    %p31 = scmp.eq.s32.totalorder %s14, 1
    %p32 = por %p30, %p31
    %p33 = scmp.ne.s32.totalorder %s22, %s23
    %p34 = scmp.eq.s32.totalorder %s14, 0
    %p35 = por %p33, %p34
    %p36 = scmp.ne.s32.totalorder %s22, %s23
    %p37 = scmp.eq.s32.totalorder %s15, 1
    %p38 = por %p36, %p37
    %p40 = scmp.ne.s32.totalorder %s23, %s39
    %p41 = scmp.eq.s32.totalorder %s15, 0
    %p42 = por %p40, %p41
    %s44 = sadd.s32 %s43, 1
    %p47 = scmp.eq.s32.totalorder %s9, 1
    %p48 = scmp.ne.s32.totalorder %s43, %s45
    %p49 = scmp.eq.s32.totalorder %s9, 0
    %p50 = por %p48, %p49
    %p51 = scmp.ne.s32.totalorder %s43, %s45
    %p52 = scmp.eq.s32.totalorder %s14, 1
    %p53 = por %p51, %p52
    %p54 = scmp.ne.s32.totalorder %s45, %s46
    %p55 = scmp.eq.s32.totalorder %s14, 0
    %p56 = por %p54, %p55
    %p57 = scmp.ne.s32.totalorder %s45, %s46
    %p58 = scmp.eq.s32.totalorder %s15, 1
    %p59 = por %p57, %p58
    %p61 = scmp.ne.s32.totalorder %s46, %s60
    %p62 = scmp.eq.s32.totalorder %s15, 0
    %p63 = por %p61, %p62
    %s65 = sadd.s32 %s64, 1
    %p68 = scmp.eq.s32.totalorder %s9, 1
    %p69 = scmp.ne.s32.totalorder %s64, %s66
    %p70 = scmp.eq.s32.totalorder %s9, 0
    %p71 = por %p69, %p70
    %p72 = scmp.ne.s32.totalorder %s64, %s66
    %p73 = scmp.eq.s32.totalorder %s14, 1
    %p74 = por %p72, %p73
    %p75 = scmp.ne.s32.totalorder %s66, %s67
    %p76 = scmp.eq.s32.totalorder %s14, 0
    %p77 = por %p75, %p76
    %p78 = scmp.ne.s32.totalorder %s66, %s67
    %p79 = scmp.eq.s32.totalorder %s15, 1
    %p80 = por %p78, %p79
    %p82 = scmp.ne.s32.totalorder %s67, %s81
    %p83 = scmp.eq.s32.totalorder %s15, 0
    %p84 = por %p82, %p83
    %s85 = ssub.s32 %s9, %s16
    %p86 = scmp.eq.s32.totalorder %s85, 0
    %s88 = sadd.s32 %s87, 1
    %s89 = scalar_select %p86, %s87, %s88
    %p92 = pneg %p86
    %p93 = scmp.eq.s32.totalorder %s9, 1
    %p94 = por %p92, %p93
    %p95 = scmp.ne.s32.totalorder %s87, %s90
    %p96 = scmp.eq.s32.totalorder %s9, 0
    %p97 = por %p95, %p96
    %p98 = scmp.ne.s32.totalorder %s87, %s90
    %p99 = scmp.eq.s32.totalorder %s14, 1
    %p100 = por %p98, %p99
    %p101 = scmp.ne.s32.totalorder %s90, %s91
    %p102 = scmp.eq.s32.totalorder %s14, 0
    %p103 = por %p101, %p102
    %p104 = scmp.ne.s32.totalorder %s90, %s91
    %p105 = scmp.eq.s32.totalorder %s15, 1
    %p106 = por %p104, %p105
    %p108 = scmp.ne.s32.totalorder %s91, %s107
    %p109 = scmp.eq.s32.totalorder %s15, 0
    %p110 = por %p108, %p109
    %p111 = scmp.le.s32.totalorder 1, %s9
    %p112 = scmp.lt.s32.totalorder %s9, 3
    %p113 = pnand %p111, %p112
    %p114 = pneg %p113
    // Predicated region
    $region9: #{bottleneck_forward.3} parent=5 // pred_check
      _
    $region10: #{bottleneck_forward.3} parent=5 // pred_check_branch
      %116 = sbr.rel (%p113) target = $region12
    $region11: #{bottleneck_forward.3} parent=5 // pred_region
      %s117 = ssub.s32 %s9, 1
      // Predicated region
      $region13: #{bottleneck_forward.3} parent=11 // pred_check
        %p118 = pneg %p56
      $region14: #{bottleneck_forward.3} parent=11 // pred_check_branch
        %120 = sbr.rel (%p118) target = $region16
      $region15: #{bottleneck_forward.3} parent=11 // pred_region
        _
      $region16: #{bottleneck_forward.3} parent=11 // pred_fallthru
        _
      // Predicated region
      $region17: #{bottleneck_forward.3} parent=11 // pred_check
        %p121 = pneg %p77
      $region18: #{bottleneck_forward.3} parent=11 // pred_check_branch
        %123 = sbr.rel (%p121) target = $region20
      $region19: #{bottleneck_forward.3} parent=11 // pred_region
        _
      $region20: #{bottleneck_forward.3} parent=11 // pred_fallthru
        _
    $region12: #{bottleneck_forward.3} parent=5 // pred_fallthru
      _
    %p124 = scmp.lt.s32.totalorder %s9, 2
    // Predicated region
    $region21: #{bottleneck_forward.3} parent=5 // pred_check
      %p125 = pneg %p124
    $region22: #{bottleneck_forward.3} parent=5 // pred_check_branch
      %127 = sbr.rel (%p125) target = $region24
    $region23: #{bottleneck_forward.3} parent=5 // pred_region
      // Predicated region
      $region25: #{bottleneck_forward.3} parent=23 // pred_check
        %p128 = pneg %p29
      $region26: #{bottleneck_forward.3} parent=23 // pred_check_branch
        %130 = sbr.rel (%p128) target = $region28
      $region27: #{bottleneck_forward.3} parent=23 // pred_region
        %s131 = smul.u32 32, %s9
        %p132 = scmp.lt.s32.totalorder %s131, 63
        %s133 = scalar_select %p132, %s131, 63
        %s134 = smul.addr %s133, 4
        %s135 = scalar_lea.vmem %s0, %s134
        %s136 = smul.u32 32, %s9
      $region28: #{bottleneck_forward.3} parent=23 // pred_fallthru
        _
    $region24: #{bottleneck_forward.3} parent=5 // pred_fallthru
      _
    %p137 = scmp.le.s32.totalorder 1, %s9
    %p138 = scmp.lt.s32.totalorder %s9, 3
    %p139 = pnand %p137, %p138
    %p140 = pneg %p139
    // Predicated region
    $region29: #{bottleneck_forward.3} parent=5 // pred_check
      _
    $region30: #{bottleneck_forward.3} parent=5 // pred_check_branch
      %142 = sbr.rel (%p139) target = $region32
    $region31: #{bottleneck_forward.3} parent=5 // pred_region
      %s143 = ssub.s32 %s9, 1
      %s144 = smul.u32 32, %s14
      %p145 = scmp.lt.s32.totalorder %s144, 63
      %s146 = scalar_select %p145, %s144, 63
      %s147 = smul.addr %s146, 4
      %s148 = scalar_lea.vmem %s0, %s147
      %p149 = pneg %p35
      %p150 = pneg %p32
      %p151 = pneg %p56
      %p152 = pneg %p53
      %p153 = pneg %p77
      %p154 = pneg %p74
      %p155 = pneg %p103
      %p156 = pneg %p100
      %s157 = smul.u32 32, %s14
      %p158 = scmp.lt.s32.totalorder %s157, 63
      %s159 = scalar_select %p158, %s157, 63
      %s160 = smul.addr %s159, 4
      %s161 = scalar_lea.vmem %s3, %s160
      %s162 = smul.u32 32, %s14
      %p163 = scmp.lt.s32.totalorder %s162, 63
      %s164 = scalar_select %p163, %s162, 63
      %s165 = smul.addr %s164, 4
      %s166 = scalar_lea.vmem %s0, %s165
      %s167 = smul.u32 32, %s14
      %s168 = smul.u32 32, %s14
      %p169 = scmp.lt.s32.totalorder %s168, 63
      %s170 = scalar_select %p169, %s168, 63
      %s171 = smul.addr %s170, 4
      %s172 = scalar_lea.vmem %s3, %s171
      %s173 = smul.u32 32, %s14
      %v175 = vld [vmem:[%s166] sm:$0xf]
      %v176 = vld [vmem:[%s166 + $0x4] sm:$0xf]
      %v177 = vld [vmem:[%s166 + $0x8] sm:$0xf]
      %v178 = vld [vmem:[%s166 + $0xc] sm:$0xf]
      %v179 = vld [vmem:[%s166 + $0x10] sm:$0xf]
      %v180 = vld [vmem:[%s166 + $0x14] sm:$0xf]
      %v181 = vld [vmem:[%s166 + $0x18] sm:$0xf]
      %v182 = vld [vmem:[%s166 + $0x1c] sm:$0xf]
      %v183 = vld [vmem:[%s166 + $0x20] sm:$0xf]
      %v184 = vld [vmem:[%s166 + $0x24] sm:$0xf]
      %v185 = vld [vmem:[%s166 + $0x28] sm:$0xf]
      %v186 = vld [vmem:[%s166 + $0x2c] sm:$0xf]
      %v187 = vld [vmem:[%s166 + $0x30] sm:$0xf]
      %v188 = vld [vmem:[%s166 + $0x34] sm:$0xf]
      %v189 = vld [vmem:[%s166 + $0x38] sm:$0xf]
      %v190 = vld [vmem:[%s166 + $0x3c] sm:$0xf]
      %v191 = vld [vmem:[%s166 + $0x40] sm:$0xf]
      %v192 = vld [vmem:[%s166 + $0x44] sm:$0xf]
      %v193 = vld [vmem:[%s166 + $0x48] sm:$0xf]
      %v194 = vld [vmem:[%s166 + $0x4c] sm:$0xf]
      %v195 = vld [vmem:[%s166 + $0x50] sm:$0xf]
      %v196 = vld [vmem:[%s166 + $0x54] sm:$0xf]
      %v197 = vld [vmem:[%s166 + $0x58] sm:$0xf]
      %v198 = vld [vmem:[%s166 + $0x5c] sm:$0xf]
      %v199 = vld [vmem:[%s166 + $0x60] sm:$0xf]
      %v200 = vld [vmem:[%s166 + $0x64] sm:$0xf]
      %v201 = vld [vmem:[%s166 + $0x68] sm:$0xf]
      %v202 = vld [vmem:[%s166 + $0x6c] sm:$0xf]
      %v203 = vld [vmem:[%s166 + $0x70] sm:$0xf]
      %v204 = vld [vmem:[%s166 + $0x74] sm:$0xf]
      %v205 = vld [vmem:[%s166 + $0x78] sm:$0xf]
      %v206 = vld [vmem:[%s166 + $0x7c] sm:$0xf]
      %v207 = vld [vmem:[%s1] sm:$0xf]
      %v208 = vld [vmem:[%s1 + $0x4] sm:$0xf]
      %v209 = vld [vmem:[%s1 + $0x8] sm:$0xf]
      %v210 = vld [vmem:[%s1 + $0xc] sm:$0xf]
      %v211 = vld [vmem:[%s1 + $0x10] sm:$0xf]
      %v212 = vld [vmem:[%s1 + $0x14] sm:$0xf]
      %v213 = vld [vmem:[%s1 + $0x18] sm:$0xf]
      %v214 = vld [vmem:[%s1 + $0x1c] sm:$0xf]
      %v215 = vld [vmem:[%s1 + $0x20] sm:$0xf]
      %v216 = vld [vmem:[%s1 + $0x24] sm:$0xf]
      %v217 = vld [vmem:[%s1 + $0x28] sm:$0xf]
      %v218 = vld [vmem:[%s1 + $0x2c] sm:$0xf]
      %v219 = vld [vmem:[%s1 + $0x30] sm:$0xf]
      %v220 = vld [vmem:[%s1 + $0x34] sm:$0xf]
      %v221 = vld [vmem:[%s1 + $0x38] sm:$0xf]
      %v222 = vld [vmem:[%s1 + $0x3c] sm:$0xf]
      %v223 = vld [vmem:[%s2] sm:$0x1]
      %v225 = vlaneseq
      %v226 = vshrl.u32 %v225, 7
      %v227 = vsub.s32 0, %v226
      %v228 = vrot.slane %v223, %v227
      %v262 = vunpack.c.l.b16 %v175
      %v263 = vunpack.c.l.b16 %v176
      %v264 = vunpack.c.l.b16 %v177
      %v265 = vunpack.c.l.b16 %v178
      %v266 = vunpack.c.l.b16 %v179
      %v267 = vunpack.c.l.b16 %v180
      %v268 = vunpack.c.l.b16 %v181
      %v269 = vunpack.c.l.b16 %v182
      %v270 = vunpack.c.l.b16 %v183
      %v271 = vunpack.c.l.b16 %v184
      %v272 = vunpack.c.l.b16 %v185
      %v273 = vunpack.c.l.b16 %v186
      %v274 = vunpack.c.l.b16 %v187
      %v275 = vunpack.c.l.b16 %v188
      %v276 = vunpack.c.l.b16 %v189
      %v277 = vunpack.c.l.b16 %v190
      %v278 = vunpack.c.l.b16 %v191
      %v279 = vunpack.c.l.b16 %v192
      %v280 = vunpack.c.l.b16 %v193
      %v281 = vunpack.c.l.b16 %v194
      %v282 = vunpack.c.l.b16 %v195
      %v283 = vunpack.c.l.b16 %v196
      %v284 = vunpack.c.l.b16 %v197
      %v285 = vunpack.c.l.b16 %v198
      %v286 = vunpack.c.l.b16 %v199
      %v287 = vunpack.c.l.b16 %v200
      %v288 = vunpack.c.l.b16 %v201
      %v289 = vunpack.c.l.b16 %v202
      %v290 = vunpack.c.l.b16 %v203
      %v291 = vunpack.c.l.b16 %v204
      %v292 = vunpack.c.l.b16 %v205
      %v293 = vunpack.c.l.b16 %v206
      %v294 = vpack.c.b16 %v263, %v262
      %v295 = vpack.c.b16 %v265, %v264
      %v296 = vpack.c.b16 %v267, %v266
      %v297 = vpack.c.b16 %v269, %v268
      %v298 = vpack.c.b16 %v271, %v270
      %v299 = vpack.c.b16 %v273, %v272
      %v300 = vpack.c.b16 %v275, %v274
      %v301 = vpack.c.b16 %v277, %v276
      %v302 = vpack.c.b16 %v279, %v278
      %v303 = vpack.c.b16 %v281, %v280
      %v304 = vpack.c.b16 %v283, %v282
      %v305 = vpack.c.b16 %v285, %v284
      %v306 = vpack.c.b16 %v287, %v286
      %v307 = vpack.c.b16 %v289, %v288
      %v308 = vpack.c.b16 %v291, %v290
      %v309 = vpack.c.b16 %v293, %v292
      %v342 = vunpack.c.l.b16 %v207
      %v343 = vunpack.c.l.b16 %v208
      %v344 = vunpack.c.l.b16 %v209
      %v345 = vunpack.c.l.b16 %v210
      %v346 = vunpack.c.l.b16 %v211
      %v347 = vunpack.c.l.b16 %v212
      %v348 = vunpack.c.l.b16 %v213
      %v349 = vunpack.c.l.b16 %v214
      %v350 = vunpack.c.l.b16 %v215
      %v351 = vunpack.c.l.b16 %v216
      %v352 = vunpack.c.l.b16 %v217
      %v353 = vunpack.c.l.b16 %v218
      %v354 = vunpack.c.l.b16 %v219
      %v355 = vunpack.c.l.b16 %v220
      %v356 = vunpack.c.l.b16 %v221
      %v357 = vunpack.c.l.b16 %v222
      %v358 = vpack.c.b16 %v343, %v342
      %v359 = vpack.c.b16 %v345, %v344
      %v360 = vpack.c.b16 %v347, %v346
      %v361 = vpack.c.b16 %v349, %v348
      %v362 = vpack.c.b16 %v351, %v350
      %v363 = vpack.c.b16 %v353, %v352
      %v364 = vpack.c.b16 %v355, %v354
      %v365 = vpack.c.b16 %v357, %v356
      %374 = vmatprep.subr.bf16.mxu0 0
      %375 = vmatpush1.bf16.msra.mxu0 %v365
      %376 = vmatprep.subr.bf16.mxu0 0
      %377 = vmatpush1.bf16.msra.mxu0 %v364
      %378 = vmatprep.subr.bf16.mxu0 0
      %379 = vmatpush1.bf16.msra.mxu0 %v363
      %380 = vmatprep.subr.bf16.mxu0 0
      %381 = vmatpush1.bf16.msra.mxu0 %v362
      %382 = vmatprep.subr.bf16.mxu0 0
      %383 = vmatpush1.bf16.msra.mxu0 %v361
      %384 = vmatprep.subr.bf16.mxu0 0
      %385 = vmatpush1.bf16.msra.mxu0 %v360
      %386 = vmatprep.subr.bf16.mxu0 0
      %387 = vmatpush1.bf16.msra.mxu0 %v359
      %388 = vmatprep.subr.bf16.mxu0 0
      %389 = vmatpush1.bf16.msra.mxu0 %v358
      %390 = vmatprep.subr.bf16.mxu0 0
      %391 = vmatpush2.bf16.msra.mxu0 0
      %392 = vmatprep.subr.bf16.mxu0 0
      %393 = vmatpush2.bf16.msra.mxu0 0
      %394 = vmatprep.subr.bf16.mxu0 0
      %395 = vmatpush2.bf16.msra.mxu0 0
      %396 = vmatprep.subr.bf16.mxu0 0
      %397 = vmatpush2.bf16.msra.mxu0 0
      %398 = vmatprep.subr.bf16.mxu0 0
      %399 = vmatpush2.bf16.msra.mxu0 0
      %400 = vmatprep.subr.bf16.mxu0 0
      %401 = vmatpush2.bf16.msra.mxu0 0
      %402 = vmatprep.subr.bf16.mxu0 0
      %403 = vmatpush2.bf16.msra.mxu0 0
      %404 = vmatprep.subr.bf16.mxu0 0
      %405 = vmatpush2.bf16.msra.mxu0 0
      %406 = vmatprep.mubr.bf16.mxu0 0
      %407 = vmatmul.mubr.bf16.gmra.mxu0 %v294
      %v408 = vpop.f32.mrf.mxu0
      %v409 = vadd.f32 %v228, %v408
      %v410 = vpop.f32.mrf.mxu0
      %v411 = vpop.f32.mrf.mxu0
      %v412 = vadd.f32 %v228, %v411
      %v413 = vpop.f32.mrf.mxu0
      %414 = vmatprep.mubr.bf16.mxu0 0
      %415 = vmatmul.mubr.bf16.gmra.mxu0 %v295
      %v416 = vpop.f32.mrf.mxu0
      %v417 = vadd.f32 %v228, %v416
      %v418 = vpop.f32.mrf.mxu0
      %v419 = vpop.f32.mrf.mxu0
      %v420 = vadd.f32 %v228, %v419
      %v421 = vpop.f32.mrf.mxu0
      %422 = vmatprep.mubr.bf16.mxu0 0
      %423 = vmatmul.mubr.bf16.gmra.mxu0 %v296
      %v424 = vpop.f32.mrf.mxu0
      %v425 = vadd.f32 %v228, %v424
      %v426 = vpop.f32.mrf.mxu0
      %v427 = vpop.f32.mrf.mxu0
      %v428 = vadd.f32 %v228, %v427
      %v429 = vpop.f32.mrf.mxu0
      %430 = vmatprep.mubr.bf16.mxu0 0
      %431 = vmatmul.mubr.bf16.gmra.mxu0 %v297
      %v432 = vpop.f32.mrf.mxu0
      %v433 = vadd.f32 %v228, %v432
      %v434 = vpop.f32.mrf.mxu0
      %v435 = vpop.f32.mrf.mxu0
      %v436 = vadd.f32 %v228, %v435
      %v437 = vpop.f32.mrf.mxu0
      %438 = vmatprep.mubr.bf16.mxu0 0
      %439 = vmatmul.mubr.bf16.gmra.mxu0 %v298
      %v440 = vpop.f32.mrf.mxu0
      %v441 = vadd.f32 %v228, %v440
      %v442 = vpop.f32.mrf.mxu0
      %v443 = vpop.f32.mrf.mxu0
      %v444 = vadd.f32 %v228, %v443
      %v445 = vpop.f32.mrf.mxu0
      %446 = vmatprep.mubr.bf16.mxu0 0
      %447 = vmatmul.mubr.bf16.gmra.mxu0 %v299
      %v448 = vpop.f32.mrf.mxu0
      %v449 = vadd.f32 %v228, %v448
      %v450 = vpop.f32.mrf.mxu0
      %v451 = vpop.f32.mrf.mxu0
      %v452 = vadd.f32 %v228, %v451
      %v453 = vpop.f32.mrf.mxu0
      %454 = vmatprep.mubr.bf16.mxu0 0
      %455 = vmatmul.mubr.bf16.gmra.mxu0 %v300
      %v456 = vpop.f32.mrf.mxu0
      %v457 = vadd.f32 %v228, %v456
      %v458 = vpop.f32.mrf.mxu0
      %v459 = vpop.f32.mrf.mxu0
      %v460 = vadd.f32 %v228, %v459
      %v461 = vpop.f32.mrf.mxu0
      %462 = vmatprep.mubr.bf16.mxu0 0
      %463 = vmatmul.mubr.bf16.gmra.mxu0 %v301
      %v464 = vpop.f32.mrf.mxu0
      %v465 = vadd.f32 %v228, %v464
      %v466 = vpop.f32.mrf.mxu0
      %v467 = vpop.f32.mrf.mxu0
      %v468 = vadd.f32 %v228, %v467
      %v469 = vpop.f32.mrf.mxu0
      %470 = vmatprep.mubr.bf16.mxu0 0
      %471 = vmatmul.mubr.bf16.gmra.mxu0 %v302
      %v472 = vpop.f32.mrf.mxu0
      %v473 = vadd.f32 %v228, %v472
      %v474 = vpop.f32.mrf.mxu0
      %v475 = vpop.f32.mrf.mxu0
      %v476 = vadd.f32 %v228, %v475
      %v477 = vpop.f32.mrf.mxu0
      %478 = vmatprep.mubr.bf16.mxu0 0
      %479 = vmatmul.mubr.bf16.gmra.mxu0 %v303
      %v480 = vpop.f32.mrf.mxu0
      %v481 = vadd.f32 %v228, %v480
      %v482 = vpop.f32.mrf.mxu0
      %v483 = vpop.f32.mrf.mxu0
      %v484 = vadd.f32 %v228, %v483
      %v485 = vpop.f32.mrf.mxu0
      %486 = vmatprep.mubr.bf16.mxu0 0
      %487 = vmatmul.mubr.bf16.gmra.mxu0 %v304
      %v488 = vpop.f32.mrf.mxu0
      %v489 = vadd.f32 %v228, %v488
      %v490 = vpop.f32.mrf.mxu0
      %v491 = vpop.f32.mrf.mxu0
      %v492 = vadd.f32 %v228, %v491
      %v493 = vpop.f32.mrf.mxu0
      %494 = vmatprep.mubr.bf16.mxu0 0
      %495 = vmatmul.mubr.bf16.gmra.mxu0 %v305
      %v496 = vpop.f32.mrf.mxu0
      %v497 = vadd.f32 %v228, %v496
      %v498 = vpop.f32.mrf.mxu0
      %v499 = vpop.f32.mrf.mxu0
      %v500 = vadd.f32 %v228, %v499
      %v501 = vpop.f32.mrf.mxu0
      %502 = vmatprep.mubr.bf16.mxu0 0
      %503 = vmatmul.mubr.bf16.gmra.mxu0 %v306
      %v504 = vpop.f32.mrf.mxu0
      %v505 = vadd.f32 %v228, %v504
      %v506 = vpop.f32.mrf.mxu0
      %v507 = vpop.f32.mrf.mxu0
      %v508 = vadd.f32 %v228, %v507
      %v509 = vpop.f32.mrf.mxu0
      %510 = vmatprep.mubr.bf16.mxu0 0
      %511 = vmatmul.mubr.bf16.gmra.mxu0 %v307
      %v512 = vpop.f32.mrf.mxu0
      %v513 = vadd.f32 %v228, %v512
      %v514 = vpop.f32.mrf.mxu0
      %v515 = vpop.f32.mrf.mxu0
      %v516 = vadd.f32 %v228, %v515
      %v517 = vpop.f32.mrf.mxu0
      %518 = vmatprep.mubr.bf16.mxu0 0
      %519 = vmatmul.mubr.bf16.gmra.mxu0 %v308
      %v520 = vpop.f32.mrf.mxu0
      %v521 = vadd.f32 %v228, %v520
      %v522 = vpop.f32.mrf.mxu0
      %v523 = vpop.f32.mrf.mxu0
      %v524 = vadd.f32 %v228, %v523
      %v525 = vpop.f32.mrf.mxu0
      %526 = vmatprep.mubr.bf16.mxu0 0
      %527 = vmatmul.mubr.bf16.gmra.mxu0 %v309
      %v528 = vpop.f32.mrf.mxu0
      %v529 = vadd.f32 %v228, %v528
      %v530 = vpop.f32.mrf.mxu0
      %v531 = vpop.f32.mrf.mxu0
      %v532 = vadd.f32 %v228, %v531
      %v533 = vpop.f32.mrf.mxu0
      %534 = vdwg.mxu0
      %v535 = vmax.f32 %v409, 0.0
      %v536 = vmax.f32 %v412, 0.0
      %v537 = vmax.f32 %v417, 0.0
      %v538 = vmax.f32 %v420, 0.0
      %v539 = vmax.f32 %v425, 0.0
      %v540 = vmax.f32 %v428, 0.0
      %v541 = vmax.f32 %v433, 0.0
      %v542 = vmax.f32 %v436, 0.0
      %v543 = vmax.f32 %v441, 0.0
      %v544 = vmax.f32 %v444, 0.0
      %v545 = vmax.f32 %v449, 0.0
      %v546 = vmax.f32 %v452, 0.0
      %v547 = vmax.f32 %v457, 0.0
      %v548 = vmax.f32 %v460, 0.0
      %v549 = vmax.f32 %v465, 0.0
      %v550 = vmax.f32 %v468, 0.0
      %v551 = vmax.f32 %v473, 0.0
      %v552 = vmax.f32 %v476, 0.0
      %v553 = vmax.f32 %v481, 0.0
      %v554 = vmax.f32 %v484, 0.0
      %v555 = vmax.f32 %v489, 0.0
      %v556 = vmax.f32 %v492, 0.0
      %v557 = vmax.f32 %v497, 0.0
      %v558 = vmax.f32 %v500, 0.0
      %v559 = vmax.f32 %v505, 0.0
      %v560 = vmax.f32 %v508, 0.0
      %v561 = vmax.f32 %v513, 0.0
      %v562 = vmax.f32 %v516, 0.0
      %v563 = vmax.f32 %v521, 0.0
      %v564 = vmax.f32 %v524, 0.0
      %v565 = vmax.f32 %v529, 0.0
      %v566 = vmax.f32 %v532, 0.0
      %v567 = vpack.c.bf16 %v536, %v535
      %v568 = vpack.c.bf16 %v538, %v537
      %v569 = vpack.c.bf16 %v540, %v539
      %v570 = vpack.c.bf16 %v542, %v541
      %v571 = vpack.c.bf16 %v544, %v543
      %v572 = vpack.c.bf16 %v546, %v545
      %v573 = vpack.c.bf16 %v548, %v547
      %v574 = vpack.c.bf16 %v550, %v549
      %v575 = vpack.c.bf16 %v552, %v551
      %v576 = vpack.c.bf16 %v554, %v553
      %v577 = vpack.c.bf16 %v556, %v555
      %v578 = vpack.c.bf16 %v558, %v557
      %v579 = vpack.c.bf16 %v560, %v559
      %v580 = vpack.c.bf16 %v562, %v561
      %v581 = vpack.c.bf16 %v564, %v563
      %v582 = vpack.c.bf16 %v566, %v565
      %v599 = vunpack.c.l.b16 %v567
      %v600 = vunpack.c.h.b16 %v567
      %v601 = vunpack.c.l.b16 %v568
      %v602 = vunpack.c.h.b16 %v568
      %v603 = vunpack.c.l.b16 %v569
      %v604 = vunpack.c.h.b16 %v569
      %v605 = vunpack.c.l.b16 %v570
      %v606 = vunpack.c.h.b16 %v570
      %v607 = vunpack.c.l.b16 %v571
      %v608 = vunpack.c.h.b16 %v571
      %v609 = vunpack.c.l.b16 %v572
      %v610 = vunpack.c.h.b16 %v572
      %v611 = vunpack.c.l.b16 %v573
      %v612 = vunpack.c.h.b16 %v573
      %v613 = vunpack.c.l.b16 %v574
      %v614 = vunpack.c.h.b16 %v574
      %v615 = vunpack.c.l.b16 %v575
      %v616 = vunpack.c.h.b16 %v575
      %v617 = vunpack.c.l.b16 %v576
      %v618 = vunpack.c.h.b16 %v576
      %v619 = vunpack.c.l.b16 %v577
      %v620 = vunpack.c.h.b16 %v577
      %v621 = vunpack.c.l.b16 %v578
      %v622 = vunpack.c.h.b16 %v578
      %v623 = vunpack.c.l.b16 %v579
      %v624 = vunpack.c.h.b16 %v579
      %v625 = vunpack.c.l.b16 %v580
      %v626 = vunpack.c.h.b16 %v580
      %v627 = vunpack.c.l.b16 %v581
      %v628 = vunpack.c.h.b16 %v581
      %v629 = vunpack.c.l.b16 %v582
      %v630 = vunpack.c.h.b16 %v582
      %v631 = vpack.c.b16 %v599, %v599
      %v632 = vpack.c.b16 %v600, %v600
      %v633 = vpack.c.b16 %v601, %v601
      %v634 = vpack.c.b16 %v602, %v602
      %v635 = vpack.c.b16 %v603, %v603
      %v636 = vpack.c.b16 %v604, %v604
      %v637 = vpack.c.b16 %v605, %v605
      %v638 = vpack.c.b16 %v606, %v606
      %v639 = vpack.c.b16 %v607, %v607
      %v640 = vpack.c.b16 %v608, %v608
      %v641 = vpack.c.b16 %v609, %v609
      %v642 = vpack.c.b16 %v610, %v610
      %v643 = vpack.c.b16 %v611, %v611
      %v644 = vpack.c.b16 %v612, %v612
      %v645 = vpack.c.b16 %v613, %v613
      %v646 = vpack.c.b16 %v614, %v614
      %v647 = vpack.c.b16 %v615, %v615
      %v648 = vpack.c.b16 %v616, %v616
      %v649 = vpack.c.b16 %v617, %v617
      %v650 = vpack.c.b16 %v618, %v618
      %v651 = vpack.c.b16 %v619, %v619
      %v652 = vpack.c.b16 %v620, %v620
      %v653 = vpack.c.b16 %v621, %v621
      %v654 = vpack.c.b16 %v622, %v622
      %v655 = vpack.c.b16 %v623, %v623
      %v656 = vpack.c.b16 %v624, %v624
      %v657 = vpack.c.b16 %v625, %v625
      %v658 = vpack.c.b16 %v626, %v626
      %v659 = vpack.c.b16 %v627, %v627
      %v660 = vpack.c.b16 %v628, %v628
      %v661 = vpack.c.b16 %v629, %v629
      %v662 = vpack.c.b16 %v630, %v630
      %695 = vst [vmem:[%s172] sm:$0xf] %v631
      %696 = vst [vmem:[%s172 + $0x4] sm:$0xf] %v632
      %697 = vst [vmem:[%s172 + $0x8] sm:$0xf] %v633
      %698 = vst [vmem:[%s172 + $0xc] sm:$0xf] %v634
      %699 = vst [vmem:[%s172 + $0x10] sm:$0xf] %v635
      %700 = vst [vmem:[%s172 + $0x14] sm:$0xf] %v636
      %701 = vst [vmem:[%s172 + $0x18] sm:$0xf] %v637
      %702 = vst [vmem:[%s172 + $0x1c] sm:$0xf] %v638
      %703 = vst [vmem:[%s172 + $0x20] sm:$0xf] %v639
      %704 = vst [vmem:[%s172 + $0x24] sm:$0xf] %v640
      %705 = vst [vmem:[%s172 + $0x28] sm:$0xf] %v641
      %706 = vst [vmem:[%s172 + $0x2c] sm:$0xf] %v642
      %707 = vst [vmem:[%s172 + $0x30] sm:$0xf] %v643
      %708 = vst [vmem:[%s172 + $0x34] sm:$0xf] %v644
      %709 = vst [vmem:[%s172 + $0x38] sm:$0xf] %v645
      %710 = vst [vmem:[%s172 + $0x3c] sm:$0xf] %v646
      %711 = vst [vmem:[%s172 + $0x40] sm:$0xf] %v647
      %712 = vst [vmem:[%s172 + $0x44] sm:$0xf] %v648
      %713 = vst [vmem:[%s172 + $0x48] sm:$0xf] %v649
      %714 = vst [vmem:[%s172 + $0x4c] sm:$0xf] %v650
      %715 = vst [vmem:[%s172 + $0x50] sm:$0xf] %v651
      %716 = vst [vmem:[%s172 + $0x54] sm:$0xf] %v652
      %717 = vst [vmem:[%s172 + $0x58] sm:$0xf] %v653
      %718 = vst [vmem:[%s172 + $0x5c] sm:$0xf] %v654
      %719 = vst [vmem:[%s172 + $0x60] sm:$0xf] %v655
      %720 = vst [vmem:[%s172 + $0x64] sm:$0xf] %v656
      %721 = vst [vmem:[%s172 + $0x68] sm:$0xf] %v657
      %722 = vst [vmem:[%s172 + $0x6c] sm:$0xf] %v658
      %723 = vst [vmem:[%s172 + $0x70] sm:$0xf] %v659
      %724 = vst [vmem:[%s172 + $0x74] sm:$0xf] %v660
      %725 = vst [vmem:[%s172 + $0x78] sm:$0xf] %v661
      %726 = vst [vmem:[%s172 + $0x7c] sm:$0xf] %v662
      %s727 = smul.u32 32, %s14
      %p728 = scmp.lt.s32.totalorder %s727, 63
      %s729 = scalar_select %p728, %s727, 63
      %s730 = smul.addr %s729, 4
      %s731 = scalar_lea.vmem %s3, %s730
      // Predicated region
      $region33: #{bottleneck_forward.3} parent=31 // pred_check
        %p732 = pneg %p100
      $region34: #{bottleneck_forward.3} parent=31 // pred_check_branch
        %734 = sbr.rel (%p732) target = $region36
      $region35: #{bottleneck_forward.3} parent=31 // pred_region
        %s735 = smul.u32 32, %s14
      $region36: #{bottleneck_forward.3} parent=31 // pred_fallthru
        _
    $region32: #{bottleneck_forward.3} parent=5 // pred_fallthru
      _
    %p736 = scmp.le.s32.totalorder 2, %s9
    // Predicated region
    $region37: #{bottleneck_forward.3} parent=5 // pred_check
      %p737 = pneg %p736
    $region38: #{bottleneck_forward.3} parent=5 // pred_check_branch
      %739 = sbr.rel (%p737) target = $region40
    $region39: #{bottleneck_forward.3} parent=5 // pred_region
      %s740 = ssub.s32 %s9, 2
      // Predicated region
      $region41: #{bottleneck_forward.3} parent=39 // pred_check
        %p741 = pneg %p106
      $region42: #{bottleneck_forward.3} parent=39 // pred_check_branch
        %743 = sbr.rel (%p741) target = $region44
      $region43: #{bottleneck_forward.3} parent=39 // pred_region
        %s744 = smul.u32 32, %s15
        %p745 = scmp.lt.s32.totalorder %s744, 63
        %s746 = scalar_select %p745, %s744, 63
        %s747 = smul.addr %s746, 4
        %s748 = scalar_lea.vmem %s3, %s747
      $region44: #{bottleneck_forward.3} parent=39 // pred_fallthru
        _
    $region40: #{bottleneck_forward.3} parent=5 // pred_fallthru
      _
  $region6: #{bottleneck_forward.3} parent=0 // loop_footer
    %s13 = sadd.s32 1, %s9
  $region7: #{bottleneck_forward.3} parent=0 // loop_footer_branch
    %8 = sbr.rel target = $region3
  $region8: #{bottleneck_forward.3} parent=0 // loop_exit
    _

// kernel: bottleneck_forward.4
$region0: #{bottleneck_forward.4}
  #allocation0 [shape = 'u32[]', space=smem, size = 0x4, offset = 0x4, fixed_abs, tag = 'smem constant byte address 0x4 - core index']
  #allocation1 [shape = 'u32[144,128]{1,0:T(1,128)}', space=vmem, size = 0x12000, scoped, tag = 'internal scratch']
  %s0 = inlined_call_operand.vmem [shape: bf16[2,9,2,9,256], index: 0, kind: input, shape index: {}, may-alias: {0,1,2}]
  %s1 = inlined_call_operand.vmem [shape: bf16[2,9,2,9,256], index: 1, kind: input, shape index: {}, may-alias: {0,1,2}]
  %s2 = inlined_call_operand.vmem [shape: bf16[2,9,2,9,256], index: 2, kind: input, shape index: {}, may-alias: {0,1,2}]
  %s3 = inlined_call_operand.vmem [shape: bf16[1152,128], index: 3, kind: input, shape index: {}]
  %s4 = inlined_call_operand.vmem [shape: f32[1,128], index: 4, kind: input, shape index: {}]
  %s5 = inlined_call_operand.vmem [shape: bf16[2,8,8,128], index: 5, kind: output, shape index: {}]
  %s6 = sld [smem:[#allocation0]]
  $region157: #{bottleneck_forward.4} parent=0
    _
  %s8 = ssub.s32 1, %s6
  %s9 = scalar_select 0, %s8, %s6
  $region1: #{bottleneck_forward.4} parent=0
    #allocation2 [shape = 'u8[131072]{0}', space=vmem, size = 0x20000, scoped, tag = 'input window, operand 0']
    #allocation3 [shape = 'u8[131072]{0}', space=vmem, size = 0x20000, scoped, tag = 'input window, operand 1']
    loop: start=0, step=1, limit=4
    $region2: #{bottleneck_forward.4} parent=1 // loop_pre_header
      _
    $region3: #{bottleneck_forward.4} parent=1 // loop_header
      %s11 = sphi 0, %s15
      %p12 = scmp.ge.s32.totalorder %s11, 4
      %s18 = sphi 0, %s30
      %s19 = sphi 0, %s26
      %s20 = sphi 0, %s18
      %s21 = sphi 0, %s19
      %s22 = sphi 0, %s20
      %s23 = sphi 0, %s21
      %s35 = sphi 0, %s37
      %s38 = sphi 0, %s35
      %s39 = sphi 0, %s38
      %s55 = sphi 0, %s39
      %s63 = sphi 0, %s65
      %s66 = sphi 0, %s63
      %s67 = sphi 0, %s66
      %s83 = sphi 0, %s67
      %s95 = sphi 0, %s97
      %s98 = sphi 0, %s95
      %s99 = sphi 0, %s98
      %s115 = sphi 0, %s99
      %s119 = sphi 0, %s119
      %s121 = sphi 0, %s119
      %s122 = sphi 0, %s121
      %s136 = sphi 0, %s122
      %s140 = sphi 0, %s140
      %s142 = sphi 0, %s140
      %s143 = sphi 0, %s142
      %s157 = sphi 0, %s143
      %s165 = sphi 0, %s167
      %s168 = sphi 0, %s165
      %s169 = sphi 0, %s168
      %s185 = sphi 0, %s169
    $region4: #{bottleneck_forward.4} parent=1 // loop_header_branch
      %14 = sbr.rel (%p12) target = $region8
    $region5: #{bottleneck_forward.4} parent=1 // loop_body
      %s16 = ssub.s32 %s11, 1
      %s17 = ssub.s32 %s11, 2
      %s24 = sadd.s32 1, %s19
      %p25 = scmp.ge.s32.totalorder %s24, 1
      %s26 = scalar_select %p25, 0, %s24
      %s27 = sadd.s32 1, %s18
      %s28 = scalar_select %p25, %s27, %s18
      %p29 = scmp.ge.s32.totalorder %s28, 2
      %s30 = scalar_select %p29, 0, %s28
      %s31 = ssub.s32 %s18, %s30
      %s32 = ssub.s32 %s19, %s26
      %s33 = sor.u32 %s31, %s32
      %p34 = scmp.eq.s32.totalorder %s33, 0
      %s36 = sadd.s32 %s35, 1
      %s37 = scalar_select %p34, %s35, %s36
      %p40 = pneg %p34
      %p41 = scmp.eq.s32.totalorder %s11, 1
      %p42 = por %p40, %p41
      %p43 = scmp.ne.s32.totalorder %s35, %s38
      %p44 = scmp.eq.s32.totalorder %s11, 0
      %p45 = por %p43, %p44
      %p46 = scmp.ne.s32.totalorder %s35, %s38
      %p47 = scmp.eq.s32.totalorder %s16, 1
      %p48 = por %p46, %p47
      %p49 = scmp.ne.s32.totalorder %s38, %s39
      %p50 = scmp.eq.s32.totalorder %s16, 0
      %p51 = por %p49, %p50
      %p52 = scmp.ne.s32.totalorder %s38, %s39
      %p53 = scmp.eq.s32.totalorder %s17, 1
      %p54 = por %p52, %p53
      %p56 = scmp.ne.s32.totalorder %s39, %s55
      %p57 = scmp.eq.s32.totalorder %s17, 0
      %p58 = por %p56, %p57
      %s59 = ssub.s32 %s18, %s30
      %s60 = ssub.s32 %s19, %s26
      %s61 = sor.u32 %s59, %s60
      %p62 = scmp.eq.s32.totalorder %s61, 0
      %s64 = sadd.s32 %s63, 1
      %s65 = scalar_select %p62, %s63, %s64
      %p68 = pneg %p62
      %p69 = scmp.eq.s32.totalorder %s11, 1
      %p70 = por %p68, %p69
      %p71 = scmp.ne.s32.totalorder %s63, %s66
      %p72 = scmp.eq.s32.totalorder %s11, 0
      %p73 = por %p71, %p72
      %p74 = scmp.ne.s32.totalorder %s63, %s66
      %p75 = scmp.eq.s32.totalorder %s16, 1
      %p76 = por %p74, %p75
      %p77 = scmp.ne.s32.totalorder %s66, %s67
      %p78 = scmp.eq.s32.totalorder %s16, 0
      %p79 = por %p77, %p78
      %p80 = scmp.ne.s32.totalorder %s66, %s67
      %p81 = scmp.eq.s32.totalorder %s17, 1
      %p82 = por %p80, %p81
      %p84 = scmp.ne.s32.totalorder %s67, %s83
      %p85 = scmp.eq.s32.totalorder %s17, 0
      %p86 = por %p84, %p85
      %s87 = sadd.s32 %s19, 1
      %s88 = smul.u32 %s87, 8
      %s89 = sadd.s32 %s26, 1
      %s90 = smul.u32 %s89, 8
      %s91 = ssub.s32 %s18, %s30
      %s92 = ssub.s32 %s88, %s90
      %s93 = sor.u32 %s91, %s92
      %p94 = scmp.eq.s32.totalorder %s93, 0
      %s96 = sadd.s32 %s95, 1
      %s97 = scalar_select %p94, %s95, %s96
      %p100 = pneg %p94
      %p101 = scmp.eq.s32.totalorder %s11, 1
      %p102 = por %p100, %p101
      %p103 = scmp.ne.s32.totalorder %s95, %s98
      %p104 = scmp.eq.s32.totalorder %s11, 0
      %p105 = por %p103, %p104
      %p106 = scmp.ne.s32.totalorder %s95, %s98
      %p107 = scmp.eq.s32.totalorder %s16, 1
      %p108 = por %p106, %p107
      %p109 = scmp.ne.s32.totalorder %s98, %s99
      %p110 = scmp.eq.s32.totalorder %s16, 0
      %p111 = por %p109, %p110
      %p112 = scmp.ne.s32.totalorder %s98, %s99
      %p113 = scmp.eq.s32.totalorder %s17, 1
      %p114 = por %p112, %p113
      %p116 = scmp.ne.s32.totalorder %s99, %s115
      %p117 = scmp.eq.s32.totalorder %s17, 0
      %p118 = por %p116, %p117
      %s120 = sadd.s32 %s119, 1
      %p123 = scmp.eq.s32.totalorder %s11, 1
      %p124 = scmp.ne.s32.totalorder %s119, %s121
      %p125 = scmp.eq.s32.totalorder %s11, 0
      %p126 = por %p124, %p125
      %p127 = scmp.ne.s32.totalorder %s119, %s121
      %p128 = scmp.eq.s32.totalorder %s16, 1
      %p129 = por %p127, %p128
      %p130 = scmp.ne.s32.totalorder %s121, %s122
      %p131 = scmp.eq.s32.totalorder %s16, 0
      %p132 = por %p130, %p131
      %p133 = scmp.ne.s32.totalorder %s121, %s122
      %p134 = scmp.eq.s32.totalorder %s17, 1
      %p135 = por %p133, %p134
      %p137 = scmp.ne.s32.totalorder %s122, %s136
      %p138 = scmp.eq.s32.totalorder %s17, 0
      %p139 = por %p137, %p138
      %s141 = sadd.s32 %s140, 1
      %p144 = scmp.eq.s32.totalorder %s11, 1
      %p145 = scmp.ne.s32.totalorder %s140, %s142
      %p146 = scmp.eq.s32.totalorder %s11, 0
      %p147 = por %p145, %p146
      %p148 = scmp.ne.s32.totalorder %s140, %s142
      %p149 = scmp.eq.s32.totalorder %s16, 1
      %p150 = por %p148, %p149
      %p151 = scmp.ne.s32.totalorder %s142, %s143
      %p152 = scmp.eq.s32.totalorder %s16, 0
      %p153 = por %p151, %p152
      %p154 = scmp.ne.s32.totalorder %s142, %s143
      %p155 = scmp.eq.s32.totalorder %s17, 1
      %p156 = por %p154, %p155
      %p158 = scmp.ne.s32.totalorder %s143, %s157
      %p159 = scmp.eq.s32.totalorder %s17, 0
      %p160 = por %p158, %p159
      %s161 = ssub.s32 %s18, %s30
      %s162 = ssub.s32 %s19, %s26
      %s163 = sor.u32 %s161, %s162
      %p164 = scmp.eq.s32.totalorder %s163, 0
      %s166 = sadd.s32 %s165, 1
      %s167 = scalar_select %p164, %s165, %s166
      %p170 = pneg %p164
      %p171 = scmp.eq.s32.totalorder %s11, 1
      %p172 = por %p170, %p171
      %p173 = scmp.ne.s32.totalorder %s165, %s168
      %p174 = scmp.eq.s32.totalorder %s11, 0
      %p175 = por %p173, %p174
      %p176 = scmp.ne.s32.totalorder %s165, %s168
      %p177 = scmp.eq.s32.totalorder %s16, 1
      %p178 = por %p176, %p177
      %p179 = scmp.ne.s32.totalorder %s168, %s169
      %p180 = scmp.eq.s32.totalorder %s16, 0
      %p181 = por %p179, %p180
      %p182 = scmp.ne.s32.totalorder %s168, %s169
      %p183 = scmp.eq.s32.totalorder %s17, 1
      %p184 = por %p182, %p183
      %p186 = scmp.ne.s32.totalorder %s169, %s185
      %p187 = scmp.eq.s32.totalorder %s17, 0
      %p188 = por %p186, %p187
      %p189 = scmp.le.s32.totalorder 1, %s11
      %p190 = scmp.lt.s32.totalorder %s11, 3
      %p191 = pnand %p189, %p190
      %p192 = pneg %p191
      // Predicated region
      $region9: #{bottleneck_forward.4} parent=5 // pred_check
        _
      $region10: #{bottleneck_forward.4} parent=5 // pred_check_branch
        %194 = sbr.rel (%p191) target = $region12
      $region11: #{bottleneck_forward.4} parent=5 // pred_region
        %s195 = ssub.s32 %s11, 1
        // Predicated region
        $region13: #{bottleneck_forward.4} parent=11 // pred_check
          %p196 = pneg %p132
        $region14: #{bottleneck_forward.4} parent=11 // pred_check_branch
          %198 = sbr.rel (%p196) target = $region16
        $region15: #{bottleneck_forward.4} parent=11 // pred_region
          _
        $region16: #{bottleneck_forward.4} parent=11 // pred_fallthru
          _
        // Predicated region
        $region17: #{bottleneck_forward.4} parent=11 // pred_check
          %p199 = pneg %p153
        $region18: #{bottleneck_forward.4} parent=11 // pred_check_branch
          %201 = sbr.rel (%p199) target = $region20
        $region19: #{bottleneck_forward.4} parent=11 // pred_region
          _
        $region20: #{bottleneck_forward.4} parent=11 // pred_fallthru
          _
      $region12: #{bottleneck_forward.4} parent=5 // pred_fallthru
        _
      %p202 = scmp.lt.s32.totalorder %s11, 2
      // Predicated region
      $region21: #{bottleneck_forward.4} parent=5 // pred_check
        %p203 = pneg %p202
      $region22: #{bottleneck_forward.4} parent=5 // pred_check_branch
        %205 = sbr.rel (%p203) target = $region24
      $region23: #{bottleneck_forward.4} parent=5 // pred_region
        // Predicated region
        $region25: #{bottleneck_forward.4} parent=23 // pred_check
          %p206 = pneg %p45
        $region26: #{bottleneck_forward.4} parent=23 // pred_check_branch
          %208 = sbr.rel (%p206) target = $region28
        $region27: #{bottleneck_forward.4} parent=23 // pred_region
          %s209 = sand.u32 %s35, 1
          %s210 = sand.u32 %s35, 1
          %s211 = smul.addr %s210, 128
          %s212 = scalar_lea.vmem [#allocation2], %s211
          %s213 = smul.u32 8, %s19
          %s214 = ssub.s32 9, %s213
          %p215 = scmp.lt.s32.totalorder %s214, 8
          %s216 = scalar_select %p215, %s214, 8
          %s217 = smul.u32 64, %s216
          %s218 = smul.u32 %s217, 2
          %s219 = smul.u32 %s218, 2
          %p220 = scmp.ne.s32.totalorder 0, %s219
          %s221 = smul.addr %s213, 8
          %s222 = smul.addr %s18, 72
          %s223 = sadd.s32 %s221, %s222
          %s224 = smul.addr %s223, 4
          %s225 = scalar_lea.vmem %s0, %s224
          // Predicated region
          $region29: #{bottleneck_forward.4} parent=27 // pred_check
            %p226 = pneg %p220
          $region30: #{bottleneck_forward.4} parent=27 // pred_check_branch
            %228 = sbr.rel (%p226) target = $region32
          $region31: #{bottleneck_forward.4} parent=27 // pred_region
            // Predicated region
            $region33: #{bottleneck_forward.4} parent=31 // pred_check
              _
            $region34: #{bottleneck_forward.4} parent=31 // pred_check_branch
              %230 = sbr.rel (0) target = $region36
            $region35: #{bottleneck_forward.4} parent=31 // pred_region
              // Predicated region
              $region55: #{bottleneck_forward.4} parent=35 // pred_check
                _
              $region56: #{bottleneck_forward.4} parent=35 // pred_check_branch
                %312 = sbr.rel (0) target = $region58
              $region57: #{bottleneck_forward.4} parent=35 // pred_region
                %s313 = sshrl.u32 %s216, 3
                // While loop
                $region59: #{bottleneck_forward.4} parent=57 // loop_pre_header
                  _
                $region60: #{bottleneck_forward.4} parent=57 // loop_header
                  %s315 = sphi 0, %s317
                  %p316 = scmp.ge.s32.totalorder %s315, %s313
                  %s320 = sphi 0, %s357
                  %s321 = sphi %s225, %s360
                  %s322 = sphi %s212, %s361
                $region61: #{bottleneck_forward.4} parent=57 // loop_header_branch
                  %319 = sbr.rel (%p316) target = $region65
                $region62: #{bottleneck_forward.4} parent=57 // loop_body
                  %v323 = vld [vmem:[%s321] sm:$0xff]
                  %324 = vst [vmem:[%s322] sm:$0xff] %v323
                  %v325 = vld [vmem:[%s321 + $0x20] sm:$0xff]
                  %326 = vst [vmem:[%s322 + $0x10] sm:$0xff] %v325
                  %v327 = vld [vmem:[%s321 + $0x40] sm:$0xff]
                  %328 = vst [vmem:[%s322 + $0x20] sm:$0xff] %v327
                  %v329 = vld [vmem:[%s321 + $0x60] sm:$0xff]
                  %330 = vst [vmem:[%s322 + $0x30] sm:$0xff] %v329
                  %v331 = vld [vmem:[%s321 + $0x80] sm:$0xff]
                  %332 = vst [vmem:[%s322 + $0x40] sm:$0xff] %v331
                  %v333 = vld [vmem:[%s321 + $0xa0] sm:$0xff]
                  %334 = vst [vmem:[%s322 + $0x50] sm:$0xff] %v333
                  %v335 = vld [vmem:[%s321 + $0xc0] sm:$0xff]
                  %336 = vst [vmem:[%s322 + $0x60] sm:$0xff] %v335
                  %v337 = vld [vmem:[%s321 + $0xe0] sm:$0xff]
                  %338 = vst [vmem:[%s322 + $0x70] sm:$0xff] %v337
                  %v339 = vld [vmem:[%s321 + $0x8] sm:$0xff]
                  %340 = vst [vmem:[%s322 + $0x8] sm:$0xff] %v339
                  %v341 = vld [vmem:[%s321 + $0x28] sm:$0xff]
                  %342 = vst [vmem:[%s322 + $0x18] sm:$0xff] %v341
                  %v343 = vld [vmem:[%s321 + $0x48] sm:$0xff]
                  %344 = vst [vmem:[%s322 + $0x28] sm:$0xff] %v343
                  %v345 = vld [vmem:[%s321 + $0x68] sm:$0xff]
                  %346 = vst [vmem:[%s322 + $0x38] sm:$0xff] %v345
                  %v347 = vld [vmem:[%s321 + $0x88] sm:$0xff]
                  %348 = vst [vmem:[%s322 + $0x48] sm:$0xff] %v347
                  %v349 = vld [vmem:[%s321 + $0xa8] sm:$0xff]
                  %350 = vst [vmem:[%s322 + $0x58] sm:$0xff] %v349
                  %v351 = vld [vmem:[%s321 + $0xc8] sm:$0xff]
                  %352 = vst [vmem:[%s322 + $0x68] sm:$0xff] %v351
                  %v353 = vld [vmem:[%s321 + $0xe8] sm:$0xff]
                  %354 = vst [vmem:[%s322 + $0x78] sm:$0xff] %v353
                  %s355 = sadd.s32 1, %s320
                  %p356 = scmp.ge.s32.totalorder %s355, %s313
                  %s357 = scalar_select %p356, 0, %s355
                  %s358 = smul.u32 %s357, 256
                  %s359 = smul.u32 %s357, 128
                  %s360 = scalar_lea.vmem %s225, %s358
                  %s361 = scalar_lea.vmem %s212, %s359 [#allocation2]
                $region63: #{bottleneck_forward.4} parent=57 // loop_footer
                  %s317 = sadd.s32 %s315, 1
                $region64: #{bottleneck_forward.4} parent=57 // loop_footer_branch
                  %314 = sbr.rel target = $region60
                $region65: #{bottleneck_forward.4} parent=57 // loop_exit
                  _
                %s362 = sshrl.u32 %s216, 3
                %s363 = sand.u32 %s216, 7
                %s364 = smul.u32 %s362, 8
                %s365 = smul.u32 32, %s364
                %s366 = scalar_lea.vmem %s225, %s365
                %s367 = smul.u32 16, %s364
                %s368 = scalar_lea.vmem %s212, %s367 [#allocation2]
                // While loop
                $region66: #{bottleneck_forward.4} parent=57 // loop_pre_header
                  _
                $region67: #{bottleneck_forward.4} parent=57 // loop_header
                  %s370 = sphi 0, %s372
                  %p371 = scmp.ge.s32.totalorder %s370, %s363
                  %s375 = sphi 0, %s384
                  %s376 = sphi %s366, %s387
                  %s377 = sphi %s368, %s388
                $region68: #{bottleneck_forward.4} parent=57 // loop_header_branch
                  %374 = sbr.rel (%p371) target = $region72
                $region69: #{bottleneck_forward.4} parent=57 // loop_body
                  %v378 = vld [vmem:[%s376] sm:$0xff]
                  %379 = vst [vmem:[%s377] sm:$0xff] %v378
                  %v380 = vld [vmem:[%s376 + $0x8] sm:$0xff]
                  %381 = vst [vmem:[%s377 + $0x8] sm:$0xff] %v380
                  %s382 = sadd.s32 1, %s375
                  %p383 = scmp.ge.s32.totalorder %s382, %s363
                  %s384 = scalar_select %p383, 0, %s382
                  %s385 = smul.u32 %s384, 32
                  %s386 = smul.u32 %s384, 16
                  %s387 = scalar_lea.vmem %s366, %s385
                  %s388 = scalar_lea.vmem %s368, %s386 [#allocation2]
                $region70: #{bottleneck_forward.4} parent=57 // loop_footer
                  %s372 = sadd.s32 %s370, 1
                $region71: #{bottleneck_forward.4} parent=57 // loop_footer_branch
                  %369 = sbr.rel target = $region67
                $region72: #{bottleneck_forward.4} parent=57 // loop_exit
                  _
              $region58: #{bottleneck_forward.4} parent=35 // pred_fallthru
                _
              // Predicated region
              $region73: #{bottleneck_forward.4} parent=35 // pred_check
                _
              $region74: #{bottleneck_forward.4} parent=35 // pred_check_branch
                %390 = sbr.rel target = $region76
              $region75: #{bottleneck_forward.4} parent=35 // pred_region
                _
              $region76: #{bottleneck_forward.4} parent=35 // pred_fallthru
                _
            $region36: #{bottleneck_forward.4} parent=31 // pred_fallthru
              _
            // Predicated region
            $region37: #{bottleneck_forward.4} parent=31 // pred_check
              _
            $region38: #{bottleneck_forward.4} parent=31 // pred_check_branch
              %232 = sbr.rel target = $region40
            $region39: #{bottleneck_forward.4} parent=31 // pred_region
              %s234 = ssub.s32 256, 1
              %s235 = sshrl.u32 %s216, 3
              // While loop
              $region41: #{bottleneck_forward.4} parent=39 // loop_pre_header
                _
              $region42: #{bottleneck_forward.4} parent=39 // loop_header
                %s237 = sphi 0, %s239
                %p238 = scmp.ge.s32.totalorder %s237, %s235
                %s242 = sphi 0, %s279
                %s243 = sphi %s225, %s282
                %s244 = sphi %s212, %s283
              $region43: #{bottleneck_forward.4} parent=39 // loop_header_branch
                %241 = sbr.rel (%p238) target = $region47
              $region44: #{bottleneck_forward.4} parent=39 // loop_body
                %v245 = vld [vmem:[%s243] sm:%s234]
                %246 = vst [vmem:[%s244] sm:%s234] %v245
                %v247 = vld [vmem:[%s243 + $0x20] sm:%s234]
                %248 = vst [vmem:[%s244 + $0x10] sm:%s234] %v247
                %v249 = vld [vmem:[%s243 + $0x40] sm:%s234]
                %250 = vst [vmem:[%s244 + $0x20] sm:%s234] %v249
                %v251 = vld [vmem:[%s243 + $0x60] sm:%s234]
                %252 = vst [vmem:[%s244 + $0x30] sm:%s234] %v251
                %v253 = vld [vmem:[%s243 + $0x80] sm:%s234]
                %254 = vst [vmem:[%s244 + $0x40] sm:%s234] %v253
                %v255 = vld [vmem:[%s243 + $0xa0] sm:%s234]
                %256 = vst [vmem:[%s244 + $0x50] sm:%s234] %v255
                %v257 = vld [vmem:[%s243 + $0xc0] sm:%s234]
                %258 = vst [vmem:[%s244 + $0x60] sm:%s234] %v257
                %v259 = vld [vmem:[%s243 + $0xe0] sm:%s234]
                %260 = vst [vmem:[%s244 + $0x70] sm:%s234] %v259
                %v261 = vld [vmem:[%s243 + $0x8] sm:%s234]
                %262 = vst [vmem:[%s244 + $0x8] sm:%s234] %v261
                %v263 = vld [vmem:[%s243 + $0x28] sm:%s234]
                %264 = vst [vmem:[%s244 + $0x18] sm:%s234] %v263
                %v265 = vld [vmem:[%s243 + $0x48] sm:%s234]
                %266 = vst [vmem:[%s244 + $0x28] sm:%s234] %v265
                %v267 = vld [vmem:[%s243 + $0x68] sm:%s234]
                %268 = vst [vmem:[%s244 + $0x38] sm:%s234] %v267
                %v269 = vld [vmem:[%s243 + $0x88] sm:%s234]
                %270 = vst [vmem:[%s244 + $0x48] sm:%s234] %v269
                %v271 = vld [vmem:[%s243 + $0xa8] sm:%s234]
                %272 = vst [vmem:[%s244 + $0x58] sm:%s234] %v271
                %v273 = vld [vmem:[%s243 + $0xc8] sm:%s234]
                %274 = vst [vmem:[%s244 + $0x68] sm:%s234] %v273
                %v275 = vld [vmem:[%s243 + $0xe8] sm:%s234]
                %276 = vst [vmem:[%s244 + $0x78] sm:%s234] %v275
                %s277 = sadd.s32 1, %s242
                %p278 = scmp.ge.s32.totalorder %s277, %s235
                %s279 = scalar_select %p278, 0, %s277
                %s280 = smul.u32 %s279, 256
                %s281 = smul.u32 %s279, 128
                %s282 = scalar_lea.vmem %s225, %s280
                %s283 = scalar_lea.vmem %s212, %s281 [#allocation2]
              $region45: #{bottleneck_forward.4} parent=39 // loop_footer
                %s239 = sadd.s32 %s237, 1
              $region46: #{bottleneck_forward.4} parent=39 // loop_footer_branch
                %236 = sbr.rel target = $region42
              $region47: #{bottleneck_forward.4} parent=39 // loop_exit
                _
              %s284 = sshrl.u32 %s216, 3
              %s285 = sand.u32 %s216, 7
              %s286 = smul.u32 %s284, 8
              %s287 = smul.u32 32, %s286
              %s288 = scalar_lea.vmem %s225, %s287
              %s289 = smul.u32 16, %s286
              %s290 = scalar_lea.vmem %s212, %s289 [#allocation2]
              // While loop
              $region48: #{bottleneck_forward.4} parent=39 // loop_pre_header
                _
              $region49: #{bottleneck_forward.4} parent=39 // loop_header
                %s292 = sphi 0, %s294
                %p293 = scmp.ge.s32.totalorder %s292, %s285
                %s297 = sphi 0, %s306
                %s298 = sphi %s288, %s309
                %s299 = sphi %s290, %s310
              $region50: #{bottleneck_forward.4} parent=39 // loop_header_branch
                %296 = sbr.rel (%p293) target = $region54
              $region51: #{bottleneck_forward.4} parent=39 // loop_body
                %v300 = vld [vmem:[%s298] sm:%s234]
                %301 = vst [vmem:[%s299] sm:%s234] %v300
                %v302 = vld [vmem:[%s298 + $0x8] sm:%s234]
                %303 = vst [vmem:[%s299 + $0x8] sm:%s234] %v302
                %s304 = sadd.s32 1, %s297
                %p305 = scmp.ge.s32.totalorder %s304, %s285
                %s306 = scalar_select %p305, 0, %s304
                %s307 = smul.u32 %s306, 32
                %s308 = smul.u32 %s306, 16
                %s309 = scalar_lea.vmem %s288, %s307
                %s310 = scalar_lea.vmem %s290, %s308 [#allocation2]
              $region52: #{bottleneck_forward.4} parent=39 // loop_footer
                %s294 = sadd.s32 %s292, 1
              $region53: #{bottleneck_forward.4} parent=39 // loop_footer_branch
                %291 = sbr.rel target = $region49
              $region54: #{bottleneck_forward.4} parent=39 // loop_exit
                _
            $region40: #{bottleneck_forward.4} parent=31 // pred_fallthru
              _
          $region32: #{bottleneck_forward.4} parent=27 // pred_fallthru
            _
          %391 = vnop
        $region28: #{bottleneck_forward.4} parent=23 // pred_fallthru
          _
        // Predicated region
        $region77: #{bottleneck_forward.4} parent=23 // pred_check
          %p392 = pneg %p73
        $region78: #{bottleneck_forward.4} parent=23 // pred_check_branch
          %394 = sbr.rel (%p392) target = $region80
        $region79: #{bottleneck_forward.4} parent=23 // pred_region
          %s395 = sand.u32 %s63, 1
          %s396 = sand.u32 %s63, 1
          %s397 = smul.addr %s396, 128
          %s398 = scalar_lea.vmem [#allocation3], %s397
          %s399 = smul.u32 8, %s19
          %s400 = ssub.s32 9, %s399
          %p401 = scmp.lt.s32.totalorder %s400, 8
          %s402 = scalar_select %p401, %s400, 8
          %s403 = smul.u32 64, %s402
          %s404 = smul.u32 %s403, 2
          %s405 = smul.u32 %s404, 2
          %p406 = scmp.ne.s32.totalorder 0, %s405
          %s407 = smul.addr %s399, 8
          %s408 = sadd.s32 4, %s407
          %s409 = smul.addr %s18, 72
          %s410 = sadd.s32 %s408, %s409
          %s411 = smul.addr %s410, 4
          %s412 = scalar_lea.vmem %s1, %s411
          // Predicated region
          $region81: #{bottleneck_forward.4} parent=79 // pred_check
            %p413 = pneg %p406
          $region82: #{bottleneck_forward.4} parent=79 // pred_check_branch
            %415 = sbr.rel (%p413) target = $region84
          $region83: #{bottleneck_forward.4} parent=79 // pred_region
            // Predicated region
            $region85: #{bottleneck_forward.4} parent=83 // pred_check
              _
            $region86: #{bottleneck_forward.4} parent=83 // pred_check_branch
              %417 = sbr.rel (0) target = $region88
            $region87: #{bottleneck_forward.4} parent=83 // pred_region
              // Predicated region
              $region107: #{bottleneck_forward.4} parent=87 // pred_check
                _
              $region108: #{bottleneck_forward.4} parent=87 // pred_check_branch
                %499 = sbr.rel (0) target = $region110
              $region109: #{bottleneck_forward.4} parent=87 // pred_region
                %s500 = sshrl.u32 %s402, 3
                // While loop
                $region111: #{bottleneck_forward.4} parent=109 // loop_pre_header
                  _
                $region112: #{bottleneck_forward.4} parent=109 // loop_header
                  %s502 = sphi 0, %s504
                  %p503 = scmp.ge.s32.totalorder %s502, %s500
                  %s507 = sphi 0, %s544
                  %s508 = sphi %s412, %s547
                  %s509 = sphi %s398, %s548
                $region113: #{bottleneck_forward.4} parent=109 // loop_header_branch
                  %506 = sbr.rel (%p503) target = $region117
                $region114: #{bottleneck_forward.4} parent=109 // loop_body
                  %v510 = vld [vmem:[%s508] sm:$0xff]
                  %511 = vst [vmem:[%s509] sm:$0xff] %v510
                  %v512 = vld [vmem:[%s508 + $0x20] sm:$0xff]
                  %513 = vst [vmem:[%s509 + $0x10] sm:$0xff] %v512
                  %v514 = vld [vmem:[%s508 + $0x40] sm:$0xff]
                  %515 = vst [vmem:[%s509 + $0x20] sm:$0xff] %v514
                  %v516 = vld [vmem:[%s508 + $0x60] sm:$0xff]
                  %517 = vst [vmem:[%s509 + $0x30] sm:$0xff] %v516
                  %v518 = vld [vmem:[%s508 + $0x80] sm:$0xff]
                  %519 = vst [vmem:[%s509 + $0x40] sm:$0xff] %v518
                  %v520 = vld [vmem:[%s508 + $0xa0] sm:$0xff]
                  %521 = vst [vmem:[%s509 + $0x50] sm:$0xff] %v520
                  %v522 = vld [vmem:[%s508 + $0xc0] sm:$0xff]
                  %523 = vst [vmem:[%s509 + $0x60] sm:$0xff] %v522
                  %v524 = vld [vmem:[%s508 + $0xe0] sm:$0xff]
                  %525 = vst [vmem:[%s509 + $0x70] sm:$0xff] %v524
                  %v526 = vld [vmem:[%s508 + $0x8] sm:$0xff]
                  %527 = vst [vmem:[%s509 + $0x8] sm:$0xff] %v526
                  %v528 = vld [vmem:[%s508 + $0x28] sm:$0xff]
                  %529 = vst [vmem:[%s509 + $0x18] sm:$0xff] %v528
                  %v530 = vld [vmem:[%s508 + $0x48] sm:$0xff]
                  %531 = vst [vmem:[%s509 + $0x28] sm:$0xff] %v530
                  %v532 = vld [vmem:[%s508 + $0x68] sm:$0xff]
                  %533 = vst [vmem:[%s509 + $0x38] sm:$0xff] %v532
                  %v534 = vld [vmem:[%s508 + $0x88] sm:$0xff]
                  %535 = vst [vmem:[%s509 + $0x48] sm:$0xff] %v534
                  %v536 = vld [vmem:[%s508 + $0xa8] sm:$0xff]
                  %537 = vst [vmem:[%s509 + $0x58] sm:$0xff] %v536
                  %v538 = vld [vmem:[%s508 + $0xc8] sm:$0xff]
                  %539 = vst [vmem:[%s509 + $0x68] sm:$0xff] %v538
                  %v540 = vld [vmem:[%s508 + $0xe8] sm:$0xff]
                  %541 = vst [vmem:[%s509 + $0x78] sm:$0xff] %v540
                  %s542 = sadd.s32 1, %s507
                  %p543 = scmp.ge.s32.totalorder %s542, %s500
                  %s544 = scalar_select %p543, 0, %s542
                  %s545 = smul.u32 %s544, 256
                  %s546 = smul.u32 %s544, 128
                  %s547 = scalar_lea.vmem %s412, %s545
                  %s548 = scalar_lea.vmem %s398, %s546 [#allocation3]
                $region115: #{bottleneck_forward.4} parent=109 // loop_footer
                  %s504 = sadd.s32 %s502, 1
                $region116: #{bottleneck_forward.4} parent=109 // loop_footer_branch
                  %501 = sbr.rel target = $region112
                $region117: #{bottleneck_forward.4} parent=109 // loop_exit
                  _
                %s549 = sshrl.u32 %s402, 3
                %s550 = sand.u32 %s402, 7
                %s551 = smul.u32 %s549, 8
                %s552 = smul.u32 32, %s551
                %s553 = scalar_lea.vmem %s412, %s552
                %s554 = smul.u32 16, %s551
                %s555 = scalar_lea.vmem %s398, %s554 [#allocation3]
                // While loop
                $region118: #{bottleneck_forward.4} parent=109 // loop_pre_header
                  _
                $region119: #{bottleneck_forward.4} parent=109 // loop_header
                  %s557 = sphi 0, %s559
                  %p558 = scmp.ge.s32.totalorder %s557, %s550
                  %s562 = sphi 0, %s571
                  %s563 = sphi %s553, %s574
                  %s564 = sphi %s555, %s575
                $region120: #{bottleneck_forward.4} parent=109 // loop_header_branch
                  %561 = sbr.rel (%p558) target = $region124
                $region121: #{bottleneck_forward.4} parent=109 // loop_body
                  %v565 = vld [vmem:[%s563] sm:$0xff]
                  %566 = vst [vmem:[%s564] sm:$0xff] %v565
                  %v567 = vld [vmem:[%s563 + $0x8] sm:$0xff]
                  %568 = vst [vmem:[%s564 + $0x8] sm:$0xff] %v567
                  %s569 = sadd.s32 1, %s562
                  %p570 = scmp.ge.s32.totalorder %s569, %s550
                  %s571 = scalar_select %p570, 0, %s569
                  %s572 = smul.u32 %s571, 32
                  %s573 = smul.u32 %s571, 16
                  %s574 = scalar_lea.vmem %s553, %s572
                  %s575 = scalar_lea.vmem %s555, %s573 [#allocation3]
                $region122: #{bottleneck_forward.4} parent=109 // loop_footer
                  %s559 = sadd.s32 %s557, 1
                $region123: #{bottleneck_forward.4} parent=109 // loop_footer_branch
                  %556 = sbr.rel target = $region119
                $region124: #{bottleneck_forward.4} parent=109 // loop_exit
                  _
              $region110: #{bottleneck_forward.4} parent=87 // pred_fallthru
                _
              // Predicated region
              $region125: #{bottleneck_forward.4} parent=87 // pred_check
                _
              $region126: #{bottleneck_forward.4} parent=87 // pred_check_branch
                %577 = sbr.rel target = $region128
              $region127: #{bottleneck_forward.4} parent=87 // pred_region
                _
              $region128: #{bottleneck_forward.4} parent=87 // pred_fallthru
                _
            $region88: #{bottleneck_forward.4} parent=83 // pred_fallthru
              _
            // Predicated region
            $region89: #{bottleneck_forward.4} parent=83 // pred_check
              _
            $region90: #{bottleneck_forward.4} parent=83 // pred_check_branch
              %419 = sbr.rel target = $region92
            $region91: #{bottleneck_forward.4} parent=83 // pred_region
              %s421 = ssub.s32 256, 1
              %s422 = sshrl.u32 %s402, 3
              // While loop
              $region93: #{bottleneck_forward.4} parent=91 // loop_pre_header
                _
              $region94: #{bottleneck_forward.4} parent=91 // loop_header
                %s424 = sphi 0, %s426
                %p425 = scmp.ge.s32.totalorder %s424, %s422
                %s429 = sphi 0, %s466
                %s430 = sphi %s412, %s469
                %s431 = sphi %s398, %s470
              $region95: #{bottleneck_forward.4} parent=91 // loop_header_branch
                %428 = sbr.rel (%p425) target = $region99
              $region96: #{bottleneck_forward.4} parent=91 // loop_body
                %v432 = vld [vmem:[%s430] sm:%s421]
                %433 = vst [vmem:[%s431] sm:%s421] %v432
                %v434 = vld [vmem:[%s430 + $0x20] sm:%s421]
                %435 = vst [vmem:[%s431 + $0x10] sm:%s421] %v434
                %v436 = vld [vmem:[%s430 + $0x40] sm:%s421]
                %437 = vst [vmem:[%s431 + $0x20] sm:%s421] %v436
                %v438 = vld [vmem:[%s430 + $0x60] sm:%s421]
                %439 = vst [vmem:[%s431 + $0x30] sm:%s421] %v438
                %v440 = vld [vmem:[%s430 + $0x80] sm:%s421]
                %441 = vst [vmem:[%s431 + $0x40] sm:%s421] %v440
                %v442 = vld [vmem:[%s430 + $0xa0] sm:%s421]
                %443 = vst [vmem:[%s431 + $0x50] sm:%s421] %v442
                %v444 = vld [vmem:[%s430 + $0xc0] sm:%s421]
                %445 = vst [vmem:[%s431 + $0x60] sm:%s421] %v444
                %v446 = vld [vmem:[%s430 + $0xe0] sm:%s421]
                %447 = vst [vmem:[%s431 + $0x70] sm:%s421] %v446
                %v448 = vld [vmem:[%s430 + $0x8] sm:%s421]
                %449 = vst [vmem:[%s431 + $0x8] sm:%s421] %v448
                %v450 = vld [vmem:[%s430 + $0x28] sm:%s421]
                %451 = vst [vmem:[%s431 + $0x18] sm:%s421] %v450
                %v452 = vld [vmem:[%s430 + $0x48] sm:%s421]
                %453 = vst [vmem:[%s431 + $0x28] sm:%s421] %v452
                %v454 = vld [vmem:[%s430 + $0x68] sm:%s421]
                %455 = vst [vmem:[%s431 + $0x38] sm:%s421] %v454
                %v456 = vld [vmem:[%s430 + $0x88] sm:%s421]
                %457 = vst [vmem:[%s431 + $0x48] sm:%s421] %v456
                %v458 = vld [vmem:[%s430 + $0xa8] sm:%s421]
                %459 = vst [vmem:[%s431 + $0x58] sm:%s421] %v458
                %v460 = vld [vmem:[%s430 + $0xc8] sm:%s421]
                %461 = vst [vmem:[%s431 + $0x68] sm:%s421] %v460
                %v462 = vld [vmem:[%s430 + $0xe8] sm:%s421]
                %463 = vst [vmem:[%s431 + $0x78] sm:%s421] %v462
                %s464 = sadd.s32 1, %s429
                %p465 = scmp.ge.s32.totalorder %s464, %s422
                %s466 = scalar_select %p465, 0, %s464
                %s467 = smul.u32 %s466, 256
                %s468 = smul.u32 %s466, 128
                %s469 = scalar_lea.vmem %s412, %s467
                %s470 = scalar_lea.vmem %s398, %s468 [#allocation3]
              $region97: #{bottleneck_forward.4} parent=91 // loop_footer
                %s426 = sadd.s32 %s424, 1
              $region98: #{bottleneck_forward.4} parent=91 // loop_footer_branch
                %423 = sbr.rel target = $region94
              $region99: #{bottleneck_forward.4} parent=91 // loop_exit
                _
              %s471 = sshrl.u32 %s402, 3
              %s472 = sand.u32 %s402, 7
              %s473 = smul.u32 %s471, 8
              %s474 = smul.u32 32, %s473
              %s475 = scalar_lea.vmem %s412, %s474
              %s476 = smul.u32 16, %s473
              %s477 = scalar_lea.vmem %s398, %s476 [#allocation3]
              // While loop
              $region100: #{bottleneck_forward.4} parent=91 // loop_pre_header
                _
              $region101: #{bottleneck_forward.4} parent=91 // loop_header
                %s479 = sphi 0, %s481
                %p480 = scmp.ge.s32.totalorder %s479, %s472
                %s484 = sphi 0, %s493
                %s485 = sphi %s475, %s496
                %s486 = sphi %s477, %s497
              $region102: #{bottleneck_forward.4} parent=91 // loop_header_branch
                %483 = sbr.rel (%p480) target = $region106
              $region103: #{bottleneck_forward.4} parent=91 // loop_body
                %v487 = vld [vmem:[%s485] sm:%s421]
                %488 = vst [vmem:[%s486] sm:%s421] %v487
                %v489 = vld [vmem:[%s485 + $0x8] sm:%s421]
                %490 = vst [vmem:[%s486 + $0x8] sm:%s421] %v489
                %s491 = sadd.s32 1, %s484
                %p492 = scmp.ge.s32.totalorder %s491, %s472
                %s493 = scalar_select %p492, 0, %s491
                %s494 = smul.u32 %s493, 32
                %s495 = smul.u32 %s493, 16
                %s496 = scalar_lea.vmem %s475, %s494
                %s497 = scalar_lea.vmem %s477, %s495 [#allocation3]
              $region104: #{bottleneck_forward.4} parent=91 // loop_footer
                %s481 = sadd.s32 %s479, 1
              $region105: #{bottleneck_forward.4} parent=91 // loop_footer_branch
                %478 = sbr.rel target = $region101
              $region106: #{bottleneck_forward.4} parent=91 // loop_exit
                _
            $region92: #{bottleneck_forward.4} parent=83 // pred_fallthru
              _
          $region84: #{bottleneck_forward.4} parent=79 // pred_fallthru
            _
          %578 = vnop
        $region80: #{bottleneck_forward.4} parent=23 // pred_fallthru
          _
        // Predicated region
        $region129: #{bottleneck_forward.4} parent=23 // pred_check
          %p579 = pneg %p105
        $region130: #{bottleneck_forward.4} parent=23 // pred_check_branch
          %581 = sbr.rel (%p579) target = $region132
        $region131: #{bottleneck_forward.4} parent=23 // pred_region
          %s582 = sadd.s32 %s19, 1
          %s583 = smul.u32 %s582, 8
          %p584 = scmp.lt.s32.totalorder %s18, 1
          %s585 = scalar_select %p584, %s18, 1
          %p586 = scmp.lt.s32.totalorder %s583, 8
          %s587 = scalar_select %p586, %s583, 8
          %s588 = smul.addr %s587, 8
          %s589 = smul.addr %s585, 72
          %s590 = sadd.s32 %s588, %s589
          %s591 = smul.addr %s590, 4
          %s592 = scalar_lea.vmem %s2, %s591
          %s593 = sadd.s32 %s19, 1
          %s594 = smul.u32 %s593, 8
        $region132: #{bottleneck_forward.4} parent=23 // pred_fallthru
          _
      $region24: #{bottleneck_forward.4} parent=5 // pred_fallthru
        _
      %p595 = scmp.le.s32.totalorder 1, %s11
      %p596 = scmp.lt.s32.totalorder %s11, 3
      %p597 = pnand %p595, %p596
      %p598 = pneg %p597
      // Predicated region
      $region133: #{bottleneck_forward.4} parent=5 // pred_check
        _
      $region134: #{bottleneck_forward.4} parent=5 // pred_check_branch
        %600 = sbr.rel (%p597) target = $region136
      $region135: #{bottleneck_forward.4} parent=5 // pred_region
        %s601 = ssub.s32 %s11, 1
        %s602 = sand.u32 %s38, 1
        %s603 = sand.u32 %s38, 1
        %s604 = smul.addr %s603, 128
        %s605 = scalar_lea.vmem [#allocation2], %s604
        // Predicated region
        $region137: #{bottleneck_forward.4} parent=135 // pred_check
          %p606 = pneg %p51
        $region138: #{bottleneck_forward.4} parent=135 // pred_check_branch
          %608 = sbr.rel (%p606) target = $region140
        $region139: #{bottleneck_forward.4} parent=135 // pred_region
          _
        $region140: #{bottleneck_forward.4} parent=135 // pred_fallthru
          _
        %s609 = sand.u32 %s66, 1
        %s610 = sand.u32 %s66, 1
        %s611 = smul.addr %s610, 128
        %s612 = scalar_lea.vmem [#allocation3], %s611
        // Predicated region
        $region141: #{bottleneck_forward.4} parent=135 // pred_check
          %p613 = pneg %p79
        $region142: #{bottleneck_forward.4} parent=135 // pred_check_branch
          %615 = sbr.rel (%p613) target = $region144
        $region143: #{bottleneck_forward.4} parent=135 // pred_region
          _
        $region144: #{bottleneck_forward.4} parent=135 // pred_fallthru
          _
        %s616 = sand.u32 %s38, 1
        %s617 = sand.u32 %s38, 1
        %s618 = smul.addr %s617, 128
        %s619 = scalar_lea.vmem [#allocation2], %s618
        %p620 = pneg %p51
        %p621 = pneg %p48
        %s622 = sand.u32 %s66, 1
        %s623 = sand.u32 %s66, 1
        %s624 = smul.addr %s623, 128
        %s625 = scalar_lea.vmem [#allocation3], %s624
        %p626 = pneg %p79
        %p627 = pneg %p76
        %s628 = sadd.s32 %s21, 1
        %s629 = smul.u32 %s628, 8
        %p630 = scmp.lt.s32.totalorder %s20, 1
        %s631 = scalar_select %p630, %s20, 1
        %p632 = scmp.lt.s32.totalorder %s629, 8
        %s633 = scalar_select %p632, %s629, 8
        %s634 = smul.addr %s633, 8
        %s635 = smul.addr %s631, 72
        %s636 = sadd.s32 %s634, %s635
        %s637 = smul.addr %s636, 4
        %s638 = scalar_lea.vmem %s2, %s637
        %p639 = pneg %p111
        %p640 = pneg %p108
        %p641 = pneg %p132
        %p642 = pneg %p129
        %p643 = pneg %p153
        %p644 = pneg %p150
        %p645 = pneg %p181
        %p646 = pneg %p178
        %s647 = smul.u32 8, %s21
        %p648 = scmp.lt.s32.totalorder %s20, 1
        %s649 = scalar_select %p648, %s20, 1
        %p650 = scmp.lt.s32.totalorder %s647, 7
        %s651 = scalar_select %p650, %s647, 7
        %s652 = smul.addr %s649, 8
        %s653 = sadd.s32 %s651, %s652
        %s654 = smul.addr %s653, 4
        %s655 = scalar_lea.vmem %s5, %s654
        %s656 = smul.u32 8, %s21
        %s657 = ssub.s32 9, %s656
        %p658 = scmp.lt.s32.totalorder %s657, 8
        %s659 = scalar_select %p658, %s657, 8
        %s660 = smul.u32 64, %s659
        %s661 = smul.u32 %s660, 2
        %s662 = smul.u32 %s661, 2
        %s663 = smul.u32 8, %s21
        %s664 = ssub.s32 9, %s663
        %p665 = scmp.lt.s32.totalorder %s664, 8
        %s666 = scalar_select %p665, %s664, 8
        %s667 = smul.u32 64, %s666
        %s668 = smul.u32 %s667, 2
        %s669 = smul.u32 %s668, 2
        %s670 = sadd.s32 %s21, 1
        %s671 = smul.u32 %s670, 8
        %p672 = scmp.lt.s32.totalorder %s20, 1
        %s673 = scalar_select %p672, %s20, 1
        %p674 = scmp.lt.s32.totalorder %s671, 8
        %s675 = scalar_select %p674, %s671, 8
        %s676 = smul.addr %s675, 8
        %s677 = smul.addr %s673, 72
        %s678 = sadd.s32 %s676, %s677
        %s679 = smul.addr %s678, 4
        %s680 = scalar_lea.vmem %s2, %s679
        %s681 = sadd.s32 %s21, 1
        %s682 = smul.u32 %s681, 8
        %s683 = smul.u32 8, %s21
        %p684 = scmp.lt.s32.totalorder %s20, 1
        %s685 = scalar_select %p684, %s20, 1
        %p686 = scmp.lt.s32.totalorder %s683, 7
        %s687 = scalar_select %p686, %s683, 7
        %s688 = smul.addr %s685, 8
        %s689 = sadd.s32 %s687, %s688
        %s690 = smul.addr %s689, 4
        %s691 = scalar_lea.vmem %s5, %s690
        %s692 = smul.u32 8, %s21
        %v694 = vld [vmem:[%s3] sm:$0xf]
        %v695 = vld [vmem:[%s3 + $0x4] sm:$0xf]
        %v696 = vld [vmem:[%s3 + $0x8] sm:$0xf]
        %v697 = vld [vmem:[%s3 + $0xc] sm:$0xf]
        %v698 = vld [vmem:[%s3 + $0x10] sm:$0xf]
        %v699 = vld [vmem:[%s3 + $0x14] sm:$0xf]
        %v700 = vld [vmem:[%s3 + $0x18] sm:$0xf]
        %v701 = vld [vmem:[%s3 + $0x1c] sm:$0xf]
        %v702 = vld [vmem:[%s3 + $0x20] sm:$0xf]
        %v703 = vld [vmem:[%s3 + $0x24] sm:$0xf]
        %v704 = vld [vmem:[%s3 + $0x28] sm:$0xf]
        %v705 = vld [vmem:[%s3 + $0x2c] sm:$0xf]
        %v706 = vld [vmem:[%s3 + $0x30] sm:$0xf]
        %v707 = vld [vmem:[%s3 + $0x34] sm:$0xf]
        %v708 = vld [vmem:[%s3 + $0x38] sm:$0xf]
        %v709 = vld [vmem:[%s3 + $0x3c] sm:$0xf]
        %v710 = vld [vmem:[%s3 + $0x40] sm:$0xf]
        %v711 = vld [vmem:[%s3 + $0x44] sm:$0xf]
        %v712 = vld [vmem:[%s3 + $0x48] sm:$0xf]
        %v713 = vld [vmem:[%s3 + $0x4c] sm:$0xf]
        %v714 = vld [vmem:[%s3 + $0x50] sm:$0xf]
        %v715 = vld [vmem:[%s3 + $0x54] sm:$0xf]
        %v716 = vld [vmem:[%s3 + $0x58] sm:$0xf]
        %v717 = vld [vmem:[%s3 + $0x5c] sm:$0xf]
        %v718 = vld [vmem:[%s3 + $0x60] sm:$0xf]
        %v719 = vld [vmem:[%s3 + $0x64] sm:$0xf]
        %v720 = vld [vmem:[%s3 + $0x68] sm:$0xf]
        %v721 = vld [vmem:[%s3 + $0x6c] sm:$0xf]
        %v722 = vld [vmem:[%s3 + $0x70] sm:$0xf]
        %v723 = vld [vmem:[%s3 + $0x74] sm:$0xf]
        %v724 = vld [vmem:[%s3 + $0x78] sm:$0xf]
        %v725 = vld [vmem:[%s3 + $0x7c] sm:$0xf]
        %v726 = vld [vmem:[%s3 + $0x80] sm:$0xf]
        %v727 = vld [vmem:[%s3 + $0x84] sm:$0xf]
        %v728 = vld [vmem:[%s3 + $0x88] sm:$0xf]
        %v729 = vld [vmem:[%s3 + $0x8c] sm:$0xf]
        %v730 = vld [vmem:[%s3 + $0x90] sm:$0xf]
        %v731 = vld [vmem:[%s3 + $0x94] sm:$0xf]
        %v732 = vld [vmem:[%s3 + $0x98] sm:$0xf]
        %v733 = vld [vmem:[%s3 + $0x9c] sm:$0xf]
        %v734 = vld [vmem:[%s3 + $0xa0] sm:$0xf]
        %v735 = vld [vmem:[%s3 + $0xa4] sm:$0xf]
        %v736 = vld [vmem:[%s3 + $0xa8] sm:$0xf]
        %v737 = vld [vmem:[%s3 + $0xac] sm:$0xf]
        %v738 = vld [vmem:[%s3 + $0xb0] sm:$0xf]
        %v739 = vld [vmem:[%s3 + $0xb4] sm:$0xf]
        %v740 = vld [vmem:[%s3 + $0xb8] sm:$0xf]
        %v741 = vld [vmem:[%s3 + $0xbc] sm:$0xf]
        %v742 = vld [vmem:[%s3 + $0xc0] sm:$0xf]
        %v743 = vld [vmem:[%s3 + $0xc4] sm:$0xf]
        %v744 = vld [vmem:[%s3 + $0xc8] sm:$0xf]
        %v745 = vld [vmem:[%s3 + $0xcc] sm:$0xf]
        %v746 = vld [vmem:[%s3 + $0xd0] sm:$0xf]
        %v747 = vld [vmem:[%s3 + $0xd4] sm:$0xf]
        %v748 = vld [vmem:[%s3 + $0xd8] sm:$0xf]
        %v749 = vld [vmem:[%s3 + $0xdc] sm:$0xf]
        %v750 = vld [vmem:[%s3 + $0xe0] sm:$0xf]
        %v751 = vld [vmem:[%s3 + $0xe4] sm:$0xf]
        %v752 = vld [vmem:[%s3 + $0xe8] sm:$0xf]
        %v753 = vld [vmem:[%s3 + $0xec] sm:$0xf]
        %v754 = vld [vmem:[%s3 + $0xf0] sm:$0xf]
        %v755 = vld [vmem:[%s3 + $0xf4] sm:$0xf]
        %v756 = vld [vmem:[%s3 + $0xf8] sm:$0xf]
        %v757 = vld [vmem:[%s3 + $0xfc] sm:$0xf]
        %v758 = vld [vmem:[%s3 + $0x100] sm:$0xf]
        %v759 = vld [vmem:[%s3 + $0x104] sm:$0xf]
        %v760 = vld [vmem:[%s3 + $0x108] sm:$0xf]
        %v761 = vld [vmem:[%s3 + $0x10c] sm:$0xf]
        %v762 = vld [vmem:[%s3 + $0x110] sm:$0xf]
        %v763 = vld [vmem:[%s3 + $0x114] sm:$0xf]
        %v764 = vld [vmem:[%s3 + $0x118] sm:$0xf]
        %v765 = vld [vmem:[%s3 + $0x11c] sm:$0xf]
        %v766 = vld [vmem:[%s3 + $0x120] sm:$0xf]
        %v767 = vld [vmem:[%s3 + $0x124] sm:$0xf]
        %v768 = vld [vmem:[%s3 + $0x128] sm:$0xf]
        %v769 = vld [vmem:[%s3 + $0x12c] sm:$0xf]
        %v770 = vld [vmem:[%s3 + $0x130] sm:$0xf]
        %v771 = vld [vmem:[%s3 + $0x134] sm:$0xf]
        %v772 = vld [vmem:[%s3 + $0x138] sm:$0xf]
        %v773 = vld [vmem:[%s3 + $0x13c] sm:$0xf]
        %v774 = vld [vmem:[%s3 + $0x140] sm:$0xf]
        %v775 = vld [vmem:[%s3 + $0x144] sm:$0xf]
        %v776 = vld [vmem:[%s3 + $0x148] sm:$0xf]
        %v777 = vld [vmem:[%s3 + $0x14c] sm:$0xf]
        %v778 = vld [vmem:[%s3 + $0x150] sm:$0xf]
        %v779 = vld [vmem:[%s3 + $0x154] sm:$0xf]
        %v780 = vld [vmem:[%s3 + $0x158] sm:$0xf]
        %v781 = vld [vmem:[%s3 + $0x15c] sm:$0xf]
        %v782 = vld [vmem:[%s3 + $0x160] sm:$0xf]
        %v783 = vld [vmem:[%s3 + $0x164] sm:$0xf]
        %v784 = vld [vmem:[%s3 + $0x168] sm:$0xf]
        %v785 = vld [vmem:[%s3 + $0x16c] sm:$0xf]
        %v786 = vld [vmem:[%s3 + $0x170] sm:$0xf]
        %v787 = vld [vmem:[%s3 + $0x174] sm:$0xf]
        %v788 = vld [vmem:[%s3 + $0x178] sm:$0xf]
        %v789 = vld [vmem:[%s3 + $0x17c] sm:$0xf]
        %v790 = vld [vmem:[%s3 + $0x180] sm:$0xf]
        %v791 = vld [vmem:[%s3 + $0x184] sm:$0xf]
        %v792 = vld [vmem:[%s3 + $0x188] sm:$0xf]
        %v793 = vld [vmem:[%s3 + $0x18c] sm:$0xf]
        %v794 = vld [vmem:[%s3 + $0x190] sm:$0xf]
        %v795 = vld [vmem:[%s3 + $0x194] sm:$0xf]
        %v796 = vld [vmem:[%s3 + $0x198] sm:$0xf]
        %v797 = vld [vmem:[%s3 + $0x19c] sm:$0xf]
        %v798 = vld [vmem:[%s3 + $0x1a0] sm:$0xf]
        %v799 = vld [vmem:[%s3 + $0x1a4] sm:$0xf]
        %v800 = vld [vmem:[%s3 + $0x1a8] sm:$0xf]
        %v801 = vld [vmem:[%s3 + $0x1ac] sm:$0xf]
        %v802 = vld [vmem:[%s3 + $0x1b0] sm:$0xf]
        %v803 = vld [vmem:[%s3 + $0x1b4] sm:$0xf]
        %v804 = vld [vmem:[%s3 + $0x1b8] sm:$0xf]
        %v805 = vld [vmem:[%s3 + $0x1bc] sm:$0xf]
        %v806 = vld [vmem:[%s3 + $0x1c0] sm:$0xf]
        %v807 = vld [vmem:[%s3 + $0x1c4] sm:$0xf]
        %v808 = vld [vmem:[%s3 + $0x1c8] sm:$0xf]
        %v809 = vld [vmem:[%s3 + $0x1cc] sm:$0xf]
        %v810 = vld [vmem:[%s3 + $0x1d0] sm:$0xf]
        %v811 = vld [vmem:[%s3 + $0x1d4] sm:$0xf]
        %v812 = vld [vmem:[%s3 + $0x1d8] sm:$0xf]
        %v813 = vld [vmem:[%s3 + $0x1dc] sm:$0xf]
        %v814 = vld [vmem:[%s3 + $0x1e0] sm:$0xf]
        %v815 = vld [vmem:[%s3 + $0x1e4] sm:$0xf]
        %v816 = vld [vmem:[%s3 + $0x1e8] sm:$0xf]
        %v817 = vld [vmem:[%s3 + $0x1ec] sm:$0xf]
        %v818 = vld [vmem:[%s3 + $0x1f0] sm:$0xf]
        %v819 = vld [vmem:[%s3 + $0x1f4] sm:$0xf]
        %v820 = vld [vmem:[%s3 + $0x1f8] sm:$0xf]
        %v821 = vld [vmem:[%s3 + $0x1fc] sm:$0xf]
        %v822 = vld [vmem:[%s3 + $0x200] sm:$0xf]
        %v823 = vld [vmem:[%s3 + $0x204] sm:$0xf]
        %v824 = vld [vmem:[%s3 + $0x208] sm:$0xf]
        %v825 = vld [vmem:[%s3 + $0x20c] sm:$0xf]
        %v826 = vld [vmem:[%s3 + $0x210] sm:$0xf]
        %v827 = vld [vmem:[%s3 + $0x214] sm:$0xf]
        %v828 = vld [vmem:[%s3 + $0x218] sm:$0xf]
        %v829 = vld [vmem:[%s3 + $0x21c] sm:$0xf]
        %v830 = vld [vmem:[%s3 + $0x220] sm:$0xf]
        %v831 = vld [vmem:[%s3 + $0x224] sm:$0xf]
        %v832 = vld [vmem:[%s3 + $0x228] sm:$0xf]
        %v833 = vld [vmem:[%s3 + $0x22c] sm:$0xf]
        %v834 = vld [vmem:[%s3 + $0x230] sm:$0xf]
        %v835 = vld [vmem:[%s3 + $0x234] sm:$0xf]
        %v836 = vld [vmem:[%s3 + $0x238] sm:$0xf]
        %v837 = vld [vmem:[%s3 + $0x23c] sm:$0xf]
        %v838 = vld [vmem:[%s605] sm:$0xff]
        %v839 = vld [vmem:[%s605 + $0x8] sm:$0x11]
        %v840 = vld [vmem:[%s605 + $0x10] sm:$0xff]
        %v841 = vld [vmem:[%s605 + $0x18] sm:$0x11]
        %v842 = vld [vmem:[%s605 + $0x20] sm:$0xff]
        %v843 = vld [vmem:[%s605 + $0x28] sm:$0x11]
        %v844 = vld [vmem:[%s605 + $0x30] sm:$0xff]
        %v845 = vld [vmem:[%s605 + $0x38] sm:$0x11]
        %v846 = vld [vmem:[%s605 + $0x40] sm:$0xff]
        %v847 = vld [vmem:[%s605 + $0x48] sm:$0x11]
        %v848 = vld [vmem:[%s605 + $0x50] sm:$0xff]
        %v849 = vld [vmem:[%s605 + $0x58] sm:$0x11]
        %v850 = vld [vmem:[%s605 + $0x60] sm:$0xff]
        %v851 = vld [vmem:[%s605 + $0x68] sm:$0x11]
        %v852 = vld [vmem:[%s605 + $0x70] sm:$0xff]
        %v853 = vld [vmem:[%s605 + $0x78] sm:$0x11]
        %v854 = vld [vmem:[%s612] sm:$0xff]
        %v855 = vld [vmem:[%s612 + $0x8] sm:$0x11]
        %v856 = vld [vmem:[%s612 + $0x10] sm:$0xff]
        %v857 = vld [vmem:[%s612 + $0x18] sm:$0x11]
        %v858 = vld [vmem:[%s612 + $0x20] sm:$0xff]
        %v859 = vld [vmem:[%s612 + $0x28] sm:$0x11]
        %v860 = vld [vmem:[%s612 + $0x30] sm:$0xff]
        %v861 = vld [vmem:[%s612 + $0x38] sm:$0x11]
        %v862 = vld [vmem:[%s612 + $0x40] sm:$0xff]
        %v863 = vld [vmem:[%s612 + $0x48] sm:$0x11]
        %v864 = vld [vmem:[%s612 + $0x50] sm:$0xff]
        %v865 = vld [vmem:[%s612 + $0x58] sm:$0x11]
        %v866 = vld [vmem:[%s612 + $0x60] sm:$0xff]
        %v867 = vld [vmem:[%s612 + $0x68] sm:$0x11]
        %v868 = vld [vmem:[%s612 + $0x70] sm:$0xff]
        %v869 = vld [vmem:[%s612 + $0x78] sm:$0x11]
        %v870 = vld [vmem:[%s680] sm:$0xff]
        %v871 = vld [vmem:[%s680 + $0x8] sm:$0x11]
        %v880 = vrot.slane %v838, 4
        %v881 = vrot.slane %v840, 4
        %v882 = vrot.slane %v842, 4
        %v883 = vrot.slane %v844, 4
        %v884 = vrot.slane %v846, 4
        %v885 = vrot.slane %v848, 4
        %v886 = vrot.slane %v850, 4
        %v887 = vrot.slane %v852, 4
        %v888 = vunpack.c.l.b16 %v880
        %v889 = vunpack.c.l.b16 %v881
        %v890 = vunpack.c.l.b16 %v882
        %v891 = vunpack.c.l.b16 %v883
        %v892 = vunpack.c.l.b16 %v884
        %v893 = vunpack.c.l.b16 %v885
        %v894 = vunpack.c.l.b16 %v886
        %v895 = vunpack.c.l.b16 %v887
        %v896 = vpack.c.b16 %v889, %v888
        %v897 = vpack.c.b16 %v891, %v890
        %v898 = vpack.c.b16 %v893, %v892
        %v899 = vpack.c.b16 %v895, %v894
        %v920 = vunpack.c.l.b16 %v710
        %v921 = vunpack.c.l.b16 %v711
        %v922 = vunpack.c.l.b16 %v712
        %v923 = vunpack.c.l.b16 %v713
        %v924 = vunpack.c.l.b16 %v714
        %v925 = vunpack.c.l.b16 %v715
        %v926 = vunpack.c.l.b16 %v716
        %v927 = vunpack.c.l.b16 %v717
        %v928 = vunpack.c.l.b16 %v718
        %v929 = vunpack.c.l.b16 %v719
        %v930 = vunpack.c.l.b16 %v720
        %v931 = vunpack.c.l.b16 %v721
        %v932 = vunpack.c.l.b16 %v722
        %v933 = vunpack.c.l.b16 %v723
        %v934 = vunpack.c.l.b16 %v724
        %v935 = vunpack.c.l.b16 %v725
        %v936 = vpack.c.b16 %v921, %v920
        %v937 = vpack.c.b16 %v923, %v922
        %v938 = vpack.c.b16 %v925, %v924
        %v939 = vpack.c.b16 %v927, %v926
        %v940 = vpack.c.b16 %v929, %v928
        %v941 = vpack.c.b16 %v931, %v930
        %v942 = vpack.c.b16 %v933, %v932
        %v943 = vpack.c.b16 %v935, %v934
        %952 = vmatprep.subr.bf16.mxu0 0
        %953 = vmatpush1.bf16.msra.mxu0 %v943
        %954 = vmatprep.subr.bf16.mxu0 0
        %955 = vmatpush1.bf16.msra.mxu0 %v942
        %956 = vmatprep.subr.bf16.mxu0 0
        %957 = vmatpush1.bf16.msra.mxu0 %v941
        %958 = vmatprep.subr.bf16.mxu0 0
        %959 = vmatpush1.bf16.msra.mxu0 %v940
        %960 = vmatprep.subr.bf16.mxu0 0
        %961 = vmatpush1.bf16.msra.mxu0 %v939
        %962 = vmatprep.subr.bf16.mxu0 0
        %963 = vmatpush1.bf16.msra.mxu0 %v938
        %964 = vmatprep.subr.bf16.mxu0 0
        %965 = vmatpush1.bf16.msra.mxu0 %v937
        %966 = vmatprep.subr.bf16.mxu0 0
        %967 = vmatpush1.bf16.msra.mxu0 %v936
        %968 = vmatprep.subr.bf16.mxu0 0
        %969 = vmatpush2.bf16.msra.mxu0 0
        %970 = vmatprep.subr.bf16.mxu0 0
        %971 = vmatpush2.bf16.msra.mxu0 0
        %972 = vmatprep.subr.bf16.mxu0 0
        %973 = vmatpush2.bf16.msra.mxu0 0
        %974 = vmatprep.subr.bf16.mxu0 0
        %975 = vmatpush2.bf16.msra.mxu0 0
        %976 = vmatprep.subr.bf16.mxu0 0
        %977 = vmatpush2.bf16.msra.mxu0 0
        %978 = vmatprep.subr.bf16.mxu0 0
        %979 = vmatpush2.bf16.msra.mxu0 0
        %980 = vmatprep.subr.bf16.mxu0 0
        %981 = vmatpush2.bf16.msra.mxu0 0
        %982 = vmatprep.subr.bf16.mxu0 0
        %983 = vmatpush2.bf16.msra.mxu0 0
        %984 = vmatprep.mubr.bf16.mxu0 0
        %985 = vmatmul.mubr.bf16.gmra.mxu0 %v896
        %v986 = vpop.f32.mrf.mxu0
        %v987 = vadd.f32 0.0, %v986
        %v988 = vpop.f32.mrf.mxu0
        %v989 = vpop.f32.mrf.mxu0
        %v990 = vadd.f32 0.0, %v989
        %v991 = vpop.f32.mrf.mxu0
        %992 = vmatprep.mubr.bf16.mxu0 0
        %993 = vmatmul.mubr.bf16.gmra.mxu0 %v897
        %v994 = vpop.f32.mrf.mxu0
        %v995 = vadd.f32 0.0, %v994
        %v996 = vpop.f32.mrf.mxu0
        %v997 = vpop.f32.mrf.mxu0
        %v998 = vadd.f32 0.0, %v997
        %v999 = vpop.f32.mrf.mxu0
        %1000 = vmatprep.mubr.bf16.mxu0 0
        %1001 = vmatmul.mubr.bf16.gmra.mxu0 %v898
        %v1002 = vpop.f32.mrf.mxu0
        %v1003 = vadd.f32 0.0, %v1002
        %v1004 = vpop.f32.mrf.mxu0
        %v1005 = vpop.f32.mrf.mxu0
        %v1006 = vadd.f32 0.0, %v1005
        %v1007 = vpop.f32.mrf.mxu0
        %1008 = vmatprep.mubr.bf16.mxu0 0
        %1009 = vmatmul.mubr.bf16.gmra.mxu0 %v899
        %v1010 = vpop.f32.mrf.mxu0
        %v1011 = vadd.f32 0.0, %v1010
        %v1012 = vpop.f32.mrf.mxu0
        %v1013 = vpop.f32.mrf.mxu0
        %v1014 = vadd.f32 0.0, %v1013
        %v1015 = vpop.f32.mrf.mxu0
        %1016 = vdwg.mxu0
        %v1017 = vunpack.c.l.b16 %v838
        %v1018 = vunpack.c.l.b16 %v840
        %v1019 = vunpack.c.l.b16 %v842
        %v1020 = vunpack.c.l.b16 %v844
        %v1021 = vunpack.c.l.b16 %v846
        %v1022 = vunpack.c.l.b16 %v848
        %v1023 = vunpack.c.l.b16 %v850
        %v1024 = vunpack.c.l.b16 %v852
        %v1025 = vpack.c.b16 %v1018, %v1017
        %v1026 = vpack.c.b16 %v1020, %v1019
        %v1027 = vpack.c.b16 %v1022, %v1021
        %v1028 = vpack.c.b16 %v1024, %v1023
        %v1049 = vunpack.c.l.b16 %v694
        %v1050 = vunpack.c.l.b16 %v695
        %v1051 = vunpack.c.l.b16 %v696
        %v1052 = vunpack.c.l.b16 %v697
        %v1053 = vunpack.c.l.b16 %v698
        %v1054 = vunpack.c.l.b16 %v699
        %v1055 = vunpack.c.l.b16 %v700
        %v1056 = vunpack.c.l.b16 %v701
        %v1057 = vunpack.c.l.b16 %v702
        %v1058 = vunpack.c.l.b16 %v703
        %v1059 = vunpack.c.l.b16 %v704
        %v1060 = vunpack.c.l.b16 %v705
        %v1061 = vunpack.c.l.b16 %v706
        %v1062 = vunpack.c.l.b16 %v707
        %v1063 = vunpack.c.l.b16 %v708
        %v1064 = vunpack.c.l.b16 %v709
        %v1065 = vpack.c.b16 %v1050, %v1049
        %v1066 = vpack.c.b16 %v1052, %v1051
        %v1067 = vpack.c.b16 %v1054, %v1053
        %v1068 = vpack.c.b16 %v1056, %v1055
        %v1069 = vpack.c.b16 %v1058, %v1057
        %v1070 = vpack.c.b16 %v1060, %v1059
        %v1071 = vpack.c.b16 %v1062, %v1061
        %v1072 = vpack.c.b16 %v1064, %v1063
        %1081 = vmatprep.subr.bf16.mxu0 0
        %1082 = vmatpush1.bf16.msra.mxu0 %v1072
        %1083 = vmatprep.subr.bf16.mxu0 0
        %1084 = vmatpush1.bf16.msra.mxu0 %v1071
        %1085 = vmatprep.subr.bf16.mxu0 0
        %1086 = vmatpush1.bf16.msra.mxu0 %v1070
        %1087 = vmatprep.subr.bf16.mxu0 0
        %1088 = vmatpush1.bf16.msra.mxu0 %v1069
        %1089 = vmatprep.subr.bf16.mxu0 0
        %1090 = vmatpush1.bf16.msra.mxu0 %v1068
        %1091 = vmatprep.subr.bf16.mxu0 0
        %1092 = vmatpush1.bf16.msra.mxu0 %v1067
        %1093 = vmatprep.subr.bf16.mxu0 0
        %1094 = vmatpush1.bf16.msra.mxu0 %v1066
        %1095 = vmatprep.subr.bf16.mxu0 0
        %1096 = vmatpush1.bf16.msra.mxu0 %v1065
        %1097 = vmatprep.subr.bf16.mxu0 0
        %1098 = vmatpush2.bf16.msra.mxu0 0
        %1099 = vmatprep.subr.bf16.mxu0 0
        %1100 = vmatpush2.bf16.msra.mxu0 0
        %1101 = vmatprep.subr.bf16.mxu0 0
        %1102 = vmatpush2.bf16.msra.mxu0 0
        %1103 = vmatprep.subr.bf16.mxu0 0
        %1104 = vmatpush2.bf16.msra.mxu0 0
        %1105 = vmatprep.subr.bf16.mxu0 0
        %1106 = vmatpush2.bf16.msra.mxu0 0
        %1107 = vmatprep.subr.bf16.mxu0 0
        %1108 = vmatpush2.bf16.msra.mxu0 0
        %1109 = vmatprep.subr.bf16.mxu0 0
        %1110 = vmatpush2.bf16.msra.mxu0 0
        %1111 = vmatprep.subr.bf16.mxu0 0
        %1112 = vmatpush2.bf16.msra.mxu0 0
        %1113 = vmatprep.mubr.bf16.mxu0 0
        %1114 = vmatmul.mubr.bf16.gmra.mxu0 %v1025
        %v1115 = vpop.f32.mrf.mxu0
        %v1116 = vadd.f32 %v987, %v1115
        %v1117 = vpop.f32.mrf.mxu0
        %v1118 = vpop.f32.mrf.mxu0
        %v1119 = vadd.f32 %v990, %v1118
        %v1120 = vpop.f32.mrf.mxu0
        %1121 = vmatprep.mubr.bf16.mxu0 0
        %1122 = vmatmul.mubr.bf16.gmra.mxu0 %v1026
        %v1123 = vpop.f32.mrf.mxu0
        %v1124 = vadd.f32 %v995, %v1123
        %v1125 = vpop.f32.mrf.mxu0
        %v1126 = vpop.f32.mrf.mxu0
        %v1127 = vadd.f32 %v998, %v1126
        %v1128 = vpop.f32.mrf.mxu0
        %1129 = vmatprep.mubr.bf16.mxu0 0
        %1130 = vmatmul.mubr.bf16.gmra.mxu0 %v1027
        %v1131 = vpop.f32.mrf.mxu0
        %v1132 = vadd.f32 %v1003, %v1131
        %v1133 = vpop.f32.mrf.mxu0
        %v1134 = vpop.f32.mrf.mxu0
        %v1135 = vadd.f32 %v1006, %v1134
        %v1136 = vpop.f32.mrf.mxu0
        %1137 = vmatprep.mubr.bf16.mxu0 0
        %1138 = vmatmul.mubr.bf16.gmra.mxu0 %v1028
        %v1139 = vpop.f32.mrf.mxu0
        %v1140 = vadd.f32 %v1011, %v1139
        %v1141 = vpop.f32.mrf.mxu0
        %v1142 = vpop.f32.mrf.mxu0
        %v1143 = vadd.f32 %v1014, %v1142
        %v1144 = vpop.f32.mrf.mxu0
        %1145 = vdwg.mxu0
        %vm1146 = vsmask.f32 3328
        %vm1147 = vsmask.f32 7440
        %vm1148 = vmor %vm1146, %vm1147
        %v1150 = vshrl.u32 %v838, 16
        %v1152 = vrot.slane %v1150, 4
        %v1153 = vshll.u32 %v838, 16
        %v1155 = vrot.slane %v1153, 5
        %v1156 = vor.u32 %v1152, %v1155
        %v1157 = vrot.slane %v1156, 4
        %v1159 = vshll.u32 %v839, 16
        %v1161 = vrot.slane %v1159, 5
        %v1162 = vsel %vm1148, %v1157, %v1161
        %v1164 = vshrl.u32 %v840, 16
        %v1166 = vrot.slane %v1164, 4
        %v1167 = vshll.u32 %v840, 16
        %v1169 = vrot.slane %v1167, 5
        %v1170 = vor.u32 %v1166, %v1169
        %v1171 = vrot.slane %v1170, 4
        %v1173 = vshll.u32 %v841, 16
        %v1175 = vrot.slane %v1173, 5
        %v1176 = vsel %vm1148, %v1171, %v1175
        %v1178 = vshrl.u32 %v842, 16
        %v1180 = vrot.slane %v1178, 4
        %v1181 = vshll.u32 %v842, 16
        %v1183 = vrot.slane %v1181, 5
        %v1184 = vor.u32 %v1180, %v1183
        %v1185 = vrot.slane %v1184, 4
        %v1187 = vshll.u32 %v843, 16
        %v1189 = vrot.slane %v1187, 5
        %v1190 = vsel %vm1148, %v1185, %v1189
        %v1192 = vshrl.u32 %v844, 16
        %v1194 = vrot.slane %v1192, 4
        %v1195 = vshll.u32 %v844, 16
        %v1197 = vrot.slane %v1195, 5
        %v1198 = vor.u32 %v1194, %v1197
        %v1199 = vrot.slane %v1198, 4
        %v1201 = vshll.u32 %v845, 16
        %v1203 = vrot.slane %v1201, 5
        %v1204 = vsel %vm1148, %v1199, %v1203
        %v1206 = vshrl.u32 %v846, 16
        %v1208 = vrot.slane %v1206, 4
        %v1209 = vshll.u32 %v846, 16
        %v1211 = vrot.slane %v1209, 5
        %v1212 = vor.u32 %v1208, %v1211
        %v1213 = vrot.slane %v1212, 4
        %v1215 = vshll.u32 %v847, 16
        %v1217 = vrot.slane %v1215, 5
        %v1218 = vsel %vm1148, %v1213, %v1217
        %v1220 = vshrl.u32 %v848, 16
        %v1222 = vrot.slane %v1220, 4
        %v1223 = vshll.u32 %v848, 16
        %v1225 = vrot.slane %v1223, 5
        %v1226 = vor.u32 %v1222, %v1225
        %v1227 = vrot.slane %v1226, 4
        %v1229 = vshll.u32 %v849, 16
        %v1231 = vrot.slane %v1229, 5
        %v1232 = vsel %vm1148, %v1227, %v1231
        %v1234 = vshrl.u32 %v850, 16
        %v1236 = vrot.slane %v1234, 4
        %v1237 = vshll.u32 %v850, 16
        %v1239 = vrot.slane %v1237, 5
        %v1240 = vor.u32 %v1236, %v1239
        %v1241 = vrot.slane %v1240, 4
        %v1243 = vshll.u32 %v851, 16
        %v1245 = vrot.slane %v1243, 5
        %v1246 = vsel %vm1148, %v1241, %v1245
        %v1248 = vshrl.u32 %v852, 16
        %v1250 = vrot.slane %v1248, 4
        %v1251 = vshll.u32 %v852, 16
        %v1253 = vrot.slane %v1251, 5
        %v1254 = vor.u32 %v1250, %v1253
        %v1255 = vrot.slane %v1254, 4
        %v1257 = vshll.u32 %v853, 16
        %v1259 = vrot.slane %v1257, 5
        %v1260 = vsel %vm1148, %v1255, %v1259
        %v1261 = vunpack.c.l.b16 %v1162
        %v1262 = vunpack.c.l.b16 %v1176
        %v1263 = vunpack.c.l.b16 %v1190
        %v1264 = vunpack.c.l.b16 %v1204
        %v1265 = vunpack.c.l.b16 %v1218
        %v1266 = vunpack.c.l.b16 %v1232
        %v1267 = vunpack.c.l.b16 %v1246
        %v1268 = vunpack.c.l.b16 %v1260
        %v1269 = vpack.c.b16 %v1262, %v1261
        %v1270 = vpack.c.b16 %v1264, %v1263
        %v1271 = vpack.c.b16 %v1266, %v1265
        %v1272 = vpack.c.b16 %v1268, %v1267
        %v1293 = vunpack.c.l.b16 %v726
        %v1294 = vunpack.c.l.b16 %v727
        %v1295 = vunpack.c.l.b16 %v728
        %v1296 = vunpack.c.l.b16 %v729
        %v1297 = vunpack.c.l.b16 %v730
        %v1298 = vunpack.c.l.b16 %v731
        %v1299 = vunpack.c.l.b16 %v732
        %v1300 = vunpack.c.l.b16 %v733
        %v1301 = vunpack.c.l.b16 %v734
        %v1302 = vunpack.c.l.b16 %v735
        %v1303 = vunpack.c.l.b16 %v736
        %v1304 = vunpack.c.l.b16 %v737
        %v1305 = vunpack.c.l.b16 %v738
        %v1306 = vunpack.c.l.b16 %v739
        %v1307 = vunpack.c.l.b16 %v740
        %v1308 = vunpack.c.l.b16 %v741
        %v1309 = vpack.c.b16 %v1294, %v1293
        %v1310 = vpack.c.b16 %v1296, %v1295
        %v1311 = vpack.c.b16 %v1298, %v1297
        %v1312 = vpack.c.b16 %v1300, %v1299
        %v1313 = vpack.c.b16 %v1302, %v1301
        %v1314 = vpack.c.b16 %v1304, %v1303
        %v1315 = vpack.c.b16 %v1306, %v1305
        %v1316 = vpack.c.b16 %v1308, %v1307
        %1325 = vmatprep.subr.bf16.mxu0 0
        %1326 = vmatpush1.bf16.msra.mxu0 %v1316
        %1327 = vmatprep.subr.bf16.mxu0 0
        %1328 = vmatpush1.bf16.msra.mxu0 %v1315
        %1329 = vmatprep.subr.bf16.mxu0 0
        %1330 = vmatpush1.bf16.msra.mxu0 %v1314
        %1331 = vmatprep.subr.bf16.mxu0 0
        %1332 = vmatpush1.bf16.msra.mxu0 %v1313
        %1333 = vmatprep.subr.bf16.mxu0 0
        %1334 = vmatpush1.bf16.msra.mxu0 %v1312
        %1335 = vmatprep.subr.bf16.mxu0 0
        %1336 = vmatpush1.bf16.msra.mxu0 %v1311
        %1337 = vmatprep.subr.bf16.mxu0 0
        %1338 = vmatpush1.bf16.msra.mxu0 %v1310
        %1339 = vmatprep.subr.bf16.mxu0 0
        %1340 = vmatpush1.bf16.msra.mxu0 %v1309
        %1341 = vmatprep.subr.bf16.mxu0 0
        %1342 = vmatpush2.bf16.msra.mxu0 0
        %1343 = vmatprep.subr.bf16.mxu0 0
        %1344 = vmatpush2.bf16.msra.mxu0 0
        %1345 = vmatprep.subr.bf16.mxu0 0
        %1346 = vmatpush2.bf16.msra.mxu0 0
        %1347 = vmatprep.subr.bf16.mxu0 0
        %1348 = vmatpush2.bf16.msra.mxu0 0
        %1349 = vmatprep.subr.bf16.mxu0 0
        %1350 = vmatpush2.bf16.msra.mxu0 0
        %1351 = vmatprep.subr.bf16.mxu0 0
        %1352 = vmatpush2.bf16.msra.mxu0 0
        %1353 = vmatprep.subr.bf16.mxu0 0
        %1354 = vmatpush2.bf16.msra.mxu0 0
        %1355 = vmatprep.subr.bf16.mxu0 0
        %1356 = vmatpush2.bf16.msra.mxu0 0
        %1357 = vmatprep.mubr.bf16.mxu0 0
        %1358 = vmatmul.mubr.bf16.gmra.mxu0 %v1269
        %v1359 = vpop.f32.mrf.mxu0
        %v1360 = vadd.f32 0.0, %v1359
        %v1361 = vpop.f32.mrf.mxu0
        %v1362 = vpop.f32.mrf.mxu0
        %v1363 = vadd.f32 0.0, %v1362
        %v1364 = vpop.f32.mrf.mxu0
        %1365 = vmatprep.mubr.bf16.mxu0 0
        %1366 = vmatmul.mubr.bf16.gmra.mxu0 %v1270
        %v1367 = vpop.f32.mrf.mxu0
        %v1368 = vadd.f32 0.0, %v1367
        %v1369 = vpop.f32.mrf.mxu0
        %v1370 = vpop.f32.mrf.mxu0
        %v1371 = vadd.f32 0.0, %v1370
        %v1372 = vpop.f32.mrf.mxu0
        %1373 = vmatprep.mubr.bf16.mxu0 0
        %1374 = vmatmul.mubr.bf16.gmra.mxu0 %v1271
        %v1375 = vpop.f32.mrf.mxu0
        %v1376 = vadd.f32 0.0, %v1375
        %v1377 = vpop.f32.mrf.mxu0
        %v1378 = vpop.f32.mrf.mxu0
        %v1379 = vadd.f32 0.0, %v1378
        %v1380 = vpop.f32.mrf.mxu0
        %1381 = vmatprep.mubr.bf16.mxu0 0
        %1382 = vmatmul.mubr.bf16.gmra.mxu0 %v1272
        %v1383 = vpop.f32.mrf.mxu0
        %v1384 = vadd.f32 0.0, %v1383
        %v1385 = vpop.f32.mrf.mxu0
        %v1386 = vpop.f32.mrf.mxu0
        %v1387 = vadd.f32 0.0, %v1386
        %v1388 = vpop.f32.mrf.mxu0
        %1389 = vdwg.mxu0
        %v1390 = vadd.f32 %v1116, %v1360
        %v1391 = vadd.f32 %v1119, %v1363
        %v1392 = vadd.f32 %v1124, %v1368
        %v1393 = vadd.f32 %v1127, %v1371
        %v1394 = vadd.f32 %v1132, %v1376
        %v1395 = vadd.f32 %v1135, %v1379
        %v1396 = vadd.f32 %v1140, %v1384
        %v1397 = vadd.f32 %v1143, %v1387
        %v1406 = vunpack.c.l.b16 %v854
        %v1407 = vunpack.c.l.b16 %v856
        %v1408 = vunpack.c.l.b16 %v858
        %v1409 = vunpack.c.l.b16 %v860
        %v1410 = vunpack.c.l.b16 %v862
        %v1411 = vunpack.c.l.b16 %v864
        %v1412 = vunpack.c.l.b16 %v866
        %v1413 = vunpack.c.l.b16 %v868
        %v1414 = vpack.c.b16 %v1407, %v1406
        %v1415 = vpack.c.b16 %v1409, %v1408
        %v1416 = vpack.c.b16 %v1411, %v1410
        %v1417 = vpack.c.b16 %v1413, %v1412
        %v1438 = vunpack.c.l.b16 %v742
        %v1439 = vunpack.c.l.b16 %v743
        %v1440 = vunpack.c.l.b16 %v744
        %v1441 = vunpack.c.l.b16 %v745
        %v1442 = vunpack.c.l.b16 %v746
        %v1443 = vunpack.c.l.b16 %v747
        %v1444 = vunpack.c.l.b16 %v748
        %v1445 = vunpack.c.l.b16 %v749
        %v1446 = vunpack.c.l.b16 %v750
        %v1447 = vunpack.c.l.b16 %v751
        %v1448 = vunpack.c.l.b16 %v752
        %v1449 = vunpack.c.l.b16 %v753
        %v1450 = vunpack.c.l.b16 %v754
        %v1451 = vunpack.c.l.b16 %v755
        %v1452 = vunpack.c.l.b16 %v756
        %v1453 = vunpack.c.l.b16 %v757
        %v1454 = vpack.c.b16 %v1439, %v1438
        %v1455 = vpack.c.b16 %v1441, %v1440
        %v1456 = vpack.c.b16 %v1443, %v1442
        %v1457 = vpack.c.b16 %v1445, %v1444
        %v1458 = vpack.c.b16 %v1447, %v1446
        %v1459 = vpack.c.b16 %v1449, %v1448
        %v1460 = vpack.c.b16 %v1451, %v1450
        %v1461 = vpack.c.b16 %v1453, %v1452
        %1470 = vmatprep.subr.bf16.mxu0 0
        %1471 = vmatpush1.bf16.msra.mxu0 %v1461
        %1472 = vmatprep.subr.bf16.mxu0 0
        %1473 = vmatpush1.bf16.msra.mxu0 %v1460
        %1474 = vmatprep.subr.bf16.mxu0 0
        %1475 = vmatpush1.bf16.msra.mxu0 %v1459
        %1476 = vmatprep.subr.bf16.mxu0 0
        %1477 = vmatpush1.bf16.msra.mxu0 %v1458
        %1478 = vmatprep.subr.bf16.mxu0 0
        %1479 = vmatpush1.bf16.msra.mxu0 %v1457
        %1480 = vmatprep.subr.bf16.mxu0 0
        %1481 = vmatpush1.bf16.msra.mxu0 %v1456
        %1482 = vmatprep.subr.bf16.mxu0 0
        %1483 = vmatpush1.bf16.msra.mxu0 %v1455
        %1484 = vmatprep.subr.bf16.mxu0 0
        %1485 = vmatpush1.bf16.msra.mxu0 %v1454
        %1486 = vmatprep.subr.bf16.mxu0 0
        %1487 = vmatpush2.bf16.msra.mxu0 0
        %1488 = vmatprep.subr.bf16.mxu0 0
        %1489 = vmatpush2.bf16.msra.mxu0 0
        %1490 = vmatprep.subr.bf16.mxu0 0
        %1491 = vmatpush2.bf16.msra.mxu0 0
        %1492 = vmatprep.subr.bf16.mxu0 0
        %1493 = vmatpush2.bf16.msra.mxu0 0
        %1494 = vmatprep.subr.bf16.mxu0 0
        %1495 = vmatpush2.bf16.msra.mxu0 0
        %1496 = vmatprep.subr.bf16.mxu0 0
        %1497 = vmatpush2.bf16.msra.mxu0 0
        %1498 = vmatprep.subr.bf16.mxu0 0
        %1499 = vmatpush2.bf16.msra.mxu0 0
        %1500 = vmatprep.subr.bf16.mxu0 0
        %1501 = vmatpush2.bf16.msra.mxu0 0
        %1502 = vmatprep.mubr.bf16.mxu0 0
        %1503 = vmatmul.mubr.bf16.gmra.mxu0 %v1414
        %v1504 = vpop.f32.mrf.mxu0
        %v1505 = vadd.f32 0.0, %v1504
        %v1506 = vpop.f32.mrf.mxu0
        %v1507 = vpop.f32.mrf.mxu0
        %v1508 = vadd.f32 0.0, %v1507
        %v1509 = vpop.f32.mrf.mxu0
        %1510 = vmatprep.mubr.bf16.mxu0 0
        %1511 = vmatmul.mubr.bf16.gmra.mxu0 %v1415
        %v1512 = vpop.f32.mrf.mxu0
        %v1513 = vadd.f32 0.0, %v1512
        %v1514 = vpop.f32.mrf.mxu0
        %v1515 = vpop.f32.mrf.mxu0
        %v1516 = vadd.f32 0.0, %v1515
        %v1517 = vpop.f32.mrf.mxu0
        %1518 = vmatprep.mubr.bf16.mxu0 0
        %1519 = vmatmul.mubr.bf16.gmra.mxu0 %v1416
        %v1520 = vpop.f32.mrf.mxu0
        %v1521 = vadd.f32 0.0, %v1520
        %v1522 = vpop.f32.mrf.mxu0
        %v1523 = vpop.f32.mrf.mxu0
        %v1524 = vadd.f32 0.0, %v1523
        %v1525 = vpop.f32.mrf.mxu0
        %1526 = vmatprep.mubr.bf16.mxu0 0
        %1527 = vmatmul.mubr.bf16.gmra.mxu0 %v1417
        %v1528 = vpop.f32.mrf.mxu0
        %v1529 = vadd.f32 0.0, %v1528
        %v1530 = vpop.f32.mrf.mxu0
        %v1531 = vpop.f32.mrf.mxu0
        %v1532 = vadd.f32 0.0, %v1531
        %v1533 = vpop.f32.mrf.mxu0
        %1534 = vdwg.mxu0
        %v1535 = vadd.f32 %v1390, %v1505
        %v1536 = vadd.f32 %v1391, %v1508
        %v1537 = vadd.f32 %v1392, %v1513
        %v1538 = vadd.f32 %v1393, %v1516
        %v1539 = vadd.f32 %v1394, %v1521
        %v1540 = vadd.f32 %v1395, %v1524
        %v1541 = vadd.f32 %v1396, %v1529
        %v1542 = vadd.f32 %v1397, %v1532
        %v1543 = vrot.slane %v854, 4
        %v1544 = vrot.slane %v856, 4
        %v1545 = vrot.slane %v858, 4
        %v1546 = vrot.slane %v860, 4
        %v1547 = vrot.slane %v862, 4
        %v1548 = vrot.slane %v864, 4
        %v1549 = vrot.slane %v866, 4
        %v1550 = vrot.slane %v868, 4
        %v1551 = vunpack.c.l.b16 %v1543
        %v1552 = vunpack.c.l.b16 %v1544
        %v1553 = vunpack.c.l.b16 %v1545
        %v1554 = vunpack.c.l.b16 %v1546
        %v1555 = vunpack.c.l.b16 %v1547
        %v1556 = vunpack.c.l.b16 %v1548
        %v1557 = vunpack.c.l.b16 %v1549
        %v1558 = vunpack.c.l.b16 %v1550
        %v1559 = vpack.c.b16 %v1552, %v1551
        %v1560 = vpack.c.b16 %v1554, %v1553
        %v1561 = vpack.c.b16 %v1556, %v1555
        %v1562 = vpack.c.b16 %v1558, %v1557
        %v1583 = vunpack.c.l.b16 %v758
        %v1584 = vunpack.c.l.b16 %v759
        %v1585 = vunpack.c.l.b16 %v760
        %v1586 = vunpack.c.l.b16 %v761
        %v1587 = vunpack.c.l.b16 %v762
        %v1588 = vunpack.c.l.b16 %v763
        %v1589 = vunpack.c.l.b16 %v764
        %v1590 = vunpack.c.l.b16 %v765
        %v1591 = vunpack.c.l.b16 %v766
        %v1592 = vunpack.c.l.b16 %v767
        %v1593 = vunpack.c.l.b16 %v768
        %v1594 = vunpack.c.l.b16 %v769
        %v1595 = vunpack.c.l.b16 %v770
        %v1596 = vunpack.c.l.b16 %v771
        %v1597 = vunpack.c.l.b16 %v772
        %v1598 = vunpack.c.l.b16 %v773
        %v1599 = vpack.c.b16 %v1584, %v1583
        %v1600 = vpack.c.b16 %v1586, %v1585
        %v1601 = vpack.c.b16 %v1588, %v1587
        %v1602 = vpack.c.b16 %v1590, %v1589
        %v1603 = vpack.c.b16 %v1592, %v1591
        %v1604 = vpack.c.b16 %v1594, %v1593
        %v1605 = vpack.c.b16 %v1596, %v1595
        %v1606 = vpack.c.b16 %v1598, %v1597
        %1615 = vmatprep.subr.bf16.mxu0 0
        %1616 = vmatpush1.bf16.msra.mxu0 %v1606
        %1617 = vmatprep.subr.bf16.mxu0 0
        %1618 = vmatpush1.bf16.msra.mxu0 %v1605
        %1619 = vmatprep.subr.bf16.mxu0 0
        %1620 = vmatpush1.bf16.msra.mxu0 %v1604
        %1621 = vmatprep.subr.bf16.mxu0 0
        %1622 = vmatpush1.bf16.msra.mxu0 %v1603
        %1623 = vmatprep.subr.bf16.mxu0 0
        %1624 = vmatpush1.bf16.msra.mxu0 %v1602
        %1625 = vmatprep.subr.bf16.mxu0 0
        %1626 = vmatpush1.bf16.msra.mxu0 %v1601
        %1627 = vmatprep.subr.bf16.mxu0 0
        %1628 = vmatpush1.bf16.msra.mxu0 %v1600
        %1629 = vmatprep.subr.bf16.mxu0 0
        %1630 = vmatpush1.bf16.msra.mxu0 %v1599
        %1631 = vmatprep.subr.bf16.mxu0 0
        %1632 = vmatpush2.bf16.msra.mxu0 0
        %1633 = vmatprep.subr.bf16.mxu0 0
        %1634 = vmatpush2.bf16.msra.mxu0 0
        %1635 = vmatprep.subr.bf16.mxu0 0
        %1636 = vmatpush2.bf16.msra.mxu0 0
        %1637 = vmatprep.subr.bf16.mxu0 0
        %1638 = vmatpush2.bf16.msra.mxu0 0
        %1639 = vmatprep.subr.bf16.mxu0 0
        %1640 = vmatpush2.bf16.msra.mxu0 0
        %1641 = vmatprep.subr.bf16.mxu0 0
        %1642 = vmatpush2.bf16.msra.mxu0 0
        %1643 = vmatprep.subr.bf16.mxu0 0
        %1644 = vmatpush2.bf16.msra.mxu0 0
        %1645 = vmatprep.subr.bf16.mxu0 0
        %1646 = vmatpush2.bf16.msra.mxu0 0
        %1647 = vmatprep.mubr.bf16.mxu0 0
        %1648 = vmatmul.mubr.bf16.gmra.mxu0 %v1559
        %v1649 = vpop.f32.mrf.mxu0
        %v1650 = vadd.f32 0.0, %v1649
        %v1651 = vpop.f32.mrf.mxu0
        %v1652 = vpop.f32.mrf.mxu0
        %v1653 = vadd.f32 0.0, %v1652
        %v1654 = vpop.f32.mrf.mxu0
        %1655 = vmatprep.mubr.bf16.mxu0 0
        %1656 = vmatmul.mubr.bf16.gmra.mxu0 %v1560
        %v1657 = vpop.f32.mrf.mxu0
        %v1658 = vadd.f32 0.0, %v1657
        %v1659 = vpop.f32.mrf.mxu0
        %v1660 = vpop.f32.mrf.mxu0
        %v1661 = vadd.f32 0.0, %v1660
        %v1662 = vpop.f32.mrf.mxu0
        %1663 = vmatprep.mubr.bf16.mxu0 0
        %1664 = vmatmul.mubr.bf16.gmra.mxu0 %v1561
        %v1665 = vpop.f32.mrf.mxu0
        %v1666 = vadd.f32 0.0, %v1665
        %v1667 = vpop.f32.mrf.mxu0
        %v1668 = vpop.f32.mrf.mxu0
        %v1669 = vadd.f32 0.0, %v1668
        %v1670 = vpop.f32.mrf.mxu0
        %1671 = vmatprep.mubr.bf16.mxu0 0
        %1672 = vmatmul.mubr.bf16.gmra.mxu0 %v1562
        %v1673 = vpop.f32.mrf.mxu0
        %v1674 = vadd.f32 0.0, %v1673
        %v1675 = vpop.f32.mrf.mxu0
        %v1676 = vpop.f32.mrf.mxu0
        %v1677 = vadd.f32 0.0, %v1676
        %v1678 = vpop.f32.mrf.mxu0
        %1679 = vdwg.mxu0
        %v1680 = vadd.f32 %v1535, %v1650
        %v1681 = vadd.f32 %v1536, %v1653
        %v1682 = vadd.f32 %v1537, %v1658
        %v1683 = vadd.f32 %v1538, %v1661
        %v1684 = vadd.f32 %v1539, %v1666
        %v1685 = vadd.f32 %v1540, %v1669
        %v1686 = vadd.f32 %v1541, %v1674
        %v1687 = vadd.f32 %v1542, %v1677
        %v1689 = vshrl.u32 %v854, 16
        %v1691 = vrot.slane %v1689, 4
        %v1692 = vshll.u32 %v854, 16
        %v1694 = vrot.slane %v1692, 5
        %v1695 = vor.u32 %v1691, %v1694
        %v1696 = vrot.slane %v1695, 4
        %v1698 = vshll.u32 %v855, 16
        %v1700 = vrot.slane %v1698, 5
        %v1701 = vsel %vm1148, %v1696, %v1700
        %v1703 = vshrl.u32 %v856, 16
        %v1705 = vrot.slane %v1703, 4
        %v1706 = vshll.u32 %v856, 16
        %v1708 = vrot.slane %v1706, 5
        %v1709 = vor.u32 %v1705, %v1708
        %v1710 = vrot.slane %v1709, 4
        %v1712 = vshll.u32 %v857, 16
        %v1714 = vrot.slane %v1712, 5
        %v1715 = vsel %vm1148, %v1710, %v1714
        %v1717 = vshrl.u32 %v858, 16
        %v1719 = vrot.slane %v1717, 4
        %v1720 = vshll.u32 %v858, 16
        %v1722 = vrot.slane %v1720, 5
        %v1723 = vor.u32 %v1719, %v1722
        %v1724 = vrot.slane %v1723, 4
        %v1726 = vshll.u32 %v859, 16
        %v1728 = vrot.slane %v1726, 5
        %v1729 = vsel %vm1148, %v1724, %v1728
        %v1731 = vshrl.u32 %v860, 16
        %v1733 = vrot.slane %v1731, 4
        %v1734 = vshll.u32 %v860, 16
        %v1736 = vrot.slane %v1734, 5
        %v1737 = vor.u32 %v1733, %v1736
        %v1738 = vrot.slane %v1737, 4
        %v1740 = vshll.u32 %v861, 16
        %v1742 = vrot.slane %v1740, 5
        %v1743 = vsel %vm1148, %v1738, %v1742
        %v1745 = vshrl.u32 %v862, 16
        %v1747 = vrot.slane %v1745, 4
        %v1748 = vshll.u32 %v862, 16
        %v1750 = vrot.slane %v1748, 5
        %v1751 = vor.u32 %v1747, %v1750
        %v1752 = vrot.slane %v1751, 4
        %v1754 = vshll.u32 %v863, 16
        %v1756 = vrot.slane %v1754, 5
        %v1757 = vsel %vm1148, %v1752, %v1756
        %v1759 = vshrl.u32 %v864, 16
        %v1761 = vrot.slane %v1759, 4
        %v1762 = vshll.u32 %v864, 16
        %v1764 = vrot.slane %v1762, 5
        %v1765 = vor.u32 %v1761, %v1764
        %v1766 = vrot.slane %v1765, 4
        %v1768 = vshll.u32 %v865, 16
        %v1770 = vrot.slane %v1768, 5
        %v1771 = vsel %vm1148, %v1766, %v1770
        %v1773 = vshrl.u32 %v866, 16
        %v1775 = vrot.slane %v1773, 4
        %v1776 = vshll.u32 %v866, 16
        %v1778 = vrot.slane %v1776, 5
        %v1779 = vor.u32 %v1775, %v1778
        %v1780 = vrot.slane %v1779, 4
        %v1782 = vshll.u32 %v867, 16
        %v1784 = vrot.slane %v1782, 5
        %v1785 = vsel %vm1148, %v1780, %v1784
        %v1787 = vshrl.u32 %v868, 16
        %v1789 = vrot.slane %v1787, 4
        %v1790 = vshll.u32 %v868, 16
        %v1792 = vrot.slane %v1790, 5
        %v1793 = vor.u32 %v1789, %v1792
        %v1794 = vrot.slane %v1793, 4
        %v1796 = vshll.u32 %v869, 16
        %v1798 = vrot.slane %v1796, 5
        %v1799 = vsel %vm1148, %v1794, %v1798
        %v1800 = vunpack.c.l.b16 %v1701
        %v1801 = vunpack.c.l.b16 %v1715
        %v1802 = vunpack.c.l.b16 %v1729
        %v1803 = vunpack.c.l.b16 %v1743
        %v1804 = vunpack.c.l.b16 %v1757
        %v1805 = vunpack.c.l.b16 %v1771
        %v1806 = vunpack.c.l.b16 %v1785
        %v1807 = vunpack.c.l.b16 %v1799
        %v1808 = vpack.c.b16 %v1801, %v1800
        %v1809 = vpack.c.b16 %v1803, %v1802
        %v1810 = vpack.c.b16 %v1805, %v1804
        %v1811 = vpack.c.b16 %v1807, %v1806
        %v1832 = vunpack.c.l.b16 %v774
        %v1833 = vunpack.c.l.b16 %v775
        %v1834 = vunpack.c.l.b16 %v776
        %v1835 = vunpack.c.l.b16 %v777
        %v1836 = vunpack.c.l.b16 %v778
        %v1837 = vunpack.c.l.b16 %v779
        %v1838 = vunpack.c.l.b16 %v780
        %v1839 = vunpack.c.l.b16 %v781
        %v1840 = vunpack.c.l.b16 %v782
        %v1841 = vunpack.c.l.b16 %v783
        %v1842 = vunpack.c.l.b16 %v784
        %v1843 = vunpack.c.l.b16 %v785
        %v1844 = vunpack.c.l.b16 %v786
        %v1845 = vunpack.c.l.b16 %v787
        %v1846 = vunpack.c.l.b16 %v788
        %v1847 = vunpack.c.l.b16 %v789
        %v1848 = vpack.c.b16 %v1833, %v1832
        %v1849 = vpack.c.b16 %v1835, %v1834
        %v1850 = vpack.c.b16 %v1837, %v1836
        %v1851 = vpack.c.b16 %v1839, %v1838
        %v1852 = vpack.c.b16 %v1841, %v1840
        %v1853 = vpack.c.b16 %v1843, %v1842
        %v1854 = vpack.c.b16 %v1845, %v1844
        %v1855 = vpack.c.b16 %v1847, %v1846
        %1864 = vmatprep.subr.bf16.mxu0 0
        %1865 = vmatpush1.bf16.msra.mxu0 %v1855
        %1866 = vmatprep.subr.bf16.mxu0 0
        %1867 = vmatpush1.bf16.msra.mxu0 %v1854
        %1868 = vmatprep.subr.bf16.mxu0 0
        %1869 = vmatpush1.bf16.msra.mxu0 %v1853
        %1870 = vmatprep.subr.bf16.mxu0 0
        %1871 = vmatpush1.bf16.msra.mxu0 %v1852
        %1872 = vmatprep.subr.bf16.mxu0 0
        %1873 = vmatpush1.bf16.msra.mxu0 %v1851
        %1874 = vmatprep.subr.bf16.mxu0 0
        %1875 = vmatpush1.bf16.msra.mxu0 %v1850
        %1876 = vmatprep.subr.bf16.mxu0 0
        %1877 = vmatpush1.bf16.msra.mxu0 %v1849
        %1878 = vmatprep.subr.bf16.mxu0 0
        %1879 = vmatpush1.bf16.msra.mxu0 %v1848
        %1880 = vmatprep.subr.bf16.mxu0 0
        %1881 = vmatpush2.bf16.msra.mxu0 0
        %1882 = vmatprep.subr.bf16.mxu0 0
        %1883 = vmatpush2.bf16.msra.mxu0 0
        %1884 = vmatprep.subr.bf16.mxu0 0
        %1885 = vmatpush2.bf16.msra.mxu0 0
        %1886 = vmatprep.subr.bf16.mxu0 0
        %1887 = vmatpush2.bf16.msra.mxu0 0
        %1888 = vmatprep.subr.bf16.mxu0 0
        %1889 = vmatpush2.bf16.msra.mxu0 0
        %1890 = vmatprep.subr.bf16.mxu0 0
        %1891 = vmatpush2.bf16.msra.mxu0 0
        %1892 = vmatprep.subr.bf16.mxu0 0
        %1893 = vmatpush2.bf16.msra.mxu0 0
        %1894 = vmatprep.subr.bf16.mxu0 0
        %1895 = vmatpush2.bf16.msra.mxu0 0
        %1896 = vmatprep.mubr.bf16.mxu0 0
        %1897 = vmatmul.mubr.bf16.gmra.mxu0 %v1808
        %v1898 = vpop.f32.mrf.mxu0
        %v1899 = vadd.f32 0.0, %v1898
        %v1900 = vpop.f32.mrf.mxu0
        %v1901 = vpop.f32.mrf.mxu0
        %v1902 = vadd.f32 0.0, %v1901
        %v1903 = vpop.f32.mrf.mxu0
        %1904 = vmatprep.mubr.bf16.mxu0 0
        %1905 = vmatmul.mubr.bf16.gmra.mxu0 %v1809
        %v1906 = vpop.f32.mrf.mxu0
        %v1907 = vadd.f32 0.0, %v1906
        %v1908 = vpop.f32.mrf.mxu0
        %v1909 = vpop.f32.mrf.mxu0
        %v1910 = vadd.f32 0.0, %v1909
        %v1911 = vpop.f32.mrf.mxu0
        %1912 = vmatprep.mubr.bf16.mxu0 0
        %1913 = vmatmul.mubr.bf16.gmra.mxu0 %v1810
        %v1914 = vpop.f32.mrf.mxu0
        %v1915 = vadd.f32 0.0, %v1914
        %v1916 = vpop.f32.mrf.mxu0
        %v1917 = vpop.f32.mrf.mxu0
        %v1918 = vadd.f32 0.0, %v1917
        %v1919 = vpop.f32.mrf.mxu0
        %1920 = vmatprep.mubr.bf16.mxu0 0
        %1921 = vmatmul.mubr.bf16.gmra.mxu0 %v1811
        %v1922 = vpop.f32.mrf.mxu0
        %v1923 = vadd.f32 0.0, %v1922
        %v1924 = vpop.f32.mrf.mxu0
        %v1925 = vpop.f32.mrf.mxu0
        %v1926 = vadd.f32 0.0, %v1925
        %v1927 = vpop.f32.mrf.mxu0
        %1928 = vdwg.mxu0
        %v1929 = vadd.f32 %v1680, %v1899
        %v1930 = vadd.f32 %v1681, %v1902
        %v1931 = vadd.f32 %v1682, %v1907
        %v1932 = vadd.f32 %v1683, %v1910
        %v1933 = vadd.f32 %v1684, %v1915
        %v1934 = vadd.f32 %v1685, %v1918
        %v1935 = vadd.f32 %v1686, %v1923
        %v1936 = vadd.f32 %v1687, %v1926
        %v1938 = vunpack.c.l.b16 %v870
        %v1939 = vpack.c.b16 %v1019, %v1018
        %v1940 = vpack.c.b16 %v1021, %v1020
        %v1941 = vpack.c.b16 %v1023, %v1022
        %v1942 = vpack.c.b16 %v1938, %v1024
        %v1963 = vunpack.c.l.b16 %v790
        %v1964 = vunpack.c.l.b16 %v791
        %v1965 = vunpack.c.l.b16 %v792
        %v1966 = vunpack.c.l.b16 %v793
        %v1967 = vunpack.c.l.b16 %v794
        %v1968 = vunpack.c.l.b16 %v795
        %v1969 = vunpack.c.l.b16 %v796
        %v1970 = vunpack.c.l.b16 %v797
        %v1971 = vunpack.c.l.b16 %v798
        %v1972 = vunpack.c.l.b16 %v799
        %v1973 = vunpack.c.l.b16 %v800
        %v1974 = vunpack.c.l.b16 %v801
        %v1975 = vunpack.c.l.b16 %v802
        %v1976 = vunpack.c.l.b16 %v803
        %v1977 = vunpack.c.l.b16 %v804
        %v1978 = vunpack.c.l.b16 %v805
        %v1979 = vpack.c.b16 %v1964, %v1963
        %v1980 = vpack.c.b16 %v1966, %v1965
        %v1981 = vpack.c.b16 %v1968, %v1967
        %v1982 = vpack.c.b16 %v1970, %v1969
        %v1983 = vpack.c.b16 %v1972, %v1971
        %v1984 = vpack.c.b16 %v1974, %v1973
        %v1985 = vpack.c.b16 %v1976, %v1975
        %v1986 = vpack.c.b16 %v1978, %v1977
        %1995 = vmatprep.subr.bf16.mxu0 0
        %1996 = vmatpush1.bf16.msra.mxu0 %v1986
        %1997 = vmatprep.subr.bf16.mxu0 0
        %1998 = vmatpush1.bf16.msra.mxu0 %v1985
        %1999 = vmatprep.subr.bf16.mxu0 0
        %2000 = vmatpush1.bf16.msra.mxu0 %v1984
        %2001 = vmatprep.subr.bf16.mxu0 0
        %2002 = vmatpush1.bf16.msra.mxu0 %v1983
        %2003 = vmatprep.subr.bf16.mxu0 0
        %2004 = vmatpush1.bf16.msra.mxu0 %v1982
        %2005 = vmatprep.subr.bf16.mxu0 0
        %2006 = vmatpush1.bf16.msra.mxu0 %v1981
        %2007 = vmatprep.subr.bf16.mxu0 0
        %2008 = vmatpush1.bf16.msra.mxu0 %v1980
        %2009 = vmatprep.subr.bf16.mxu0 0
        %2010 = vmatpush1.bf16.msra.mxu0 %v1979
        %2011 = vmatprep.subr.bf16.mxu0 0
        %2012 = vmatpush2.bf16.msra.mxu0 0
        %2013 = vmatprep.subr.bf16.mxu0 0
        %2014 = vmatpush2.bf16.msra.mxu0 0
        %2015 = vmatprep.subr.bf16.mxu0 0
        %2016 = vmatpush2.bf16.msra.mxu0 0
        %2017 = vmatprep.subr.bf16.mxu0 0
        %2018 = vmatpush2.bf16.msra.mxu0 0
        %2019 = vmatprep.subr.bf16.mxu0 0
        %2020 = vmatpush2.bf16.msra.mxu0 0
        %2021 = vmatprep.subr.bf16.mxu0 0
        %2022 = vmatpush2.bf16.msra.mxu0 0
        %2023 = vmatprep.subr.bf16.mxu0 0
        %2024 = vmatpush2.bf16.msra.mxu0 0
        %2025 = vmatprep.subr.bf16.mxu0 0
        %2026 = vmatpush2.bf16.msra.mxu0 0
        %2027 = vmatprep.mubr.bf16.mxu0 0
        %2028 = vmatmul.mubr.bf16.gmra.mxu0 %v1939
        %v2029 = vpop.f32.mrf.mxu0
        %v2030 = vadd.f32 0.0, %v2029
        %v2031 = vpop.f32.mrf.mxu0
        %v2032 = vpop.f32.mrf.mxu0
        %v2033 = vadd.f32 0.0, %v2032
        %v2034 = vpop.f32.mrf.mxu0
        %2035 = vmatprep.mubr.bf16.mxu0 0
        %2036 = vmatmul.mubr.bf16.gmra.mxu0 %v1940
        %v2037 = vpop.f32.mrf.mxu0
        %v2038 = vadd.f32 0.0, %v2037
        %v2039 = vpop.f32.mrf.mxu0
        %v2040 = vpop.f32.mrf.mxu0
        %v2041 = vadd.f32 0.0, %v2040
        %v2042 = vpop.f32.mrf.mxu0
        %2043 = vmatprep.mubr.bf16.mxu0 0
        %2044 = vmatmul.mubr.bf16.gmra.mxu0 %v1941
        %v2045 = vpop.f32.mrf.mxu0
        %v2046 = vadd.f32 0.0, %v2045
        %v2047 = vpop.f32.mrf.mxu0
        %v2048 = vpop.f32.mrf.mxu0
        %v2049 = vadd.f32 0.0, %v2048
        %v2050 = vpop.f32.mrf.mxu0
        %2051 = vmatprep.mubr.bf16.mxu0 0
        %2052 = vmatmul.mubr.bf16.gmra.mxu0 %v1942
        %v2053 = vpop.f32.mrf.mxu0
        %v2054 = vadd.f32 0.0, %v2053
        %v2055 = vpop.f32.mrf.mxu0
        %v2056 = vpop.f32.mrf.mxu0
        %v2057 = vadd.f32 0.0, %v2056
        %v2058 = vpop.f32.mrf.mxu0
        %2059 = vdwg.mxu0
        %v2060 = vadd.f32 %v1929, %v2030
        %v2061 = vadd.f32 %v1930, %v2033
        %v2062 = vadd.f32 %v1931, %v2038
        %v2063 = vadd.f32 %v1932, %v2041
        %v2064 = vadd.f32 %v1933, %v2046
        %v2065 = vadd.f32 %v1934, %v2049
        %v2066 = vadd.f32 %v1935, %v2054
        %v2067 = vadd.f32 %v1936, %v2057
        %v2068 = vrot.slane %v870, 4
        %v2069 = vunpack.c.l.b16 %v2068
        %v2070 = vpack.c.b16 %v890, %v889
        %v2071 = vpack.c.b16 %v892, %v891
        %v2072 = vpack.c.b16 %v894, %v893
        %v2073 = vpack.c.b16 %v2069, %v895
        %v2094 = vunpack.c.l.b16 %v806
        %v2095 = vunpack.c.l.b16 %v807
        %v2096 = vunpack.c.l.b16 %v808
        %v2097 = vunpack.c.l.b16 %v809
        %v2098 = vunpack.c.l.b16 %v810
        %v2099 = vunpack.c.l.b16 %v811
        %v2100 = vunpack.c.l.b16 %v812
        %v2101 = vunpack.c.l.b16 %v813
        %v2102 = vunpack.c.l.b16 %v814
        %v2103 = vunpack.c.l.b16 %v815
        %v2104 = vunpack.c.l.b16 %v816
        %v2105 = vunpack.c.l.b16 %v817
        %v2106 = vunpack.c.l.b16 %v818
        %v2107 = vunpack.c.l.b16 %v819
        %v2108 = vunpack.c.l.b16 %v820
        %v2109 = vunpack.c.l.b16 %v821
        %v2110 = vpack.c.b16 %v2095, %v2094
        %v2111 = vpack.c.b16 %v2097, %v2096
        %v2112 = vpack.c.b16 %v2099, %v2098
        %v2113 = vpack.c.b16 %v2101, %v2100
        %v2114 = vpack.c.b16 %v2103, %v2102
        %v2115 = vpack.c.b16 %v2105, %v2104
        %v2116 = vpack.c.b16 %v2107, %v2106
        %v2117 = vpack.c.b16 %v2109, %v2108
        %2126 = vmatprep.subr.bf16.mxu0 0
        %2127 = vmatpush1.bf16.msra.mxu0 %v2117
        %2128 = vmatprep.subr.bf16.mxu0 0
        %2129 = vmatpush1.bf16.msra.mxu0 %v2116
        %2130 = vmatprep.subr.bf16.mxu0 0
        %2131 = vmatpush1.bf16.msra.mxu0 %v2115
        %2132 = vmatprep.subr.bf16.mxu0 0
        %2133 = vmatpush1.bf16.msra.mxu0 %v2114
        %2134 = vmatprep.subr.bf16.mxu0 0
        %2135 = vmatpush1.bf16.msra.mxu0 %v2113
        %2136 = vmatprep.subr.bf16.mxu0 0
        %2137 = vmatpush1.bf16.msra.mxu0 %v2112
        %2138 = vmatprep.subr.bf16.mxu0 0
        %2139 = vmatpush1.bf16.msra.mxu0 %v2111
        %2140 = vmatprep.subr.bf16.mxu0 0
        %2141 = vmatpush1.bf16.msra.mxu0 %v2110
        %2142 = vmatprep.subr.bf16.mxu0 0
        %2143 = vmatpush2.bf16.msra.mxu0 0
        %2144 = vmatprep.subr.bf16.mxu0 0
        %2145 = vmatpush2.bf16.msra.mxu0 0
        %2146 = vmatprep.subr.bf16.mxu0 0
        %2147 = vmatpush2.bf16.msra.mxu0 0
        %2148 = vmatprep.subr.bf16.mxu0 0
        %2149 = vmatpush2.bf16.msra.mxu0 0
        %2150 = vmatprep.subr.bf16.mxu0 0
        %2151 = vmatpush2.bf16.msra.mxu0 0
        %2152 = vmatprep.subr.bf16.mxu0 0
        %2153 = vmatpush2.bf16.msra.mxu0 0
        %2154 = vmatprep.subr.bf16.mxu0 0
        %2155 = vmatpush2.bf16.msra.mxu0 0
        %2156 = vmatprep.subr.bf16.mxu0 0
        %2157 = vmatpush2.bf16.msra.mxu0 0
        %2158 = vmatprep.mubr.bf16.mxu0 0
        %2159 = vmatmul.mubr.bf16.gmra.mxu0 %v2070
        %v2160 = vpop.f32.mrf.mxu0
        %v2161 = vadd.f32 0.0, %v2160
        %v2162 = vpop.f32.mrf.mxu0
        %v2163 = vpop.f32.mrf.mxu0
        %v2164 = vadd.f32 0.0, %v2163
        %v2165 = vpop.f32.mrf.mxu0
        %2166 = vmatprep.mubr.bf16.mxu0 0
        %2167 = vmatmul.mubr.bf16.gmra.mxu0 %v2071
        %v2168 = vpop.f32.mrf.mxu0
        %v2169 = vadd.f32 0.0, %v2168
        %v2170 = vpop.f32.mrf.mxu0
        %v2171 = vpop.f32.mrf.mxu0
        %v2172 = vadd.f32 0.0, %v2171
        %v2173 = vpop.f32.mrf.mxu0
        %2174 = vmatprep.mubr.bf16.mxu0 0
        %2175 = vmatmul.mubr.bf16.gmra.mxu0 %v2072
        %v2176 = vpop.f32.mrf.mxu0
        %v2177 = vadd.f32 0.0, %v2176
        %v2178 = vpop.f32.mrf.mxu0
        %v2179 = vpop.f32.mrf.mxu0
        %v2180 = vadd.f32 0.0, %v2179
        %v2181 = vpop.f32.mrf.mxu0
        %2182 = vmatprep.mubr.bf16.mxu0 0
        %2183 = vmatmul.mubr.bf16.gmra.mxu0 %v2073
        %v2184 = vpop.f32.mrf.mxu0
        %v2185 = vadd.f32 0.0, %v2184
        %v2186 = vpop.f32.mrf.mxu0
        %v2187 = vpop.f32.mrf.mxu0
        %v2188 = vadd.f32 0.0, %v2187
        %v2189 = vpop.f32.mrf.mxu0
        %2190 = vdwg.mxu0
        %v2191 = vadd.f32 %v2060, %v2161
        %v2192 = vadd.f32 %v2061, %v2164
        %v2193 = vadd.f32 %v2062, %v2169
        %v2194 = vadd.f32 %v2063, %v2172
        %v2195 = vadd.f32 %v2064, %v2177
        %v2196 = vadd.f32 %v2065, %v2180
        %v2197 = vadd.f32 %v2066, %v2185
        %v2198 = vadd.f32 %v2067, %v2188
        %v2200 = vshrl.u32 %v870, 16
        %v2202 = vrot.slane %v2200, 4
        %v2203 = vshll.u32 %v870, 16
        %v2205 = vrot.slane %v2203, 5
        %v2206 = vor.u32 %v2202, %v2205
        %v2207 = vrot.slane %v2206, 4
        %v2209 = vshll.u32 %v871, 16
        %v2211 = vrot.slane %v2209, 5
        %v2212 = vsel %vm1148, %v2207, %v2211
        %v2213 = vunpack.c.l.b16 %v2212
        %v2214 = vpack.c.b16 %v1263, %v1262
        %v2215 = vpack.c.b16 %v1265, %v1264
        %v2216 = vpack.c.b16 %v1267, %v1266
        %v2217 = vpack.c.b16 %v2213, %v1268
        %v2238 = vunpack.c.l.b16 %v822
        %v2239 = vunpack.c.l.b16 %v823
        %v2240 = vunpack.c.l.b16 %v824
        %v2241 = vunpack.c.l.b16 %v825
        %v2242 = vunpack.c.l.b16 %v826
        %v2243 = vunpack.c.l.b16 %v827
        %v2244 = vunpack.c.l.b16 %v828
        %v2245 = vunpack.c.l.b16 %v829
        %v2246 = vunpack.c.l.b16 %v830
        %v2247 = vunpack.c.l.b16 %v831
        %v2248 = vunpack.c.l.b16 %v832
        %v2249 = vunpack.c.l.b16 %v833
        %v2250 = vunpack.c.l.b16 %v834
        %v2251 = vunpack.c.l.b16 %v835
        %v2252 = vunpack.c.l.b16 %v836
        %v2253 = vunpack.c.l.b16 %v837
        %v2254 = vpack.c.b16 %v2239, %v2238
        %v2255 = vpack.c.b16 %v2241, %v2240
        %v2256 = vpack.c.b16 %v2243, %v2242
        %v2257 = vpack.c.b16 %v2245, %v2244
        %v2258 = vpack.c.b16 %v2247, %v2246
        %v2259 = vpack.c.b16 %v2249, %v2248
        %v2260 = vpack.c.b16 %v2251, %v2250
        %v2261 = vpack.c.b16 %v2253, %v2252
        %2270 = vmatprep.subr.bf16.mxu0 0
        %2271 = vmatpush1.bf16.msra.mxu0 %v2261
        %2272 = vmatprep.subr.bf16.mxu0 0
        %2273 = vmatpush1.bf16.msra.mxu0 %v2260
        %2274 = vmatprep.subr.bf16.mxu0 0
        %2275 = vmatpush1.bf16.msra.mxu0 %v2259
        %2276 = vmatprep.subr.bf16.mxu0 0
        %2277 = vmatpush1.bf16.msra.mxu0 %v2258
        %2278 = vmatprep.subr.bf16.mxu0 0
        %2279 = vmatpush1.bf16.msra.mxu0 %v2257
        %2280 = vmatprep.subr.bf16.mxu0 0
        %2281 = vmatpush1.bf16.msra.mxu0 %v2256
        %2282 = vmatprep.subr.bf16.mxu0 0
        %2283 = vmatpush1.bf16.msra.mxu0 %v2255
        %2284 = vmatprep.subr.bf16.mxu0 0
        %2285 = vmatpush1.bf16.msra.mxu0 %v2254
        %2286 = vmatprep.subr.bf16.mxu0 0
        %2287 = vmatpush2.bf16.msra.mxu0 0
        %2288 = vmatprep.subr.bf16.mxu0 0
        %2289 = vmatpush2.bf16.msra.mxu0 0
        %2290 = vmatprep.subr.bf16.mxu0 0
        %2291 = vmatpush2.bf16.msra.mxu0 0
        %2292 = vmatprep.subr.bf16.mxu0 0
        %2293 = vmatpush2.bf16.msra.mxu0 0
        %2294 = vmatprep.subr.bf16.mxu0 0
        %2295 = vmatpush2.bf16.msra.mxu0 0
        %2296 = vmatprep.subr.bf16.mxu0 0
        %2297 = vmatpush2.bf16.msra.mxu0 0
        %2298 = vmatprep.subr.bf16.mxu0 0
        %2299 = vmatpush2.bf16.msra.mxu0 0
        %2300 = vmatprep.subr.bf16.mxu0 0
        %2301 = vmatpush2.bf16.msra.mxu0 0
        %2302 = vmatprep.mubr.bf16.mxu0 0
        %2303 = vmatmul.mubr.bf16.gmra.mxu0 %v2214
        %v2304 = vpop.f32.mrf.mxu0
        %v2305 = vadd.f32 0.0, %v2304
        %v2306 = vpop.f32.mrf.mxu0
        %v2307 = vpop.f32.mrf.mxu0
        %v2308 = vadd.f32 0.0, %v2307
        %v2309 = vpop.f32.mrf.mxu0
        %2310 = vmatprep.mubr.bf16.mxu0 0
        %2311 = vmatmul.mubr.bf16.gmra.mxu0 %v2215
        %v2312 = vpop.f32.mrf.mxu0
        %v2313 = vadd.f32 0.0, %v2312
        %v2314 = vpop.f32.mrf.mxu0
        %v2315 = vpop.f32.mrf.mxu0
        %v2316 = vadd.f32 0.0, %v2315
        %v2317 = vpop.f32.mrf.mxu0
        %2318 = vmatprep.mubr.bf16.mxu0 0
        %2319 = vmatmul.mubr.bf16.gmra.mxu0 %v2216
        %v2320 = vpop.f32.mrf.mxu0
        %v2321 = vadd.f32 0.0, %v2320
        %v2322 = vpop.f32.mrf.mxu0
        %v2323 = vpop.f32.mrf.mxu0
        %v2324 = vadd.f32 0.0, %v2323
        %v2325 = vpop.f32.mrf.mxu0
        %2326 = vmatprep.mubr.bf16.mxu0 0
        %2327 = vmatmul.mubr.bf16.gmra.mxu0 %v2217
        %v2328 = vpop.f32.mrf.mxu0
        %v2329 = vadd.f32 0.0, %v2328
        %v2330 = vpop.f32.mrf.mxu0
        %v2331 = vpop.f32.mrf.mxu0
        %v2332 = vadd.f32 0.0, %v2331
        %v2333 = vpop.f32.mrf.mxu0
        %2334 = vdwg.mxu0
        %v2335 = vadd.f32 %v2191, %v2305
        %v2336 = vadd.f32 %v2192, %v2308
        %v2337 = vadd.f32 %v2193, %v2313
        %v2338 = vadd.f32 %v2194, %v2316
        %v2339 = vadd.f32 %v2195, %v2321
        %v2340 = vadd.f32 %v2196, %v2324
        %v2341 = vadd.f32 %v2197, %v2329
        %v2342 = vadd.f32 %v2198, %v2332
        %v2343 = vld [vmem:[%s4] sm:$0x1]
        %v2345 = vlaneseq
        %v2346 = vshrl.u32 %v2345, 7
        %v2347 = vsub.s32 0, %v2346
        %v2348 = vrot.slane %v2343, %v2347
        %v2350 = vadd.f32 %v2335, %v2348
        %v2351 = vadd.f32 %v2336, %v2348
        %v2352 = vadd.f32 %v2337, %v2348
        %v2353 = vadd.f32 %v2338, %v2348
        %v2354 = vadd.f32 %v2339, %v2348
        %v2355 = vadd.f32 %v2340, %v2348
        %v2356 = vadd.f32 %v2341, %v2348
        %v2357 = vadd.f32 %v2342, %v2348
        %v2358 = vmax.f32 %v2350, 0.0
        %v2359 = vmax.f32 %v2351, 0.0
        %v2360 = vmax.f32 %v2352, 0.0
        %v2361 = vmax.f32 %v2353, 0.0
        %v2362 = vmax.f32 %v2354, 0.0
        %v2363 = vmax.f32 %v2355, 0.0
        %v2364 = vmax.f32 %v2356, 0.0
        %v2365 = vmax.f32 %v2357, 0.0
        %v2366 = vpack.c.bf16 %v2358, %v2358
        %v2367 = vpack.c.bf16 %v2359, %v2359
        %v2368 = vpack.c.bf16 %v2360, %v2360
        %v2369 = vpack.c.bf16 %v2361, %v2361
        %v2370 = vpack.c.bf16 %v2362, %v2362
        %v2371 = vpack.c.bf16 %v2363, %v2363
        %v2372 = vpack.c.bf16 %v2364, %v2364
        %v2373 = vpack.c.bf16 %v2365, %v2365
        %2374 = vst [vmem:[%s691] sm:$0xf] %v2366
        %2375 = vst [vmem:[%s691 + $0x4] sm:$0xf] %v2367
        %2376 = vst [vmem:[%s691 + $0x8] sm:$0xf] %v2368
        %2377 = vst [vmem:[%s691 + $0xc] sm:$0xf] %v2369
        %2378 = vst [vmem:[%s691 + $0x10] sm:$0xf] %v2370
        %2379 = vst [vmem:[%s691 + $0x14] sm:$0xf] %v2371
        %2380 = vst [vmem:[%s691 + $0x18] sm:$0xf] %v2372
        %2381 = vst [vmem:[%s691 + $0x1c] sm:$0xf] %v2373
        %s2382 = smul.u32 8, %s21
        %p2383 = scmp.lt.s32.totalorder %s20, 1
        %s2384 = scalar_select %p2383, %s20, 1
        %p2385 = scmp.lt.s32.totalorder %s2382, 7
        %s2386 = scalar_select %p2385, %s2382, 7
        %s2387 = smul.addr %s2384, 8
        %s2388 = sadd.s32 %s2386, %s2387
        %s2389 = smul.addr %s2388, 4
        %s2390 = scalar_lea.vmem %s5, %s2389
        // Predicated region
        $region145: #{bottleneck_forward.4} parent=135 // pred_check
          %p2391 = pneg %p178
        $region146: #{bottleneck_forward.4} parent=135 // pred_check_branch
          %2393 = sbr.rel (%p2391) target = $region148
        $region147: #{bottleneck_forward.4} parent=135 // pred_region
          %s2394 = smul.u32 8, %s21
        $region148: #{bottleneck_forward.4} parent=135 // pred_fallthru
          _
      $region136: #{bottleneck_forward.4} parent=5 // pred_fallthru
        _
      %p2395 = scmp.le.s32.totalorder 2, %s11
      // Predicated region
      $region149: #{bottleneck_forward.4} parent=5 // pred_check
        %p2396 = pneg %p2395
      $region150: #{bottleneck_forward.4} parent=5 // pred_check_branch
        %2398 = sbr.rel (%p2396) target = $region152
      $region151: #{bottleneck_forward.4} parent=5 // pred_region
        %s2399 = ssub.s32 %s11, 2
        // Predicated region
        $region153: #{bottleneck_forward.4} parent=151 // pred_check
          %p2400 = pneg %p184
        $region154: #{bottleneck_forward.4} parent=151 // pred_check_branch
          %2402 = sbr.rel (%p2400) target = $region156
        $region155: #{bottleneck_forward.4} parent=151 // pred_region
          %s2403 = smul.u32 8, %s23
          %p2404 = scmp.lt.s32.totalorder %s22, 1
          %s2405 = scalar_select %p2404, %s22, 1
          %p2406 = scmp.lt.s32.totalorder %s2403, 7
          %s2407 = scalar_select %p2406, %s2403, 7
          %s2408 = smul.addr %s2405, 8
          %s2409 = sadd.s32 %s2407, %s2408
          %s2410 = smul.addr %s2409, 4
          %s2411 = scalar_lea.vmem %s5, %s2410
        $region156: #{bottleneck_forward.4} parent=151 // pred_fallthru
          _
      $region152: #{bottleneck_forward.4} parent=5 // pred_fallthru
        _
    $region6: #{bottleneck_forward.4} parent=1 // loop_footer
      %s15 = sadd.s32 1, %s11
    $region7: #{bottleneck_forward.4} parent=1 // loop_footer_branch
      %10 = sbr.rel target = $region3
    $region8: #{bottleneck_forward.4} parent=1 // loop_exit
      _

// kernel: bottleneck_forward.5
$region0: #{bottleneck_forward.5}
  #allocation0 [shape = 'u32[]', space=smem, size = 0x4, offset = 0x4, fixed_abs, tag = 'smem constant byte address 0x4 - core index']
  #allocation1 [shape = 'u32[144,128]{1,0:T(1,128)}', space=vmem, size = 0x12000, scoped, tag = 'internal scratch']
  %s0 = inlined_call_operand.vmem [shape: bf16[128,128], index: 0, kind: input, shape index: {}]
  %s1 = inlined_call_operand.vmem [shape: bf16[128,128], index: 1, kind: input, shape index: {}]
  %s2 = inlined_call_operand.vmem [shape: bf16[128,128], index: 2, kind: input, shape index: {}]
  %s3 = inlined_call_operand.vmem [shape: bf16[128,128], index: 3, kind: input, shape index: {}]
  %s4 = inlined_call_operand.vmem [shape: f32[1,128], index: 4, kind: input, shape index: {}]
  %s5 = inlined_call_operand.vmem [shape: f32[128,128], index: 5, kind: output, shape index: {}]
  %s6 = sld [smem:[#allocation0]]
  $region30: #{bottleneck_forward.5} parent=0
    _
  %s8 = ssub.s32 1, %s6
  %s9 = scalar_select 0, %s8, %s6
  // Predicated region
  $region2: #{bottleneck_forward.5} parent=0 // pred_check
    _
  $region3: #{bottleneck_forward.5} parent=0 // pred_check_branch
    %11 = sbr.rel (0) target = $region5
  $region4: #{bottleneck_forward.5} parent=0 // pred_region
    _
  $region5: #{bottleneck_forward.5} parent=0 // pred_fallthru
    _
  // Predicated region
  $region6: #{bottleneck_forward.5} parent=0 // pred_check
    _
  $region7: #{bottleneck_forward.5} parent=0 // pred_check_branch
    %13 = sbr.rel (0) target = $region9
  $region8: #{bottleneck_forward.5} parent=0 // pred_region
    _
  $region9: #{bottleneck_forward.5} parent=0 // pred_fallthru
    _
  // Predicated region
  $region10: #{bottleneck_forward.5} parent=0 // pred_check
    _
  $region11: #{bottleneck_forward.5} parent=0 // pred_check_branch
    %15 = sbr.rel (0) target = $region13
  $region12: #{bottleneck_forward.5} parent=0 // pred_region
    _
  $region13: #{bottleneck_forward.5} parent=0 // pred_fallthru
    _
  // Predicated region
  $region14: #{bottleneck_forward.5} parent=0 // pred_check
    _
  $region15: #{bottleneck_forward.5} parent=0 // pred_check_branch
    %17 = sbr.rel (0) target = $region17
  $region16: #{bottleneck_forward.5} parent=0 // pred_region
    _
  $region17: #{bottleneck_forward.5} parent=0 // pred_fallthru
    _
  // Predicated region
  $region18: #{bottleneck_forward.5} parent=0 // pred_check
    _
  $region19: #{bottleneck_forward.5} parent=0 // pred_check_branch
    %19 = sbr.rel (0) target = $region21
  $region20: #{bottleneck_forward.5} parent=0 // pred_region
    _
  $region21: #{bottleneck_forward.5} parent=0 // pred_fallthru
    _
  %v21 = vld [vmem:[%s0] sm:$0xf]
  %v22 = vld [vmem:[%s0 + $0x4] sm:$0xf]
  %v23 = vld [vmem:[%s0 + $0x8] sm:$0xf]
  %v24 = vld [vmem:[%s0 + $0xc] sm:$0xf]
  %v25 = vld [vmem:[%s0 + $0x10] sm:$0xf]
  %v26 = vld [vmem:[%s0 + $0x14] sm:$0xf]
  %v27 = vld [vmem:[%s0 + $0x18] sm:$0xf]
  %v28 = vld [vmem:[%s0 + $0x1c] sm:$0xf]
  %v29 = vld [vmem:[%s0 + $0x20] sm:$0xf]
  %v30 = vld [vmem:[%s0 + $0x24] sm:$0xf]
  %v31 = vld [vmem:[%s0 + $0x28] sm:$0xf]
  %v32 = vld [vmem:[%s0 + $0x2c] sm:$0xf]
  %v33 = vld [vmem:[%s0 + $0x30] sm:$0xf]
  %v34 = vld [vmem:[%s0 + $0x34] sm:$0xf]
  %v35 = vld [vmem:[%s0 + $0x38] sm:$0xf]
  %v36 = vld [vmem:[%s0 + $0x3c] sm:$0xf]
  %v37 = vld [vmem:[%s1] sm:$0xf]
  %v38 = vld [vmem:[%s1 + $0x4] sm:$0xf]
  %v39 = vld [vmem:[%s1 + $0x8] sm:$0xf]
  %v40 = vld [vmem:[%s1 + $0xc] sm:$0xf]
  %v41 = vld [vmem:[%s1 + $0x10] sm:$0xf]
  %v42 = vld [vmem:[%s1 + $0x14] sm:$0xf]
  %v43 = vld [vmem:[%s1 + $0x18] sm:$0xf]
  %v44 = vld [vmem:[%s1 + $0x1c] sm:$0xf]
  %v45 = vld [vmem:[%s1 + $0x20] sm:$0xf]
  %v46 = vld [vmem:[%s1 + $0x24] sm:$0xf]
  %v47 = vld [vmem:[%s1 + $0x28] sm:$0xf]
  %v48 = vld [vmem:[%s1 + $0x2c] sm:$0xf]
  %v49 = vld [vmem:[%s1 + $0x30] sm:$0xf]
  %v50 = vld [vmem:[%s1 + $0x34] sm:$0xf]
  %v51 = vld [vmem:[%s1 + $0x38] sm:$0xf]
  %v52 = vld [vmem:[%s1 + $0x3c] sm:$0xf]
  %v53 = vld [vmem:[%s2] sm:$0xf]
  %v54 = vld [vmem:[%s2 + $0x4] sm:$0xf]
  %v55 = vld [vmem:[%s2 + $0x8] sm:$0xf]
  %v56 = vld [vmem:[%s2 + $0xc] sm:$0xf]
  %v57 = vld [vmem:[%s2 + $0x10] sm:$0xf]
  %v58 = vld [vmem:[%s2 + $0x14] sm:$0xf]
  %v59 = vld [vmem:[%s2 + $0x18] sm:$0xf]
  %v60 = vld [vmem:[%s2 + $0x1c] sm:$0xf]
  %v61 = vld [vmem:[%s2 + $0x20] sm:$0xf]
  %v62 = vld [vmem:[%s2 + $0x24] sm:$0xf]
  %v63 = vld [vmem:[%s2 + $0x28] sm:$0xf]
  %v64 = vld [vmem:[%s2 + $0x2c] sm:$0xf]
  %v65 = vld [vmem:[%s2 + $0x30] sm:$0xf]
  %v66 = vld [vmem:[%s2 + $0x34] sm:$0xf]
  %v67 = vld [vmem:[%s2 + $0x38] sm:$0xf]
  %v68 = vld [vmem:[%s2 + $0x3c] sm:$0xf]
  %v69 = vld [vmem:[%s3] sm:$0xf]
  %v70 = vld [vmem:[%s3 + $0x4] sm:$0xf]
  %v71 = vld [vmem:[%s3 + $0x8] sm:$0xf]
  %v72 = vld [vmem:[%s3 + $0xc] sm:$0xf]
  %v73 = vld [vmem:[%s3 + $0x10] sm:$0xf]
  %v74 = vld [vmem:[%s3 + $0x14] sm:$0xf]
  %v75 = vld [vmem:[%s3 + $0x18] sm:$0xf]
  %v76 = vld [vmem:[%s3 + $0x1c] sm:$0xf]
  %v77 = vld [vmem:[%s3 + $0x20] sm:$0xf]
  %v78 = vld [vmem:[%s3 + $0x24] sm:$0xf]
  %v79 = vld [vmem:[%s3 + $0x28] sm:$0xf]
  %v80 = vld [vmem:[%s3 + $0x2c] sm:$0xf]
  %v81 = vld [vmem:[%s3 + $0x30] sm:$0xf]
  %v82 = vld [vmem:[%s3 + $0x34] sm:$0xf]
  %v83 = vld [vmem:[%s3 + $0x38] sm:$0xf]
  %v84 = vld [vmem:[%s3 + $0x3c] sm:$0xf]
  %v101 = vunpack.c.l.b16 %v53
  %v102 = vunpack.c.l.b16 %v54
  %v103 = vunpack.c.l.b16 %v55
  %v104 = vunpack.c.l.b16 %v56
  %v105 = vunpack.c.l.b16 %v57
  %v106 = vunpack.c.l.b16 %v58
  %v107 = vunpack.c.l.b16 %v59
  %v108 = vunpack.c.l.b16 %v60
  %v109 = vunpack.c.l.b16 %v61
  %v110 = vunpack.c.l.b16 %v62
  %v111 = vunpack.c.l.b16 %v63
  %v112 = vunpack.c.l.b16 %v64
  %v113 = vunpack.c.l.b16 %v65
  %v114 = vunpack.c.l.b16 %v66
  %v115 = vunpack.c.l.b16 %v67
  %v116 = vunpack.c.l.b16 %v68
  %v117 = vpack.c.b16 %v102, %v101
  %v118 = vpack.c.b16 %v104, %v103
  %v119 = vpack.c.b16 %v106, %v105
  %v120 = vpack.c.b16 %v108, %v107
  %v121 = vpack.c.b16 %v110, %v109
  %v122 = vpack.c.b16 %v112, %v111
  %v123 = vpack.c.b16 %v114, %v113
  %v124 = vpack.c.b16 %v116, %v115
  %v149 = vunpack.c.l.b16 %v69
  %v150 = vunpack.c.l.b16 %v70
  %v151 = vunpack.c.l.b16 %v71
  %v152 = vunpack.c.l.b16 %v72
  %v153 = vunpack.c.l.b16 %v73
  %v154 = vunpack.c.l.b16 %v74
  %v155 = vunpack.c.l.b16 %v75
  %v156 = vunpack.c.l.b16 %v76
  %v157 = vunpack.c.l.b16 %v77
  %v158 = vunpack.c.l.b16 %v78
  %v159 = vunpack.c.l.b16 %v79
  %v160 = vunpack.c.l.b16 %v80
  %v161 = vunpack.c.l.b16 %v81
  %v162 = vunpack.c.l.b16 %v82
  %v163 = vunpack.c.l.b16 %v83
  %v164 = vunpack.c.l.b16 %v84
  %v165 = vpack.c.b16 %v150, %v149
  %v166 = vpack.c.b16 %v152, %v151
  %v167 = vpack.c.b16 %v154, %v153
  %v168 = vpack.c.b16 %v156, %v155
  %v169 = vpack.c.b16 %v158, %v157
  %v170 = vpack.c.b16 %v160, %v159
  %v171 = vpack.c.b16 %v162, %v161
  %v172 = vpack.c.b16 %v164, %v163
  %181 = vmatprep.subr.bf16.mxu0 0
  %182 = vmatpush1.bf16.msra.mxu0 %v172
  %183 = vmatprep.subr.bf16.mxu0 0
  %184 = vmatpush1.bf16.msra.mxu0 %v171
  %185 = vmatprep.subr.bf16.mxu0 0
  %186 = vmatpush1.bf16.msra.mxu0 %v170
  %187 = vmatprep.subr.bf16.mxu0 0
  %188 = vmatpush1.bf16.msra.mxu0 %v169
  %189 = vmatprep.subr.bf16.mxu0 0
  %190 = vmatpush1.bf16.msra.mxu0 %v168
  %191 = vmatprep.subr.bf16.mxu0 0
  %192 = vmatpush1.bf16.msra.mxu0 %v167
  %193 = vmatprep.subr.bf16.mxu0 0
  %194 = vmatpush1.bf16.msra.mxu0 %v166
  %195 = vmatprep.subr.bf16.mxu0 0
  %196 = vmatpush1.bf16.msra.mxu0 %v165
  %197 = vmatprep.subr.bf16.mxu0 0
  %198 = vmatpush2.bf16.msra.mxu0 0
  %199 = vmatprep.subr.bf16.mxu0 0
  %200 = vmatpush2.bf16.msra.mxu0 0
  %201 = vmatprep.subr.bf16.mxu0 0
  %202 = vmatpush2.bf16.msra.mxu0 0
  %203 = vmatprep.subr.bf16.mxu0 0
  %204 = vmatpush2.bf16.msra.mxu0 0
  %205 = vmatprep.subr.bf16.mxu0 0
  %206 = vmatpush2.bf16.msra.mxu0 0
  %207 = vmatprep.subr.bf16.mxu0 0
  %208 = vmatpush2.bf16.msra.mxu0 0
  %209 = vmatprep.subr.bf16.mxu0 0
  %210 = vmatpush2.bf16.msra.mxu0 0
  %211 = vmatprep.subr.bf16.mxu0 0
  %212 = vmatpush2.bf16.msra.mxu0 0
  %213 = vmatprep.mubr.bf16.mxu0 0
  %214 = vmatmul.mubr.bf16.gmra.mxu0 %v117
  %v215 = vpop.f32.mrf.mxu0
  %v216 = vadd.f32 0.0, %v215
  %v217 = vpop.f32.mrf.mxu0
  %v218 = vpop.f32.mrf.mxu0
  %v219 = vadd.f32 0.0, %v218
  %v220 = vpop.f32.mrf.mxu0
  %221 = vmatprep.mubr.bf16.mxu0 0
  %222 = vmatmul.mubr.bf16.gmra.mxu0 %v118
  %v223 = vpop.f32.mrf.mxu0
  %v224 = vadd.f32 0.0, %v223
  %v225 = vpop.f32.mrf.mxu0
  %v226 = vpop.f32.mrf.mxu0
  %v227 = vadd.f32 0.0, %v226
  %v228 = vpop.f32.mrf.mxu0
  %229 = vmatprep.mubr.bf16.mxu0 0
  %230 = vmatmul.mubr.bf16.gmra.mxu0 %v119
  %v231 = vpop.f32.mrf.mxu0
  %v232 = vadd.f32 0.0, %v231
  %v233 = vpop.f32.mrf.mxu0
  %v234 = vpop.f32.mrf.mxu0
  %v235 = vadd.f32 0.0, %v234
  %v236 = vpop.f32.mrf.mxu0
  %237 = vmatprep.mubr.bf16.mxu0 0
  %238 = vmatmul.mubr.bf16.gmra.mxu0 %v120
  %v239 = vpop.f32.mrf.mxu0
  %v240 = vadd.f32 0.0, %v239
  %v241 = vpop.f32.mrf.mxu0
  %v242 = vpop.f32.mrf.mxu0
  %v243 = vadd.f32 0.0, %v242
  %v244 = vpop.f32.mrf.mxu0
  %245 = vmatprep.mubr.bf16.mxu0 0
  %246 = vmatmul.mubr.bf16.gmra.mxu0 %v121
  %v247 = vpop.f32.mrf.mxu0
  %v248 = vadd.f32 0.0, %v247
  %v249 = vpop.f32.mrf.mxu0
  %v250 = vpop.f32.mrf.mxu0
  %v251 = vadd.f32 0.0, %v250
  %v252 = vpop.f32.mrf.mxu0
  %253 = vmatprep.mubr.bf16.mxu0 0
  %254 = vmatmul.mubr.bf16.gmra.mxu0 %v122
  %v255 = vpop.f32.mrf.mxu0
  %v256 = vadd.f32 0.0, %v255
  %v257 = vpop.f32.mrf.mxu0
  %v258 = vpop.f32.mrf.mxu0
  %v259 = vadd.f32 0.0, %v258
  %v260 = vpop.f32.mrf.mxu0
  %261 = vmatprep.mubr.bf16.mxu0 0
  %262 = vmatmul.mubr.bf16.gmra.mxu0 %v123
  %v263 = vpop.f32.mrf.mxu0
  %v264 = vadd.f32 0.0, %v263
  %v265 = vpop.f32.mrf.mxu0
  %v266 = vpop.f32.mrf.mxu0
  %v267 = vadd.f32 0.0, %v266
  %v268 = vpop.f32.mrf.mxu0
  %269 = vmatprep.mubr.bf16.mxu0 0
  %270 = vmatmul.mubr.bf16.gmra.mxu0 %v124
  %v271 = vpop.f32.mrf.mxu0
  %v272 = vadd.f32 0.0, %v271
  %v273 = vpop.f32.mrf.mxu0
  %v274 = vpop.f32.mrf.mxu0
  %v275 = vadd.f32 0.0, %v274
  %v276 = vpop.f32.mrf.mxu0
  %277 = vdwg.mxu0
  %v294 = vunpack.c.l.b16 %v21
  %v295 = vunpack.c.l.b16 %v22
  %v296 = vunpack.c.l.b16 %v23
  %v297 = vunpack.c.l.b16 %v24
  %v298 = vunpack.c.l.b16 %v25
  %v299 = vunpack.c.l.b16 %v26
  %v300 = vunpack.c.l.b16 %v27
  %v301 = vunpack.c.l.b16 %v28
  %v302 = vunpack.c.l.b16 %v29
  %v303 = vunpack.c.l.b16 %v30
  %v304 = vunpack.c.l.b16 %v31
  %v305 = vunpack.c.l.b16 %v32
  %v306 = vunpack.c.l.b16 %v33
  %v307 = vunpack.c.l.b16 %v34
  %v308 = vunpack.c.l.b16 %v35
  %v309 = vunpack.c.l.b16 %v36
  %v310 = vpack.c.b16 %v295, %v294
  %v311 = vpack.c.b16 %v297, %v296
  %v312 = vpack.c.b16 %v299, %v298
  %v313 = vpack.c.b16 %v301, %v300
  %v314 = vpack.c.b16 %v303, %v302
  %v315 = vpack.c.b16 %v305, %v304
  %v316 = vpack.c.b16 %v307, %v306
  %v317 = vpack.c.b16 %v309, %v308
  %v342 = vunpack.c.l.b16 %v37
  %v343 = vunpack.c.l.b16 %v38
  %v344 = vunpack.c.l.b16 %v39
  %v345 = vunpack.c.l.b16 %v40
  %v346 = vunpack.c.l.b16 %v41
  %v347 = vunpack.c.l.b16 %v42
  %v348 = vunpack.c.l.b16 %v43
  %v349 = vunpack.c.l.b16 %v44
  %v350 = vunpack.c.l.b16 %v45
  %v351 = vunpack.c.l.b16 %v46
  %v352 = vunpack.c.l.b16 %v47
  %v353 = vunpack.c.l.b16 %v48
  %v354 = vunpack.c.l.b16 %v49
  %v355 = vunpack.c.l.b16 %v50
  %v356 = vunpack.c.l.b16 %v51
  %v357 = vunpack.c.l.b16 %v52
  %v358 = vpack.c.b16 %v343, %v342
  %v359 = vpack.c.b16 %v345, %v344
  %v360 = vpack.c.b16 %v347, %v346
  %v361 = vpack.c.b16 %v349, %v348
  %v362 = vpack.c.b16 %v351, %v350
  %v363 = vpack.c.b16 %v353, %v352
  %v364 = vpack.c.b16 %v355, %v354
  %v365 = vpack.c.b16 %v357, %v356
  %374 = vmatprep.subr.bf16.mxu0 0
  %375 = vmatpush1.bf16.msra.mxu0 %v365
  %376 = vmatprep.subr.bf16.mxu0 0
  %377 = vmatpush1.bf16.msra.mxu0 %v364
  %378 = vmatprep.subr.bf16.mxu0 0
  %379 = vmatpush1.bf16.msra.mxu0 %v363
  %380 = vmatprep.subr.bf16.mxu0 0
  %381 = vmatpush1.bf16.msra.mxu0 %v362
  %382 = vmatprep.subr.bf16.mxu0 0
  %383 = vmatpush1.bf16.msra.mxu0 %v361
  %384 = vmatprep.subr.bf16.mxu0 0
  %385 = vmatpush1.bf16.msra.mxu0 %v360
  %386 = vmatprep.subr.bf16.mxu0 0
  %387 = vmatpush1.bf16.msra.mxu0 %v359
  %388 = vmatprep.subr.bf16.mxu0 0
  %389 = vmatpush1.bf16.msra.mxu0 %v358
  %390 = vmatprep.subr.bf16.mxu0 0
  %391 = vmatpush2.bf16.msra.mxu0 0
  %392 = vmatprep.subr.bf16.mxu0 0
  %393 = vmatpush2.bf16.msra.mxu0 0
  %394 = vmatprep.subr.bf16.mxu0 0
  %395 = vmatpush2.bf16.msra.mxu0 0
  %396 = vmatprep.subr.bf16.mxu0 0
  %397 = vmatpush2.bf16.msra.mxu0 0
  %398 = vmatprep.subr.bf16.mxu0 0
  %399 = vmatpush2.bf16.msra.mxu0 0
  %400 = vmatprep.subr.bf16.mxu0 0
  %401 = vmatpush2.bf16.msra.mxu0 0
  %402 = vmatprep.subr.bf16.mxu0 0
  %403 = vmatpush2.bf16.msra.mxu0 0
  %404 = vmatprep.subr.bf16.mxu0 0
  %405 = vmatpush2.bf16.msra.mxu0 0
  %406 = vmatprep.mubr.bf16.mxu0 0
  %407 = vmatmul.mubr.bf16.gmra.mxu0 %v310
  %v408 = vpop.f32.mrf.mxu0
  %v409 = vadd.f32 %v216, %v408
  %v410 = vpop.f32.mrf.mxu0
  %v411 = vpop.f32.mrf.mxu0
  %v412 = vadd.f32 %v219, %v411
  %v413 = vpop.f32.mrf.mxu0
  %414 = vmatprep.mubr.bf16.mxu0 0
  %415 = vmatmul.mubr.bf16.gmra.mxu0 %v311
  %v416 = vpop.f32.mrf.mxu0
  %v417 = vadd.f32 %v224, %v416
  %v418 = vpop.f32.mrf.mxu0
  %v419 = vpop.f32.mrf.mxu0
  %v420 = vadd.f32 %v227, %v419
  %v421 = vpop.f32.mrf.mxu0
  %422 = vmatprep.mubr.bf16.mxu0 0
  %423 = vmatmul.mubr.bf16.gmra.mxu0 %v312
  %v424 = vpop.f32.mrf.mxu0
  %v425 = vadd.f32 %v232, %v424
  %v426 = vpop.f32.mrf.mxu0
  %v427 = vpop.f32.mrf.mxu0
  %v428 = vadd.f32 %v235, %v427
  %v429 = vpop.f32.mrf.mxu0
  %430 = vmatprep.mubr.bf16.mxu0 0
  %431 = vmatmul.mubr.bf16.gmra.mxu0 %v313
  %v432 = vpop.f32.mrf.mxu0
  %v433 = vadd.f32 %v240, %v432
  %v434 = vpop.f32.mrf.mxu0
  %v435 = vpop.f32.mrf.mxu0
  %v436 = vadd.f32 %v243, %v435
  %v437 = vpop.f32.mrf.mxu0
  %438 = vmatprep.mubr.bf16.mxu0 0
  %439 = vmatmul.mubr.bf16.gmra.mxu0 %v314
  %v440 = vpop.f32.mrf.mxu0
  %v441 = vadd.f32 %v248, %v440
  %v442 = vpop.f32.mrf.mxu0
  %v443 = vpop.f32.mrf.mxu0
  %v444 = vadd.f32 %v251, %v443
  %v445 = vpop.f32.mrf.mxu0
  %446 = vmatprep.mubr.bf16.mxu0 0
  %447 = vmatmul.mubr.bf16.gmra.mxu0 %v315
  %v448 = vpop.f32.mrf.mxu0
  %v449 = vadd.f32 %v256, %v448
  %v450 = vpop.f32.mrf.mxu0
  %v451 = vpop.f32.mrf.mxu0
  %v452 = vadd.f32 %v259, %v451
  %v453 = vpop.f32.mrf.mxu0
  %454 = vmatprep.mubr.bf16.mxu0 0
  %455 = vmatmul.mubr.bf16.gmra.mxu0 %v316
  %v456 = vpop.f32.mrf.mxu0
  %v457 = vadd.f32 %v264, %v456
  %v458 = vpop.f32.mrf.mxu0
  %v459 = vpop.f32.mrf.mxu0
  %v460 = vadd.f32 %v267, %v459
  %v461 = vpop.f32.mrf.mxu0
  %462 = vmatprep.mubr.bf16.mxu0 0
  %463 = vmatmul.mubr.bf16.gmra.mxu0 %v317
  %v464 = vpop.f32.mrf.mxu0
  %v465 = vadd.f32 %v272, %v464
  %v466 = vpop.f32.mrf.mxu0
  %v467 = vpop.f32.mrf.mxu0
  %v468 = vadd.f32 %v275, %v467
  %v469 = vpop.f32.mrf.mxu0
  %470 = vdwg.mxu0
  %v471 = vld [vmem:[%s4] sm:$0x1]
  %v473 = vlaneseq
  %v474 = vshrl.u32 %v473, 7
  %v475 = vsub.s32 0, %v474
  %v476 = vrot.slane %v471, %v475
  %v478 = vadd.f32 %v409, %v476
  %v479 = vadd.f32 %v412, %v476
  %v480 = vadd.f32 %v417, %v476
  %v481 = vadd.f32 %v420, %v476
  %v482 = vadd.f32 %v425, %v476
  %v483 = vadd.f32 %v428, %v476
  %v484 = vadd.f32 %v433, %v476
  %v485 = vadd.f32 %v436, %v476
  %v486 = vadd.f32 %v441, %v476
  %v487 = vadd.f32 %v444, %v476
  %v488 = vadd.f32 %v449, %v476
  %v489 = vadd.f32 %v452, %v476
  %v490 = vadd.f32 %v457, %v476
  %v491 = vadd.f32 %v460, %v476
  %v492 = vadd.f32 %v465, %v476
  %v493 = vadd.f32 %v468, %v476
  %v494 = vmax.f32 %v478, 0.0
  %v495 = vmax.f32 %v479, 0.0
  %v496 = vmax.f32 %v480, 0.0
  %v497 = vmax.f32 %v481, 0.0
  %v498 = vmax.f32 %v482, 0.0
  %v499 = vmax.f32 %v483, 0.0
  %v500 = vmax.f32 %v484, 0.0
  %v501 = vmax.f32 %v485, 0.0
  %v502 = vmax.f32 %v486, 0.0
  %v503 = vmax.f32 %v487, 0.0
  %v504 = vmax.f32 %v488, 0.0
  %v505 = vmax.f32 %v489, 0.0
  %v506 = vmax.f32 %v490, 0.0
  %v507 = vmax.f32 %v491, 0.0
  %v508 = vmax.f32 %v492, 0.0
  %v509 = vmax.f32 %v493, 0.0
  %510 = vst [vmem:[%s5] sm:$0xff] %v494
  %511 = vst [vmem:[%s5 + $0x8] sm:$0xff] %v495
  %512 = vst [vmem:[%s5 + $0x10] sm:$0xff] %v496
  %513 = vst [vmem:[%s5 + $0x18] sm:$0xff] %v497
  %514 = vst [vmem:[%s5 + $0x20] sm:$0xff] %v498
  %515 = vst [vmem:[%s5 + $0x28] sm:$0xff] %v499
  %516 = vst [vmem:[%s5 + $0x30] sm:$0xff] %v500
  %517 = vst [vmem:[%s5 + $0x38] sm:$0xff] %v501
  %518 = vst [vmem:[%s5 + $0x40] sm:$0xff] %v502
  %519 = vst [vmem:[%s5 + $0x48] sm:$0xff] %v503
  %520 = vst [vmem:[%s5 + $0x50] sm:$0xff] %v504
  %521 = vst [vmem:[%s5 + $0x58] sm:$0xff] %v505
  %522 = vst [vmem:[%s5 + $0x60] sm:$0xff] %v506
  %523 = vst [vmem:[%s5 + $0x68] sm:$0xff] %v507
  %524 = vst [vmem:[%s5 + $0x70] sm:$0xff] %v508
  %525 = vst [vmem:[%s5 + $0x78] sm:$0xff] %v509
  // Predicated region
  $region22: #{bottleneck_forward.5} parent=0 // pred_check
    _
  $region23: #{bottleneck_forward.5} parent=0 // pred_check_branch
    %527 = sbr.rel (0) target = $region25
  $region24: #{bottleneck_forward.5} parent=0 // pred_region
    _
  $region25: #{bottleneck_forward.5} parent=0 // pred_fallthru
    _
  // Predicated region
  $region26: #{bottleneck_forward.5} parent=0 // pred_check
    _
  $region27: #{bottleneck_forward.5} parent=0 // pred_check_branch
    %529 = sbr.rel (0) target = $region29
  $region28: #{bottleneck_forward.5} parent=0 // pred_region
    _
  $region29: #{bottleneck_forward.5} parent=0 // pred_fallthru
    _

</llo_original>
